<compile_context>
chip_gen: v7x
topology: tpu7x:2x2x1
jax: 0.10.0
libtpu: 0.0.40
codegen_flags: <defaults>
</compile_context>

<pallas_src>
import math

import numpy as np
import jax
import jax.numpy as jnp
from jax.experimental import pallas as pl
from jax.experimental.pallas import tpu as pltpu

F32 = jnp.float32
LEAKY_SLOPE = 0.2          # nn.LeakyReLU(0.2) in the reference
BN_EPS = 1e-5


def _vmem():
    # whole-array block resident in VMEM (all shapes here are tiny)
    return pl.BlockSpec(memory_space=pltpu.MemorySpace.VMEM)


# ---------------------------------------------------------------------------
# Single fused kernel: encoders -> lockstep 3-stream GRU -> relu ->
#                      DistKernelRegressor -> MulticlassPrototypicalClassifier
# ---------------------------------------------------------------------------
def _fused_kernel(x1_ref, x2_ref, x3_ref,
                  ew1_ref, ew2_ref, eb_ref,
                  gw_ref, gb_ref,
                  sw1_ref, saux_ref,
                  soh_ref, qsel_ref,
                  logit_ref, hid_ref, kern_ref):
    B, T, _ = x1_ref.shape
    TB = B * T
    H = ew2_ref.shape[2]          # RNN hidden size
    Hm = ew1_ref.shape[2]         # max encoder-MLP hidden size (zero padded)
    H3 = 3 * H                    # concatenated hidden size

    # ---------------- per-stream encoder (BN folded into fc1) ----------------
    # Rows are batch-major (row index = b*T + t) — pointwise, so order is free.
    enc_streams = []
    for s, x_ref in enumerate((x1_ref, x2_ref, x3_ref)):
        x = x_ref[...]
        Fs = x.shape[2]
        x = x.reshape(TB, Fs)                                   # (T*B rows, Fs)
        w1 = ew1_ref[s]                                         # (Fmax, Hm) zero-padded
        w2 = ew2_ref[s]                                         # (Hm, H)   zero-padded rows
        eb = eb_ref[s]                                          # (2, W): [b1_pad ; b2]
        h = jnp.dot(x, w1[:Fs, :], preferred_element_type=F32) + eb[0:1, :Hm]
        h = jnp.where(h >= 0, h, LEAKY_SLOPE * h)               # LeakyReLU(0.2)
        enc_streams.append(jnp.dot(h, w2, preferred_element_type=F32) + eb[1:2, :H])
    enc_cat = jnp.concatenate(enc_streams, axis=1)              # (TB, 3H), stream-major cols

    # -------- GRU: three streams in lockstep, block-diagonal gate weights ----
    # gi_all columns are gate-major / stream-major: [r0 r1 r2 | z0 z1 z2 | n0 n1 n2]
    gi_all = jnp.dot(enc_cat, gw_ref[0], preferred_element_type=F32) + gb_ref[0]  # (TB, 9H)
    gi_all = gi_all.reshape(B, T, 3 * H3)
    wh_bd = gw_ref[1]
    bh_bd = gb_ref[1]
    h_cat = jnp.zeros((B, H3), F32)                             # [h_flow | h_2nd | h_3rd]
    for t in range(T):                                          # static unroll (T small)
        gi = gi_all[:, t, :]                                    # (B, 9H)
        gh = jnp.dot(h_cat, wh_bd, preferred_element_type=F32) + bh_bd
        r = jax.nn.sigmoid(gi[:, :H3] + gh[:, :H3])
        z = jax.nn.sigmoid(gi[:, H3:2 * H3] + gh[:, H3:2 * H3])
        n = jnp.tanh(gi[:, 2 * H3:] + r * gh[:, 2 * H3:])       # torch: n = tanh(Wi x + r*(Wh h + bh))
        h_cat = (1.0 - z) * n + z * h_cat

    hiddens = jnp.maximum(h_cat, 0.0)                           # F.relu(out[:, -1, :]), cat order ok
    hid_ref[...] = hiddens

    # -------- DistKernelRegressor: sigmoid(fc2(leaky_relu(fc1(|hi - hj|)))) ---
    N = B
    Hs = sw1_ref.shape[1]
    saux = saux_ref[...]                                        # (3, Hs): [b1 ; w2 ; b2]
    diff = jnp.abs(hiddens[:, None, :] - hiddens[None, :, :]).reshape(N * N, H3)
    m = jnp.dot(diff, sw1_ref[...], preferred_element_type=F32) + saux[0:1, :]
    m = jnp.where(m >= 0, m, LEAKY_SLOPE * m)
    e = jnp.sum(m.reshape(N, N, Hs) * saux[1:2, :], axis=-1) + saux[2:3, 0:1]
    kern_ref[...] = jax.nn.sigmoid(e)                           # (N, N) lane-dense

    # -------- MulticlassPrototypicalClassifier --------------------------------
    soh_t = soh_ref[...]                                        # (K, N) support-only one-hot^T
    agg = jnp.dot(soh_t, hiddens, preferred_element_type=F32)   # (K, 3H)
    counts = jnp.sum(soh_t, axis=1, keepdims=True)              # (K, 1)
    centroids = jnp.where(counts > 0, agg / jnp.where(counts > 0, counts, 1.0), 0.0)
    q = jnp.dot(qsel_ref[...], hiddens, preferred_element_type=F32)   # (Q, 3H) query rows
    dq = q[:, None, :] - centroids[None, :, :]                  # (Q, K, 3H)
    dist = jnp.sqrt(jnp.sum(dq * dq, axis=-1))                  # (Q, K) == torch.cdist
    logit_ref[...] = 1.0 / (dist + 1e-10)


# ---------------------------------------------------------------------------
# pallas_call wrapper (single invocation, no grid, everything in VMEM)
# ---------------------------------------------------------------------------
def _run_fused(params, flows, second, third, sup_oh_t, qsel):
    B, T, _ = flows.shape
    H = params["enc_w2"].shape[2]
    H3 = 3 * H
    Hs = params["sim_w1"].shape[1]
    Fm = params["enc_w1"].shape[1]
    Hm = params["enc_w1"].shape[2]
    K = sup_oh_t.shape[0]
    Q = qsel.shape[0]
    TB = B * T

    flops = int(
        3 * 2 * TB * (Fm * Hm + Hm * H)           # encoders
        + 2 * TB * H3 * 3 * H3                    # hoisted GRU input projection
        + T * 2 * B * H3 * 3 * H3                 # GRU recurrence
        + 2 * B * B * H3 * Hs + 3 * B * B * Hs    # pairwise similarity net
        + 2 * K * B * H3 + 2 * Q * B * H3 + 3 * Q * K * H3)   # prototypical head
    trans = int(T * B * 3 * H3 + B * B + Q * K)
    nbytes = 4 * int(
        sum(int(np.prod(a.shape)) for a in (flows, second, third, sup_oh_t, qsel))
        + sum(int(np.prod(v.shape)) for v in params.values())
        + Q * K + B * H3 + B * B)

    return pl.pallas_call(
        _fused_kernel,
        out_shape=(jax.ShapeDtypeStruct((Q, K), F32),     # logits
                   jax.ShapeDtypeStruct((B, H3), F32),    # hiddens
                   jax.ShapeDtypeStruct((B, B), F32)),    # predicted kernel
        in_specs=[_vmem() for _ in range(12)],
        out_specs=(_vmem(), _vmem(), _vmem()),
        cost_estimate=pl.CostEstimate(flops=flops, transcendentals=trans,
                                      bytes_accessed=nbytes),
    )(flows, second, third,
      params["enc_w1"], params["enc_w2"], params["enc_b"],
      params["gru_w"], params["gru_b"],
      params["sim_w1"], params["sim_aux"],
      sup_oh_t, qsel)


# ---------------------------------------------------------------------------
# Parameter construction (torch-style uniform init, BN folded, packed)
# ---------------------------------------------------------------------------
def _uniform(key, shape, bound):
    return np.asarray(jax.random.uniform(key, shape, F32, -bound, bound))


def init_params(key, in_sizes, hidden):
    H = hidden
    H3 = 3 * H
    f_max = max(in_sizes)
    h_mlps = [H - (H - f) // 2 for f in in_sizes]     # MLP hidden size rule
    hm_max = max(h_mlps)
    bw = max(hm_max, H)

    keys = jax.random.split(key, 28)
    idx = [0]

    def nxt():
        k = keys[idx[0]]
        idx[0] += 1
        return k

    ew1 = np.zeros((3, f_max, hm_max), np.float32)
    ew2 = np.zeros((3, hm_max, H), np.float32)
    eb = np.zeros((3, 2, bw), np.float32)
    gw = np.zeros((2, H3, 3 * H3), np.float32)        # [Wi_blockdiag ; Wh_blockdiag]
    gb = np.zeros((2, 1, 3 * H3), np.float32)         # [bi ; bh], gate-major/stream-major cols

    for s, (f_in, h_mlp) in enumerate(zip(in_sizes, h_mlps)):
        # BatchNorm1d eval-mode running stats (freshly initialized) folded into fc1
        gamma = np.ones(f_in, np.float32)
        beta = np.zeros(f_in, np.float32)
        mean = np.zeros(f_in, np.float32)
        var = np.ones(f_in, np.float32)
        scale = gamma / np.sqrt(var + BN_EPS)
        shift = beta - mean * scale

        b_fc1 = 1.0 / math.sqrt(f_in)
        w1 = _uniform(nxt(), (h_mlp, f_in), b_fc1)     # torch (out, in) layout
        b1 = _uniform(nxt(), (h_mlp,), b_fc1)
        ew1[s, :f_in, :h_mlp] = w1.T * scale[:, None]
        eb[s, 0, :h_mlp] = b1 + shift @ w1.T

        b_fc2 = 1.0 / math.sqrt(h_mlp)
        w2 = _uniform(nxt(), (H, h_mlp), b_fc2)
        b2 = _uniform(nxt(), (H,), b_fc2)
        ew2[s, :h_mlp, :] = w2.T
        eb[s, 1, :H] = b2

        # torch nn.GRU (1 layer), input_size == hidden_size (use_encoder=True)
        b_gru = 1.0 / math.sqrt(H)
        wi = _uniform(nxt(), (3 * H, H), b_gru)        # rows gate-major (r, z, n)
        wh = _uniform(nxt(), (3 * H, H), b_gru)
        bi = _uniform(nxt(), (3 * H,), b_gru)
        bh = _uniform(nxt(), (3 * H,), b_gru)
        for g in range(3):                             # gate g output cols, block-diag on stream s
            c0 = g * H3 + s * H
            gw[0, s * H:(s + 1) * H, c0:c0 + H] = wi[g * H:(g + 1) * H, :].T
            gw[1, s * H:(s + 1) * H, c0:c0 + H] = wh[g * H:(g + 1) * H, :].T
            gb[0, 0, c0:c0 + H] = bi[g * H:(g + 1) * H]
            gb[1, 0, c0:c0 + H] = bh[g * H:(g + 1) * H]

    # DistKernelRegressor similarity net: fc1(3H -> 3H//2), fc2(3H//2 -> 1)
    hs = H3 // 2
    b_s1 = 1.0 / math.sqrt(H3)
    sw1 = _uniform(nxt(), (hs, H3), b_s1)
    sb1 = _uniform(nxt(), (hs,), b_s1)
    b_s2 = 1.0 / math.sqrt(hs)
    sw2 = _uniform(nxt(), (1, hs), b_s2)
    sb2 = _uniform(nxt(), (1,), b_s2)
    saux = np.zeros((3, hs), np.float32)
    saux[0] = sb1
    saux[1] = sw2[0]
    saux[2, 0] = sb2[0]

    return dict(
        enc_w1=jnp.asarray(ew1), enc_w2=jnp.asarray(ew2), enc_b=jnp.asarray(eb),
        gru_w=jnp.asarray(gw), gru_b=jnp.asarray(gb),
        sim_w1=jnp.asarray(np.ascontiguousarray(sw1.T)), sim_aux=jnp.asarray(saux),
    )


# ---------------------------------------------------------------------------
# Full forward pass of ThreeStreamMulticlassFlowClassifier (eval mode)
# ---------------------------------------------------------------------------
def three_stream_forward(params, flows, second_feats, third_feats, labels,
                         known_attack_count, support_mask, qsel):
    # support-only one-hot (transposed) for centroid aggregation
    oh = jax.nn.one_hot(labels[:, 0], known_attack_count, dtype=F32)    # (N, K)
    sup_oh_t = (oh * support_mask[:, None]).T                           # (K, N)
    logits, hiddens, pred_kernel = _run_fused(params, flows, second_feats,
                                              third_feats, sup_oh_t, qsel)
    return logits, hiddens, pred_kernel


if __name__ == "__main__":
    B, T = 8, 8                         # nodes x timesteps
    FLOW_IN, SECOND_IN, THIRD_IN = 6, 5, 7
    HIDDEN = 16
    K_ATTACKS = 3

    key = jax.random.PRNGKey(0)
    k_params, k1, k2, k3 = jax.random.split(key, 4)

    params = init_params(k_params, (FLOW_IN, SECOND_IN, THIRD_IN), HIDDEN)

    flows = jax.random.normal(k1, (B, T, FLOW_IN), F32)
    second_feats = jax.random.normal(k2, (B, T, SECOND_IN), F32)
    third_feats = jax.random.normal(k3, (B, T, THIRD_IN), F32)
    labels = jnp.array([[0], [1], [2], [0], [1], [2], [0], [1]], dtype=jnp.int32)
    query_mask = np.array([False, False, False, False, False, True, True, True])

    support_mask = jnp.asarray((~query_mask).astype(np.float32))                # (N,)
    qsel = jnp.asarray(np.eye(B, dtype=np.float32)[np.nonzero(query_mask)[0]])  # (Q, N)

    fwd = jax.jit(three_stream_forward, static_argnames=("known_attack_count",))
    logits, hiddens, pred_kernel = fwd(params, flows, second_feats, third_feats, labels,
                                       known_attack_count=K_ATTACKS,
                                       support_mask=support_mask, qsel=qsel)

    jax.block_until_ready((logits, hiddens, pred_kernel))
    assert logits.shape == (int(query_mask.sum()), K_ATTACKS)
    assert hiddens.shape == (B, 3 * HIDDEN)
    assert pred_kernel.shape == (B, B)
    print("KERNEL_OK")
</pallas_src>

<mosaic_0001>
module attributes {stable_mosaic.version = 11 : i64} {
  func.func @_fused_kernel(%arg0: memref<8x8x6xf32, #tpu.memory_space<vmem>>, %arg1: memref<8x8x5xf32, #tpu.memory_space<vmem>>, %arg2: memref<8x8x7xf32, #tpu.memory_space<vmem>>, %arg3: memref<3x7x12xf32, #tpu.memory_space<vmem>>, %arg4: memref<3x12x16xf32, #tpu.memory_space<vmem>>, %arg5: memref<3x2x16xf32, #tpu.memory_space<vmem>>, %arg6: memref<2x48x144xf32, #tpu.memory_space<vmem>>, %arg7: memref<2x1x144xf32, #tpu.memory_space<vmem>>, %arg8: memref<48x24xf32, #tpu.memory_space<vmem>>, %arg9: memref<3x24xf32, #tpu.memory_space<vmem>>, %arg10: memref<3x8xf32, #tpu.memory_space<vmem>>, %arg11: memref<3x8xf32, #tpu.memory_space<vmem>>, %arg12: memref<3x3xf32, #tpu.memory_space<vmem>>, %arg13: memref<8x48xf32, #tpu.memory_space<vmem>>, %arg14: memref<8x8xf32, #tpu.memory_space<vmem>>) attributes {dimension_semantics = [], scalar_prefetch = 0 : i64, scratch_operands = 0 : i64, tpu.core_type = #tpu.core_type<tc>} {
    %c0 = arith.constant 0 : index
    %c0_0 = arith.constant 0 : index
    %c0_1 = arith.constant 0 : index
    %0 = vector.load %arg0[%c0, %c0_0, %c0_1] : memref<8x8x6xf32, #tpu.memory_space<vmem>>, vector<8x8x6xf32>
    %1 = vector.shape_cast %0 : vector<8x8x6xf32> to vector<64x6xf32>
    %c0_2 = arith.constant 0 : index
    %c0_3 = arith.constant 0 : index
    %c0_4 = arith.constant 0 : index
    %2 = vector.load %arg3[%c0_2, %c0_3, %c0_4] : memref<3x7x12xf32, #tpu.memory_space<vmem>>, vector<1x7x12xf32>
    %3 = vector.shape_cast %2 : vector<1x7x12xf32> to vector<7x12xf32>
    %c0_5 = arith.constant 0 : index
    %c0_6 = arith.constant 0 : index
    %c0_7 = arith.constant 0 : index
    %4 = vector.load %arg4[%c0_5, %c0_6, %c0_7] : memref<3x12x16xf32, #tpu.memory_space<vmem>>, vector<1x12x16xf32>
    %5 = vector.shape_cast %4 : vector<1x12x16xf32> to vector<12x16xf32>
    %c0_8 = arith.constant 0 : index
    %c0_9 = arith.constant 0 : index
    %c0_10 = arith.constant 0 : index
    %6 = vector.load %arg5[%c0_8, %c0_9, %c0_10] : memref<3x2x16xf32, #tpu.memory_space<vmem>>, vector<1x2x16xf32>
    %7 = vector.shape_cast %6 : vector<1x2x16xf32> to vector<2x16xf32>
    %8 = vector.extract_strided_slice %3 {offsets = [0, 0], sizes = [6, 12], strides = [1, 1]} : vector<7x12xf32> to vector<6x12xf32>
    %cst = arith.constant dense<0.000000e+00> : vector<64x12xf32>
    %9 = tpu.matmul %1, %8, %cst {dimension_numbers = #tpu.dot_dimension_numbers<[1], [0], [0], [1], [0, 0, 1, 1], [], []>} : vector<64x6xf32>, vector<6x12xf32>, vector<64x12xf32> -> vector<64x12xf32>
    %10 = vector.extract_strided_slice %7 {offsets = [0, 0], sizes = [1, 12], strides = [1, 1]} : vector<2x16xf32> to vector<1x12xf32>
    %11 = vector.broadcast %10 : vector<1x12xf32> to vector<64x12xf32>
    %12 = arith.addf %9, %11 : vector<64x12xf32>
    %cst_11 = arith.constant 0.000000e+00 : f32
    %13 = vector.broadcast %cst_11 : f32 to vector<64x12xf32>
    %14 = arith.cmpf oge, %12, %13 : vector<64x12xf32>
    %cst_12 = arith.constant 2.000000e-01 : f32
    %15 = vector.broadcast %cst_12 : f32 to vector<64x12xf32>
    %16 = arith.mulf %15, %12 : vector<64x12xf32>
    %17 = arith.select %14, %12, %16 : vector<64x12xi1>, vector<64x12xf32>
    %cst_13 = arith.constant dense<0.000000e+00> : vector<64x16xf32>
    %18 = tpu.matmul %17, %5, %cst_13 {dimension_numbers = #tpu.dot_dimension_numbers<[1], [0], [0], [1], [0, 0, 1, 1], [], []>} : vector<64x12xf32>, vector<12x16xf32>, vector<64x16xf32> -> vector<64x16xf32>
    %19 = vector.extract_strided_slice %7 {offsets = [1, 0], sizes = [1, 16], strides = [1, 1]} : vector<2x16xf32> to vector<1x16xf32>
    %20 = vector.broadcast %19 : vector<1x16xf32> to vector<64x16xf32>
    %21 = arith.addf %18, %20 : vector<64x16xf32>
    %c0_14 = arith.constant 0 : index
    %c0_15 = arith.constant 0 : index
    %c0_16 = arith.constant 0 : index
    %22 = vector.load %arg1[%c0_14, %c0_15, %c0_16] : memref<8x8x5xf32, #tpu.memory_space<vmem>>, vector<8x8x5xf32>
    %23 = vector.shape_cast %22 : vector<8x8x5xf32> to vector<64x5xf32>
    %c1 = arith.constant 1 : index
    %c0_17 = arith.constant 0 : index
    %c0_18 = arith.constant 0 : index
    %24 = vector.load %arg3[%c1, %c0_17, %c0_18] : memref<3x7x12xf32, #tpu.memory_space<vmem>>, vector<1x7x12xf32>
    %25 = vector.shape_cast %24 : vector<1x7x12xf32> to vector<7x12xf32>
    %c1_19 = arith.constant 1 : index
    %c0_20 = arith.constant 0 : index
    %c0_21 = arith.constant 0 : index
    %26 = vector.load %arg4[%c1_19, %c0_20, %c0_21] : memref<3x12x16xf32, #tpu.memory_space<vmem>>, vector<1x12x16xf32>
    %27 = vector.shape_cast %26 : vector<1x12x16xf32> to vector<12x16xf32>
    %c1_22 = arith.constant 1 : index
    %c0_23 = arith.constant 0 : index
    %c0_24 = arith.constant 0 : index
    %28 = vector.load %arg5[%c1_22, %c0_23, %c0_24] : memref<3x2x16xf32, #tpu.memory_space<vmem>>, vector<1x2x16xf32>
    %29 = vector.shape_cast %28 : vector<1x2x16xf32> to vector<2x16xf32>
    %30 = vector.extract_strided_slice %25 {offsets = [0, 0], sizes = [5, 12], strides = [1, 1]} : vector<7x12xf32> to vector<5x12xf32>
    %cst_25 = arith.constant dense<0.000000e+00> : vector<64x12xf32>
    %31 = tpu.matmul %23, %30, %cst_25 {dimension_numbers = #tpu.dot_dimension_numbers<[1], [0], [0], [1], [0, 0, 1, 1], [], []>} : vector<64x5xf32>, vector<5x12xf32>, vector<64x12xf32> -> vector<64x12xf32>
    %32 = vector.extract_strided_slice %29 {offsets = [0, 0], sizes = [1, 12], strides = [1, 1]} : vector<2x16xf32> to vector<1x12xf32>
    %33 = vector.broadcast %32 : vector<1x12xf32> to vector<64x12xf32>
    %34 = arith.addf %31, %33 : vector<64x12xf32>
    %cst_26 = arith.constant 0.000000e+00 : f32
    %35 = vector.broadcast %cst_26 : f32 to vector<64x12xf32>
    %36 = arith.cmpf oge, %34, %35 : vector<64x12xf32>
    %cst_27 = arith.constant 2.000000e-01 : f32
    %37 = vector.broadcast %cst_27 : f32 to vector<64x12xf32>
    %38 = arith.mulf %37, %34 : vector<64x12xf32>
    %39 = arith.select %36, %34, %38 : vector<64x12xi1>, vector<64x12xf32>
    %cst_28 = arith.constant dense<0.000000e+00> : vector<64x16xf32>
    %40 = tpu.matmul %39, %27, %cst_28 {dimension_numbers = #tpu.dot_dimension_numbers<[1], [0], [0], [1], [0, 0, 1, 1], [], []>} : vector<64x12xf32>, vector<12x16xf32>, vector<64x16xf32> -> vector<64x16xf32>
    %41 = vector.extract_strided_slice %29 {offsets = [1, 0], sizes = [1, 16], strides = [1, 1]} : vector<2x16xf32> to vector<1x16xf32>
    %42 = vector.broadcast %41 : vector<1x16xf32> to vector<64x16xf32>
    %43 = arith.addf %40, %42 : vector<64x16xf32>
    %c0_29 = arith.constant 0 : index
    %c0_30 = arith.constant 0 : index
    %c0_31 = arith.constant 0 : index
    %44 = vector.load %arg2[%c0_29, %c0_30, %c0_31] : memref<8x8x7xf32, #tpu.memory_space<vmem>>, vector<8x8x7xf32>
    %45 = vector.shape_cast %44 : vector<8x8x7xf32> to vector<64x7xf32>
    %c2 = arith.constant 2 : index
    %c0_32 = arith.constant 0 : index
    %c0_33 = arith.constant 0 : index
    %46 = vector.load %arg3[%c2, %c0_32, %c0_33] : memref<3x7x12xf32, #tpu.memory_space<vmem>>, vector<1x7x12xf32>
    %47 = vector.shape_cast %46 : vector<1x7x12xf32> to vector<7x12xf32>
    %c2_34 = arith.constant 2 : index
    %c0_35 = arith.constant 0 : index
    %c0_36 = arith.constant 0 : index
    %48 = vector.load %arg4[%c2_34, %c0_35, %c0_36] : memref<3x12x16xf32, #tpu.memory_space<vmem>>, vector<1x12x16xf32>
    %49 = vector.shape_cast %48 : vector<1x12x16xf32> to vector<12x16xf32>
    %c2_37 = arith.constant 2 : index
    %c0_38 = arith.constant 0 : index
    %c0_39 = arith.constant 0 : index
    %50 = vector.load %arg5[%c2_37, %c0_38, %c0_39] : memref<3x2x16xf32, #tpu.memory_space<vmem>>, vector<1x2x16xf32>
    %51 = vector.shape_cast %50 : vector<1x2x16xf32> to vector<2x16xf32>
    %cst_40 = arith.constant dense<0.000000e+00> : vector<64x12xf32>
    %52 = tpu.matmul %45, %47, %cst_40 {dimension_numbers = #tpu.dot_dimension_numbers<[1], [0], [0], [1], [0, 0, 1, 1], [], []>} : vector<64x7xf32>, vector<7x12xf32>, vector<64x12xf32> -> vector<64x12xf32>
    %53 = vector.extract_strided_slice %51 {offsets = [0, 0], sizes = [1, 12], strides = [1, 1]} : vector<2x16xf32> to vector<1x12xf32>
    %54 = vector.broadcast %53 : vector<1x12xf32> to vector<64x12xf32>
    %55 = arith.addf %52, %54 : vector<64x12xf32>
    %cst_41 = arith.constant 0.000000e+00 : f32
    %56 = vector.broadcast %cst_41 : f32 to vector<64x12xf32>
    %57 = arith.cmpf oge, %55, %56 : vector<64x12xf32>
    %cst_42 = arith.constant 2.000000e-01 : f32
    %58 = vector.broadcast %cst_42 : f32 to vector<64x12xf32>
    %59 = arith.mulf %58, %55 : vector<64x12xf32>
    %60 = arith.select %57, %55, %59 : vector<64x12xi1>, vector<64x12xf32>
    %cst_43 = arith.constant dense<0.000000e+00> : vector<64x16xf32>
    %61 = tpu.matmul %60, %49, %cst_43 {dimension_numbers = #tpu.dot_dimension_numbers<[1], [0], [0], [1], [0, 0, 1, 1], [], []>} : vector<64x12xf32>, vector<12x16xf32>, vector<64x16xf32> -> vector<64x16xf32>
    %62 = vector.extract_strided_slice %51 {offsets = [1, 0], sizes = [1, 16], strides = [1, 1]} : vector<2x16xf32> to vector<1x16xf32>
    %63 = vector.broadcast %62 : vector<1x16xf32> to vector<64x16xf32>
    %64 = arith.addf %61, %63 : vector<64x16xf32>
    %65 = tpu.concatenate %21, %43, %64 in 1 : vector<64x16xf32>, vector<64x16xf32>, vector<64x16xf32> -> vector<64x48xf32>
    %c0_44 = arith.constant 0 : index
    %c0_45 = arith.constant 0 : index
    %c0_46 = arith.constant 0 : index
    %66 = vector.load %arg6[%c0_44, %c0_45, %c0_46] : memref<2x48x144xf32, #tpu.memory_space<vmem>>, vector<1x48x144xf32>
    %67 = vector.shape_cast %66 : vector<1x48x144xf32> to vector<48x144xf32>
    %cst_47 = arith.constant dense<0.000000e+00> : vector<64x144xf32>
    %68 = tpu.matmul %65, %67, %cst_47 {dimension_numbers = #tpu.dot_dimension_numbers<[1], [0], [0], [1], [0, 0, 1, 1], [], []>} : vector<64x48xf32>, vector<48x144xf32>, vector<64x144xf32> -> vector<64x144xf32>
    %c0_48 = arith.constant 0 : index
    %c0_49 = arith.constant 0 : index
    %c0_50 = arith.constant 0 : index
    %69 = vector.load %arg7[%c0_48, %c0_49, %c0_50] : memref<2x1x144xf32, #tpu.memory_space<vmem>>, vector<1x1x144xf32>
    %70 = vector.shape_cast %69 : vector<1x1x144xf32> to vector<1x144xf32>
    %71 = vector.broadcast %70 : vector<1x144xf32> to vector<64x144xf32>
    %72 = arith.addf %68, %71 : vector<64x144xf32>
    %73 = vector.shape_cast %72 : vector<64x144xf32> to vector<8x8x144xf32>
    %c1_51 = arith.constant 1 : index
    %c0_52 = arith.constant 0 : index
    %c0_53 = arith.constant 0 : index
    %74 = vector.load %arg6[%c1_51, %c0_52, %c0_53] : memref<2x48x144xf32, #tpu.memory_space<vmem>>, vector<1x48x144xf32>
    %75 = vector.shape_cast %74 : vector<1x48x144xf32> to vector<48x144xf32>
    %c1_54 = arith.constant 1 : index
    %c0_55 = arith.constant 0 : index
    %c0_56 = arith.constant 0 : index
    %76 = vector.load %arg7[%c1_54, %c0_55, %c0_56] : memref<2x1x144xf32, #tpu.memory_space<vmem>>, vector<1x1x144xf32>
    %77 = vector.shape_cast %76 : vector<1x1x144xf32> to vector<1x144xf32>
    %cst_57 = arith.constant 0.000000e+00 : f32
    %78 = vector.broadcast %cst_57 : f32 to vector<8x48xf32>
    %79 = vector.extract_strided_slice %73 {offsets = [0, 0, 0], sizes = [8, 1, 144], strides = [1, 1, 1]} : vector<8x8x144xf32> to vector<8x1x144xf32>
    %80 = vector.shape_cast %79 : vector<8x1x144xf32> to vector<8x144xf32>
    %cst_58 = arith.constant dense<0.000000e+00> : vector<8x144xf32>
    %81 = tpu.matmul %78, %75, %cst_58 {dimension_numbers = #tpu.dot_dimension_numbers<[1], [0], [0], [1], [0, 0, 1, 1], [], []>} : vector<8x48xf32>, vector<48x144xf32>, vector<8x144xf32> -> vector<8x144xf32>
    %82 = vector.broadcast %77 : vector<1x144xf32> to vector<8x144xf32>
    %83 = arith.addf %81, %82 : vector<8x144xf32>
    %84 = vector.extract_strided_slice %80 {offsets = [0, 0], sizes = [8, 48], strides = [1, 1]} : vector<8x144xf32> to vector<8x48xf32>
    %85 = vector.extract_strided_slice %83 {offsets = [0, 0], sizes = [8, 48], strides = [1, 1]} : vector<8x144xf32> to vector<8x48xf32>
    %86 = arith.addf %84, %85 : vector<8x48xf32>
    %87 = arith.negf %86 : vector<8x48xf32>
    %88 = math.exp %87 : vector<8x48xf32>
    %cst_59 = arith.constant 1.000000e+00 : f32
    %89 = vector.broadcast %cst_59 : f32 to vector<8x48xf32>
    %90 = arith.addf %89, %88 : vector<8x48xf32>
    %91 = arith.divf %89, %90 : vector<8x48xf32>
    %92 = vector.extract_strided_slice %80 {offsets = [0, 48], sizes = [8, 48], strides = [1, 1]} : vector<8x144xf32> to vector<8x48xf32>
    %93 = vector.extract_strided_slice %83 {offsets = [0, 48], sizes = [8, 48], strides = [1, 1]} : vector<8x144xf32> to vector<8x48xf32>
    %94 = arith.addf %92, %93 : vector<8x48xf32>
    %95 = arith.negf %94 : vector<8x48xf32>
    %96 = math.exp %95 : vector<8x48xf32>
    %cst_60 = arith.constant 1.000000e+00 : f32
    %97 = vector.broadcast %cst_60 : f32 to vector<8x48xf32>
    %98 = arith.addf %97, %96 : vector<8x48xf32>
    %99 = arith.divf %97, %98 : vector<8x48xf32>
    %100 = vector.extract_strided_slice %80 {offsets = [0, 96], sizes = [8, 48], strides = [1, 1]} : vector<8x144xf32> to vector<8x48xf32>
    %101 = vector.extract_strided_slice %83 {offsets = [0, 96], sizes = [8, 48], strides = [1, 1]} : vector<8x144xf32> to vector<8x48xf32>
    %102 = arith.mulf %91, %101 : vector<8x48xf32>
    %103 = arith.addf %100, %102 : vector<8x48xf32>
    %104 = math.tanh %103 : vector<8x48xf32>
    %cst_61 = arith.constant 1.000000e+00 : f32
    %105 = vector.broadcast %cst_61 : f32 to vector<8x48xf32>
    %106 = arith.subf %105, %99 : vector<8x48xf32>
    %107 = arith.mulf %106, %104 : vector<8x48xf32>
    %108 = arith.mulf %99, %78 : vector<8x48xf32>
    %109 = arith.addf %107, %108 : vector<8x48xf32>
    %110 = vector.extract_strided_slice %73 {offsets = [0, 1, 0], sizes = [8, 1, 144], strides = [1, 1, 1]} : vector<8x8x144xf32> to vector<8x1x144xf32>
    %111 = vector.shape_cast %110 : vector<8x1x144xf32> to vector<8x144xf32>
    %cst_62 = arith.constant dense<0.000000e+00> : vector<8x144xf32>
    %112 = tpu.matmul %109, %75, %cst_62 {dimension_numbers = #tpu.dot_dimension_numbers<[1], [0], [0], [1], [0, 0, 1, 1], [], []>} : vector<8x48xf32>, vector<48x144xf32>, vector<8x144xf32> -> vector<8x144xf32>
    %113 = vector.broadcast %77 : vector<1x144xf32> to vector<8x144xf32>
    %114 = arith.addf %112, %113 : vector<8x144xf32>
    %115 = vector.extract_strided_slice %111 {offsets = [0, 0], sizes = [8, 48], strides = [1, 1]} : vector<8x144xf32> to vector<8x48xf32>
    %116 = vector.extract_strided_slice %114 {offsets = [0, 0], sizes = [8, 48], strides = [1, 1]} : vector<8x144xf32> to vector<8x48xf32>
    %117 = arith.addf %115, %116 : vector<8x48xf32>
    %118 = arith.negf %117 : vector<8x48xf32>
    %119 = math.exp %118 : vector<8x48xf32>
    %cst_63 = arith.constant 1.000000e+00 : f32
    %120 = vector.broadcast %cst_63 : f32 to vector<8x48xf32>
    %121 = arith.addf %120, %119 : vector<8x48xf32>
    %122 = arith.divf %120, %121 : vector<8x48xf32>
    %123 = vector.extract_strided_slice %111 {offsets = [0, 48], sizes = [8, 48], strides = [1, 1]} : vector<8x144xf32> to vector<8x48xf32>
    %124 = vector.extract_strided_slice %114 {offsets = [0, 48], sizes = [8, 48], strides = [1, 1]} : vector<8x144xf32> to vector<8x48xf32>
    %125 = arith.addf %123, %124 : vector<8x48xf32>
    %126 = arith.negf %125 : vector<8x48xf32>
    %127 = math.exp %126 : vector<8x48xf32>
    %cst_64 = arith.constant 1.000000e+00 : f32
    %128 = vector.broadcast %cst_64 : f32 to vector<8x48xf32>
    %129 = arith.addf %128, %127 : vector<8x48xf32>
    %130 = arith.divf %128, %129 : vector<8x48xf32>
    %131 = vector.extract_strided_slice %111 {offsets = [0, 96], sizes = [8, 48], strides = [1, 1]} : vector<8x144xf32> to vector<8x48xf32>
    %132 = vector.extract_strided_slice %114 {offsets = [0, 96], sizes = [8, 48], strides = [1, 1]} : vector<8x144xf32> to vector<8x48xf32>
    %133 = arith.mulf %122, %132 : vector<8x48xf32>
    %134 = arith.addf %131, %133 : vector<8x48xf32>
    %135 = math.tanh %134 : vector<8x48xf32>
    %cst_65 = arith.constant 1.000000e+00 : f32
    %136 = vector.broadcast %cst_65 : f32 to vector<8x48xf32>
    %137 = arith.subf %136, %130 : vector<8x48xf32>
    %138 = arith.mulf %137, %135 : vector<8x48xf32>
    %139 = arith.mulf %130, %109 : vector<8x48xf32>
    %140 = arith.addf %138, %139 : vector<8x48xf32>
    %141 = vector.extract_strided_slice %73 {offsets = [0, 2, 0], sizes = [8, 1, 144], strides = [1, 1, 1]} : vector<8x8x144xf32> to vector<8x1x144xf32>
    %142 = vector.shape_cast %141 : vector<8x1x144xf32> to vector<8x144xf32>
    %cst_66 = arith.constant dense<0.000000e+00> : vector<8x144xf32>
    %143 = tpu.matmul %140, %75, %cst_66 {dimension_numbers = #tpu.dot_dimension_numbers<[1], [0], [0], [1], [0, 0, 1, 1], [], []>} : vector<8x48xf32>, vector<48x144xf32>, vector<8x144xf32> -> vector<8x144xf32>
    %144 = vector.broadcast %77 : vector<1x144xf32> to vector<8x144xf32>
    %145 = arith.addf %143, %144 : vector<8x144xf32>
    %146 = vector.extract_strided_slice %142 {offsets = [0, 0], sizes = [8, 48], strides = [1, 1]} : vector<8x144xf32> to vector<8x48xf32>
    %147 = vector.extract_strided_slice %145 {offsets = [0, 0], sizes = [8, 48], strides = [1, 1]} : vector<8x144xf32> to vector<8x48xf32>
    %148 = arith.addf %146, %147 : vector<8x48xf32>
    %149 = arith.negf %148 : vector<8x48xf32>
    %150 = math.exp %149 : vector<8x48xf32>
    %cst_67 = arith.constant 1.000000e+00 : f32
    %151 = vector.broadcast %cst_67 : f32 to vector<8x48xf32>
    %152 = arith.addf %151, %150 : vector<8x48xf32>
    %153 = arith.divf %151, %152 : vector<8x48xf32>
    %154 = vector.extract_strided_slice %142 {offsets = [0, 48], sizes = [8, 48], strides = [1, 1]} : vector<8x144xf32> to vector<8x48xf32>
    %155 = vector.extract_strided_slice %145 {offsets = [0, 48], sizes = [8, 48], strides = [1, 1]} : vector<8x144xf32> to vector<8x48xf32>
    %156 = arith.addf %154, %155 : vector<8x48xf32>
    %157 = arith.negf %156 : vector<8x48xf32>
    %158 = math.exp %157 : vector<8x48xf32>
    %cst_68 = arith.constant 1.000000e+00 : f32
    %159 = vector.broadcast %cst_68 : f32 to vector<8x48xf32>
    %160 = arith.addf %159, %158 : vector<8x48xf32>
    %161 = arith.divf %159, %160 : vector<8x48xf32>
    %162 = vector.extract_strided_slice %142 {offsets = [0, 96], sizes = [8, 48], strides = [1, 1]} : vector<8x144xf32> to vector<8x48xf32>
    %163 = vector.extract_strided_slice %145 {offsets = [0, 96], sizes = [8, 48], strides = [1, 1]} : vector<8x144xf32> to vector<8x48xf32>
    %164 = arith.mulf %153, %163 : vector<8x48xf32>
    %165 = arith.addf %162, %164 : vector<8x48xf32>
    %166 = math.tanh %165 : vector<8x48xf32>
    %cst_69 = arith.constant 1.000000e+00 : f32
    %167 = vector.broadcast %cst_69 : f32 to vector<8x48xf32>
    %168 = arith.subf %167, %161 : vector<8x48xf32>
    %169 = arith.mulf %168, %166 : vector<8x48xf32>
    %170 = arith.mulf %161, %140 : vector<8x48xf32>
    %171 = arith.addf %169, %170 : vector<8x48xf32>
    %172 = vector.extract_strided_slice %73 {offsets = [0, 3, 0], sizes = [8, 1, 144], strides = [1, 1, 1]} : vector<8x8x144xf32> to vector<8x1x144xf32>
    %173 = vector.shape_cast %172 : vector<8x1x144xf32> to vector<8x144xf32>
    %cst_70 = arith.constant dense<0.000000e+00> : vector<8x144xf32>
    %174 = tpu.matmul %171, %75, %cst_70 {dimension_numbers = #tpu.dot_dimension_numbers<[1], [0], [0], [1], [0, 0, 1, 1], [], []>} : vector<8x48xf32>, vector<48x144xf32>, vector<8x144xf32> -> vector<8x144xf32>
    %175 = vector.broadcast %77 : vector<1x144xf32> to vector<8x144xf32>
    %176 = arith.addf %174, %175 : vector<8x144xf32>
    %177 = vector.extract_strided_slice %173 {offsets = [0, 0], sizes = [8, 48], strides = [1, 1]} : vector<8x144xf32> to vector<8x48xf32>
    %178 = vector.extract_strided_slice %176 {offsets = [0, 0], sizes = [8, 48], strides = [1, 1]} : vector<8x144xf32> to vector<8x48xf32>
    %179 = arith.addf %177, %178 : vector<8x48xf32>
    %180 = arith.negf %179 : vector<8x48xf32>
    %181 = math.exp %180 : vector<8x48xf32>
    %cst_71 = arith.constant 1.000000e+00 : f32
    %182 = vector.broadcast %cst_71 : f32 to vector<8x48xf32>
    %183 = arith.addf %182, %181 : vector<8x48xf32>
    %184 = arith.divf %182, %183 : vector<8x48xf32>
    %185 = vector.extract_strided_slice %173 {offsets = [0, 48], sizes = [8, 48], strides = [1, 1]} : vector<8x144xf32> to vector<8x48xf32>
    %186 = vector.extract_strided_slice %176 {offsets = [0, 48], sizes = [8, 48], strides = [1, 1]} : vector<8x144xf32> to vector<8x48xf32>
    %187 = arith.addf %185, %186 : vector<8x48xf32>
    %188 = arith.negf %187 : vector<8x48xf32>
    %189 = math.exp %188 : vector<8x48xf32>
    %cst_72 = arith.constant 1.000000e+00 : f32
    %190 = vector.broadcast %cst_72 : f32 to vector<8x48xf32>
    %191 = arith.addf %190, %189 : vector<8x48xf32>
    %192 = arith.divf %190, %191 : vector<8x48xf32>
    %193 = vector.extract_strided_slice %173 {offsets = [0, 96], sizes = [8, 48], strides = [1, 1]} : vector<8x144xf32> to vector<8x48xf32>
    %194 = vector.extract_strided_slice %176 {offsets = [0, 96], sizes = [8, 48], strides = [1, 1]} : vector<8x144xf32> to vector<8x48xf32>
    %195 = arith.mulf %184, %194 : vector<8x48xf32>
    %196 = arith.addf %193, %195 : vector<8x48xf32>
    %197 = math.tanh %196 : vector<8x48xf32>
    %cst_73 = arith.constant 1.000000e+00 : f32
    %198 = vector.broadcast %cst_73 : f32 to vector<8x48xf32>
    %199 = arith.subf %198, %192 : vector<8x48xf32>
    %200 = arith.mulf %199, %197 : vector<8x48xf32>
    %201 = arith.mulf %192, %171 : vector<8x48xf32>
    %202 = arith.addf %200, %201 : vector<8x48xf32>
    %203 = vector.extract_strided_slice %73 {offsets = [0, 4, 0], sizes = [8, 1, 144], strides = [1, 1, 1]} : vector<8x8x144xf32> to vector<8x1x144xf32>
    %204 = vector.shape_cast %203 : vector<8x1x144xf32> to vector<8x144xf32>
    %cst_74 = arith.constant dense<0.000000e+00> : vector<8x144xf32>
    %205 = tpu.matmul %202, %75, %cst_74 {dimension_numbers = #tpu.dot_dimension_numbers<[1], [0], [0], [1], [0, 0, 1, 1], [], []>} : vector<8x48xf32>, vector<48x144xf32>, vector<8x144xf32> -> vector<8x144xf32>
    %206 = vector.broadcast %77 : vector<1x144xf32> to vector<8x144xf32>
    %207 = arith.addf %205, %206 : vector<8x144xf32>
    %208 = vector.extract_strided_slice %204 {offsets = [0, 0], sizes = [8, 48], strides = [1, 1]} : vector<8x144xf32> to vector<8x48xf32>
    %209 = vector.extract_strided_slice %207 {offsets = [0, 0], sizes = [8, 48], strides = [1, 1]} : vector<8x144xf32> to vector<8x48xf32>
    %210 = arith.addf %208, %209 : vector<8x48xf32>
    %211 = arith.negf %210 : vector<8x48xf32>
    %212 = math.exp %211 : vector<8x48xf32>
    %cst_75 = arith.constant 1.000000e+00 : f32
    %213 = vector.broadcast %cst_75 : f32 to vector<8x48xf32>
    %214 = arith.addf %213, %212 : vector<8x48xf32>
    %215 = arith.divf %213, %214 : vector<8x48xf32>
    %216 = vector.extract_strided_slice %204 {offsets = [0, 48], sizes = [8, 48], strides = [1, 1]} : vector<8x144xf32> to vector<8x48xf32>
    %217 = vector.extract_strided_slice %207 {offsets = [0, 48], sizes = [8, 48], strides = [1, 1]} : vector<8x144xf32> to vector<8x48xf32>
    %218 = arith.addf %216, %217 : vector<8x48xf32>
    %219 = arith.negf %218 : vector<8x48xf32>
    %220 = math.exp %219 : vector<8x48xf32>
    %cst_76 = arith.constant 1.000000e+00 : f32
    %221 = vector.broadcast %cst_76 : f32 to vector<8x48xf32>
    %222 = arith.addf %221, %220 : vector<8x48xf32>
    %223 = arith.divf %221, %222 : vector<8x48xf32>
    %224 = vector.extract_strided_slice %204 {offsets = [0, 96], sizes = [8, 48], strides = [1, 1]} : vector<8x144xf32> to vector<8x48xf32>
    %225 = vector.extract_strided_slice %207 {offsets = [0, 96], sizes = [8, 48], strides = [1, 1]} : vector<8x144xf32> to vector<8x48xf32>
    %226 = arith.mulf %215, %225 : vector<8x48xf32>
    %227 = arith.addf %224, %226 : vector<8x48xf32>
    %228 = math.tanh %227 : vector<8x48xf32>
    %cst_77 = arith.constant 1.000000e+00 : f32
    %229 = vector.broadcast %cst_77 : f32 to vector<8x48xf32>
    %230 = arith.subf %229, %223 : vector<8x48xf32>
    %231 = arith.mulf %230, %228 : vector<8x48xf32>
    %232 = arith.mulf %223, %202 : vector<8x48xf32>
    %233 = arith.addf %231, %232 : vector<8x48xf32>
    %234 = vector.extract_strided_slice %73 {offsets = [0, 5, 0], sizes = [8, 1, 144], strides = [1, 1, 1]} : vector<8x8x144xf32> to vector<8x1x144xf32>
    %235 = vector.shape_cast %234 : vector<8x1x144xf32> to vector<8x144xf32>
    %cst_78 = arith.constant dense<0.000000e+00> : vector<8x144xf32>
    %236 = tpu.matmul %233, %75, %cst_78 {dimension_numbers = #tpu.dot_dimension_numbers<[1], [0], [0], [1], [0, 0, 1, 1], [], []>} : vector<8x48xf32>, vector<48x144xf32>, vector<8x144xf32> -> vector<8x144xf32>
    %237 = vector.broadcast %77 : vector<1x144xf32> to vector<8x144xf32>
    %238 = arith.addf %236, %237 : vector<8x144xf32>
    %239 = vector.extract_strided_slice %235 {offsets = [0, 0], sizes = [8, 48], strides = [1, 1]} : vector<8x144xf32> to vector<8x48xf32>
    %240 = vector.extract_strided_slice %238 {offsets = [0, 0], sizes = [8, 48], strides = [1, 1]} : vector<8x144xf32> to vector<8x48xf32>
    %241 = arith.addf %239, %240 : vector<8x48xf32>
    %242 = arith.negf %241 : vector<8x48xf32>
    %243 = math.exp %242 : vector<8x48xf32>
    %cst_79 = arith.constant 1.000000e+00 : f32
    %244 = vector.broadcast %cst_79 : f32 to vector<8x48xf32>
    %245 = arith.addf %244, %243 : vector<8x48xf32>
    %246 = arith.divf %244, %245 : vector<8x48xf32>
    %247 = vector.extract_strided_slice %235 {offsets = [0, 48], sizes = [8, 48], strides = [1, 1]} : vector<8x144xf32> to vector<8x48xf32>
    %248 = vector.extract_strided_slice %238 {offsets = [0, 48], sizes = [8, 48], strides = [1, 1]} : vector<8x144xf32> to vector<8x48xf32>
    %249 = arith.addf %247, %248 : vector<8x48xf32>
    %250 = arith.negf %249 : vector<8x48xf32>
    %251 = math.exp %250 : vector<8x48xf32>
    %cst_80 = arith.constant 1.000000e+00 : f32
    %252 = vector.broadcast %cst_80 : f32 to vector<8x48xf32>
    %253 = arith.addf %252, %251 : vector<8x48xf32>
    %254 = arith.divf %252, %253 : vector<8x48xf32>
    %255 = vector.extract_strided_slice %235 {offsets = [0, 96], sizes = [8, 48], strides = [1, 1]} : vector<8x144xf32> to vector<8x48xf32>
    %256 = vector.extract_strided_slice %238 {offsets = [0, 96], sizes = [8, 48], strides = [1, 1]} : vector<8x144xf32> to vector<8x48xf32>
    %257 = arith.mulf %246, %256 : vector<8x48xf32>
    %258 = arith.addf %255, %257 : vector<8x48xf32>
    %259 = math.tanh %258 : vector<8x48xf32>
    %cst_81 = arith.constant 1.000000e+00 : f32
    %260 = vector.broadcast %cst_81 : f32 to vector<8x48xf32>
    %261 = arith.subf %260, %254 : vector<8x48xf32>
    %262 = arith.mulf %261, %259 : vector<8x48xf32>
    %263 = arith.mulf %254, %233 : vector<8x48xf32>
    %264 = arith.addf %262, %263 : vector<8x48xf32>
    %265 = vector.extract_strided_slice %73 {offsets = [0, 6, 0], sizes = [8, 1, 144], strides = [1, 1, 1]} : vector<8x8x144xf32> to vector<8x1x144xf32>
    %266 = vector.shape_cast %265 : vector<8x1x144xf32> to vector<8x144xf32>
    %cst_82 = arith.constant dense<0.000000e+00> : vector<8x144xf32>
    %267 = tpu.matmul %264, %75, %cst_82 {dimension_numbers = #tpu.dot_dimension_numbers<[1], [0], [0], [1], [0, 0, 1, 1], [], []>} : vector<8x48xf32>, vector<48x144xf32>, vector<8x144xf32> -> vector<8x144xf32>
    %268 = vector.broadcast %77 : vector<1x144xf32> to vector<8x144xf32>
    %269 = arith.addf %267, %268 : vector<8x144xf32>
    %270 = vector.extract_strided_slice %266 {offsets = [0, 0], sizes = [8, 48], strides = [1, 1]} : vector<8x144xf32> to vector<8x48xf32>
    %271 = vector.extract_strided_slice %269 {offsets = [0, 0], sizes = [8, 48], strides = [1, 1]} : vector<8x144xf32> to vector<8x48xf32>
    %272 = arith.addf %270, %271 : vector<8x48xf32>
    %273 = arith.negf %272 : vector<8x48xf32>
    %274 = math.exp %273 : vector<8x48xf32>
    %cst_83 = arith.constant 1.000000e+00 : f32
    %275 = vector.broadcast %cst_83 : f32 to vector<8x48xf32>
    %276 = arith.addf %275, %274 : vector<8x48xf32>
    %277 = arith.divf %275, %276 : vector<8x48xf32>
    %278 = vector.extract_strided_slice %266 {offsets = [0, 48], sizes = [8, 48], strides = [1, 1]} : vector<8x144xf32> to vector<8x48xf32>
    %279 = vector.extract_strided_slice %269 {offsets = [0, 48], sizes = [8, 48], strides = [1, 1]} : vector<8x144xf32> to vector<8x48xf32>
    %280 = arith.addf %278, %279 : vector<8x48xf32>
    %281 = arith.negf %280 : vector<8x48xf32>
    %282 = math.exp %281 : vector<8x48xf32>
    %cst_84 = arith.constant 1.000000e+00 : f32
    %283 = vector.broadcast %cst_84 : f32 to vector<8x48xf32>
    %284 = arith.addf %283, %282 : vector<8x48xf32>
    %285 = arith.divf %283, %284 : vector<8x48xf32>
    %286 = vector.extract_strided_slice %266 {offsets = [0, 96], sizes = [8, 48], strides = [1, 1]} : vector<8x144xf32> to vector<8x48xf32>
    %287 = vector.extract_strided_slice %269 {offsets = [0, 96], sizes = [8, 48], strides = [1, 1]} : vector<8x144xf32> to vector<8x48xf32>
    %288 = arith.mulf %277, %287 : vector<8x48xf32>
    %289 = arith.addf %286, %288 : vector<8x48xf32>
    %290 = math.tanh %289 : vector<8x48xf32>
    %cst_85 = arith.constant 1.000000e+00 : f32
    %291 = vector.broadcast %cst_85 : f32 to vector<8x48xf32>
    %292 = arith.subf %291, %285 : vector<8x48xf32>
    %293 = arith.mulf %292, %290 : vector<8x48xf32>
    %294 = arith.mulf %285, %264 : vector<8x48xf32>
    %295 = arith.addf %293, %294 : vector<8x48xf32>
    %296 = vector.extract_strided_slice %73 {offsets = [0, 7, 0], sizes = [8, 1, 144], strides = [1, 1, 1]} : vector<8x8x144xf32> to vector<8x1x144xf32>
    %297 = vector.shape_cast %296 : vector<8x1x144xf32> to vector<8x144xf32>
    %cst_86 = arith.constant dense<0.000000e+00> : vector<8x144xf32>
    %298 = tpu.matmul %295, %75, %cst_86 {dimension_numbers = #tpu.dot_dimension_numbers<[1], [0], [0], [1], [0, 0, 1, 1], [], []>} : vector<8x48xf32>, vector<48x144xf32>, vector<8x144xf32> -> vector<8x144xf32>
    %299 = vector.broadcast %77 : vector<1x144xf32> to vector<8x144xf32>
    %300 = arith.addf %298, %299 : vector<8x144xf32>
    %301 = vector.extract_strided_slice %297 {offsets = [0, 0], sizes = [8, 48], strides = [1, 1]} : vector<8x144xf32> to vector<8x48xf32>
    %302 = vector.extract_strided_slice %300 {offsets = [0, 0], sizes = [8, 48], strides = [1, 1]} : vector<8x144xf32> to vector<8x48xf32>
    %303 = arith.addf %301, %302 : vector<8x48xf32>
    %304 = arith.negf %303 : vector<8x48xf32>
    %305 = math.exp %304 : vector<8x48xf32>
    %cst_87 = arith.constant 1.000000e+00 : f32
    %306 = vector.broadcast %cst_87 : f32 to vector<8x48xf32>
    %307 = arith.addf %306, %305 : vector<8x48xf32>
    %308 = arith.divf %306, %307 : vector<8x48xf32>
    %309 = vector.extract_strided_slice %297 {offsets = [0, 48], sizes = [8, 48], strides = [1, 1]} : vector<8x144xf32> to vector<8x48xf32>
    %310 = vector.extract_strided_slice %300 {offsets = [0, 48], sizes = [8, 48], strides = [1, 1]} : vector<8x144xf32> to vector<8x48xf32>
    %311 = arith.addf %309, %310 : vector<8x48xf32>
    %312 = arith.negf %311 : vector<8x48xf32>
    %313 = math.exp %312 : vector<8x48xf32>
    %cst_88 = arith.constant 1.000000e+00 : f32
    %314 = vector.broadcast %cst_88 : f32 to vector<8x48xf32>
    %315 = arith.addf %314, %313 : vector<8x48xf32>
    %316 = arith.divf %314, %315 : vector<8x48xf32>
    %317 = vector.extract_strided_slice %297 {offsets = [0, 96], sizes = [8, 48], strides = [1, 1]} : vector<8x144xf32> to vector<8x48xf32>
    %318 = vector.extract_strided_slice %300 {offsets = [0, 96], sizes = [8, 48], strides = [1, 1]} : vector<8x144xf32> to vector<8x48xf32>
    %319 = arith.mulf %308, %318 : vector<8x48xf32>
    %320 = arith.addf %317, %319 : vector<8x48xf32>
    %321 = math.tanh %320 : vector<8x48xf32>
    %cst_89 = arith.constant 1.000000e+00 : f32
    %322 = vector.broadcast %cst_89 : f32 to vector<8x48xf32>
    %323 = arith.subf %322, %316 : vector<8x48xf32>
    %324 = arith.mulf %323, %321 : vector<8x48xf32>
    %325 = arith.mulf %316, %295 : vector<8x48xf32>
    %326 = arith.addf %324, %325 : vector<8x48xf32>
    %cst_90 = arith.constant 0.000000e+00 : f32
    %327 = vector.broadcast %cst_90 : f32 to vector<8x48xf32>
    %328 = arith.maximumf %326, %327 : vector<8x48xf32>
    %c0_91 = arith.constant 0 : index
    %c0_92 = arith.constant 0 : index
    %329 = vector.load %arg13[%c0_91, %c0_92] : memref<8x48xf32, #tpu.memory_space<vmem>>, vector<8x48xf32>
    tpu.vector_store %arg13[%c0_91, %c0_92], %328 {strides = array<i32>} : memref<8x48xf32, #tpu.memory_space<vmem>>, vector<8x48xf32>,
    %c0_93 = arith.constant 0 : index
    %c0_94 = arith.constant 0 : index
    %330 = vector.load %arg9[%c0_93, %c0_94] : memref<3x24xf32, #tpu.memory_space<vmem>>, vector<3x24xf32>
    %331 = vector.shape_cast %328 : vector<8x48xf32> to vector<8x1x48xf32>
    %332 = vector.shape_cast %328 : vector<8x48xf32> to vector<1x8x48xf32>
    %333 = vector.broadcast %331 : vector<8x1x48xf32> to vector<8x8x48xf32>
    %334 = vector.broadcast %332 : vector<1x8x48xf32> to vector<8x8x48xf32>
    %335 = arith.subf %333, %334 : vector<8x8x48xf32>
    %336 = math.absf %335 : vector<8x8x48xf32>
    %337 = vector.shape_cast %336 : vector<8x8x48xf32> to vector<64x48xf32>
    %c0_95 = arith.constant 0 : index
    %c0_96 = arith.constant 0 : index
    %338 = vector.load %arg8[%c0_95, %c0_96] : memref<48x24xf32, #tpu.memory_space<vmem>>, vector<48x24xf32>
    %cst_97 = arith.constant dense<0.000000e+00> : vector<64x24xf32>
    %339 = tpu.matmul %337, %338, %cst_97 {dimension_numbers = #tpu.dot_dimension_numbers<[1], [0], [0], [1], [0, 0, 1, 1], [], []>} : vector<64x48xf32>, vector<48x24xf32>, vector<64x24xf32> -> vector<64x24xf32>
    %340 = vector.extract_strided_slice %330 {offsets = [0, 0], sizes = [1, 24], strides = [1, 1]} : vector<3x24xf32> to vector<1x24xf32>
    %341 = vector.broadcast %340 : vector<1x24xf32> to vector<64x24xf32>
    %342 = arith.addf %339, %341 : vector<64x24xf32>
    %cst_98 = arith.constant 0.000000e+00 : f32
    %343 = vector.broadcast %cst_98 : f32 to vector<64x24xf32>
    %344 = arith.cmpf oge, %342, %343 : vector<64x24xf32>
    %cst_99 = arith.constant 2.000000e-01 : f32
    %345 = vector.broadcast %cst_99 : f32 to vector<64x24xf32>
    %346 = arith.mulf %345, %342 : vector<64x24xf32>
    %347 = arith.select %344, %342, %346 : vector<64x24xi1>, vector<64x24xf32>
    %348 = vector.shape_cast %347 : vector<64x24xf32> to vector<8x8x24xf32>
    %349 = vector.extract_strided_slice %330 {offsets = [1, 0], sizes = [1, 24], strides = [1, 1]} : vector<3x24xf32> to vector<1x24xf32>
    %350 = vector.shape_cast %349 : vector<1x24xf32> to vector<1x1x24xf32>
    %351 = vector.broadcast %350 : vector<1x1x24xf32> to vector<8x8x24xf32>
    %352 = arith.mulf %348, %351 : vector<8x8x24xf32>
    %cst_100 = arith.constant dense<0.000000e+00> : vector<8x8xf32>
    %353 = vector.multi_reduction <add>, %352, %cst_100 [2] : vector<8x8x24xf32> to vector<8x8xf32>
    %354 = vector.extract_strided_slice %330 {offsets = [2, 0], sizes = [1, 1], strides = [1, 1]} : vector<3x24xf32> to vector<1x1xf32>
    %355 = vector.broadcast %354 : vector<1x1xf32> to vector<8x8xf32>
    %356 = arith.addf %353, %355 : vector<8x8xf32>
    %357 = arith.negf %356 : vector<8x8xf32>
    %358 = math.exp %357 : vector<8x8xf32>
    %cst_101 = arith.constant 1.000000e+00 : f32
    %359 = vector.broadcast %cst_101 : f32 to vector<8x8xf32>
    %360 = arith.addf %359, %358 : vector<8x8xf32>
    %361 = arith.divf %359, %360 : vector<8x8xf32>
    %c0_102 = arith.constant 0 : index
    %c0_103 = arith.constant 0 : index
    %362 = vector.load %arg14[%c0_102, %c0_103] : memref<8x8xf32, #tpu.memory_space<vmem>>, vector<8x8xf32>
    tpu.vector_store %arg14[%c0_102, %c0_103], %361 {strides = array<i32>} : memref<8x8xf32, #tpu.memory_space<vmem>>, vector<8x8xf32>,
    %c0_104 = arith.constant 0 : index
    %c0_105 = arith.constant 0 : index
    %363 = vector.load %arg10[%c0_104, %c0_105] : memref<3x8xf32, #tpu.memory_space<vmem>>, vector<3x8xf32>
    %cst_106 = arith.constant dense<0.000000e+00> : vector<3x48xf32>
    %364 = tpu.matmul %363, %328, %cst_106 {dimension_numbers = #tpu.dot_dimension_numbers<[1], [0], [0], [1], [0, 0, 1, 1], [], []>} : vector<3x8xf32>, vector<8x48xf32>, vector<3x48xf32> -> vector<3x48xf32>
    %cst_107 = arith.constant dense<0.000000e+00> : vector<3xf32>
    %365 = vector.multi_reduction <add>, %363, %cst_107 [1] : vector<3x8xf32> to vector<3xf32>
    %366 = vector.shape_cast %365 : vector<3xf32> to vector<3x1xf32>
    %cst_108 = arith.constant 0.000000e+00 : f32
    %367 = vector.broadcast %cst_108 : f32 to vector<3x1xf32>
    %368 = arith.cmpf ogt, %366, %367 : vector<3x1xf32>
    %cst_109 = arith.constant 0.000000e+00 : f32
    %369 = vector.broadcast %cst_109 : f32 to vector<3x1xf32>
    %370 = arith.cmpf ogt, %366, %369 : vector<3x1xf32>
    %cst_110 = arith.constant 1.000000e+00 : f32
    %371 = vector.broadcast %cst_110 : f32 to vector<3x1xf32>
    %372 = arith.select %370, %366, %371 : vector<3x1xi1>, vector<3x1xf32>
    %373 = vector.broadcast %372 : vector<3x1xf32> to vector<3x48xf32>
    %374 = arith.divf %364, %373 : vector<3x48xf32>
    %cst_111 = arith.constant 0.000000e+00 : f32
    %375 = vector.shape_cast %368 : vector<3x1xi1> to vector<3x1xi1>
    %376 = vector.broadcast %375 : vector<3x1xi1> to vector<3x48xi1>
    %377 = vector.broadcast %cst_111 : f32 to vector<3x48xf32>
    %378 = arith.select %376, %374, %377 : vector<3x48xi1>, vector<3x48xf32>
    %c0_112 = arith.constant 0 : index
    %c0_113 = arith.constant 0 : index
    %379 = vector.load %arg11[%c0_112, %c0_113] : memref<3x8xf32, #tpu.memory_space<vmem>>, vector<3x8xf32>
    %cst_114 = arith.constant dense<0.000000e+00> : vector<3x48xf32>
    %380 = tpu.matmul %379, %328, %cst_114 {dimension_numbers = #tpu.dot_dimension_numbers<[1], [0], [0], [1], [0, 0, 1, 1], [], []>} : vector<3x8xf32>, vector<8x48xf32>, vector<3x48xf32> -> vector<3x48xf32>
    %381 = vector.shape_cast %380 : vector<3x48xf32> to vector<3x1x48xf32>
    %382 = vector.shape_cast %378 : vector<3x48xf32> to vector<1x3x48xf32>
    %383 = vector.broadcast %381 : vector<3x1x48xf32> to vector<3x3x48xf32>
    %384 = vector.broadcast %382 : vector<1x3x48xf32> to vector<3x3x48xf32>
    %385 = arith.subf %383, %384 : vector<3x3x48xf32>
    %386 = arith.mulf %385, %385 : vector<3x3x48xf32>
    %cst_115 = arith.constant dense<0.000000e+00> : vector<3x3xf32>
    %387 = vector.multi_reduction <add>, %386, %cst_115 [2] : vector<3x3x48xf32> to vector<3x3xf32>
    %388 = math.sqrt %387 : vector<3x3xf32>
    %cst_116 = arith.constant 1.000000e-10 : f32
    %389 = vector.broadcast %cst_116 : f32 to vector<3x3xf32>
    %390 = arith.addf %388, %389 : vector<3x3xf32>
    %cst_117 = arith.constant 1.000000e+00 : f32
    %391 = vector.broadcast %cst_117 : f32 to vector<3x3xf32>
    %392 = arith.divf %391, %390 : vector<3x3xf32>
    %c0_118 = arith.constant 0 : index
    %c0_119 = arith.constant 0 : index
    %393 = vector.load %arg12[%c0_118, %c0_119] : memref<3x3xf32, #tpu.memory_space<vmem>>, vector<3x3xf32>
    tpu.vector_store %arg12[%c0_118, %c0_119], %392 {strides = array<i32>} : memref<3x3xf32, #tpu.memory_space<vmem>>, vector<3x3xf32>,
    return
  }
}

</mosaic_0001>

<llo_original>
// kernel: three_stream_forward.1
$region0: #{three_stream_forward.1}
  #allocation0 [shape = 'u32[]', space=smem, size = 0x4, offset = 0x4, fixed_abs, tag = 'smem constant byte address 0x4 - core index']
  #allocation1 [shape = 'u32[144,128]{1,0:T(1,128)}', space=vmem, size = 0x12000, scoped, tag = 'internal scratch']
  %s0 = inlined_call_operand.vmem [shape: f32[8,8,6], index: 0, kind: input, shape index: {}]
  %s1 = inlined_call_operand.vmem [shape: f32[8,8,5], index: 1, kind: input, shape index: {}]
  %s2 = inlined_call_operand.vmem [shape: f32[8,8,7], index: 2, kind: input, shape index: {}]
  %s3 = inlined_call_operand.vmem [shape: f32[3,7,12], index: 3, kind: input, shape index: {}]
  %s4 = inlined_call_operand.vmem [shape: f32[3,12,16], index: 4, kind: input, shape index: {}]
  %s5 = inlined_call_operand.vmem [shape: f32[3,2,16], index: 5, kind: input, shape index: {}]
  %s6 = inlined_call_operand.vmem [shape: f32[2,48,144], index: 6, kind: input, shape index: {}]
  %s7 = inlined_call_operand.vmem [shape: f32[2,1,144], index: 7, kind: input, shape index: {}]
  %s8 = inlined_call_operand.vmem [shape: f32[48,24], index: 8, kind: input, shape index: {}]
  %s9 = inlined_call_operand.vmem [shape: f32[3,24], index: 9, kind: input, shape index: {}]
  %s10 = inlined_call_operand.vmem [shape: f32[3,8], index: 10, kind: input, shape index: {}]
  %s11 = inlined_call_operand.vmem [shape: f32[3,8], index: 11, kind: input, shape index: {}]
  %s12 = inlined_call_operand.hbm [shape: f32[3,3], index: 12, kind: output, shape index: {0}]
  %s13 = inlined_call_operand.hbm [shape: f32[8,48], index: 13, kind: output, shape index: {1}]
  %s14 = inlined_call_operand.hbm [shape: f32[8,8], index: 14, kind: output, shape index: {2}]
  %15 = xla_tuple %s12, %s13, %s14
  %s16 = sld [smem:[#allocation0]]
  $region74: #{three_stream_forward.1} parent=0
    _
  %s18 = ssub.s32 1, %s16
  %s19 = scalar_select 0, %s18, %s16
  $region1: #{three_stream_forward.1} parent=0
    #allocation2 [shape = 'u8[2048]{0}', space=vmem, size = 0x800, scoped, tag = 'output window, operand 0, single buffered']
    #allocation3 [shape = 's32[1]{0}', space=sflag, size = 0x4, scoped, tag = 'scoped memory for three_stream_forward.1']
    #allocation4 [shape = 'u8[4096]{0}', space=vmem, size = 0x1000, scoped, tag = 'output window, operand 1, single buffered']
    #allocation5 [shape = 's32[1]{0}', space=sflag, size = 0x4, scoped, tag = 'scoped memory for three_stream_forward.1']
    #allocation6 [shape = 'u8[4096]{0}', space=vmem, size = 0x1000, scoped, tag = 'output window, operand 2, single buffered']
    %20 = vsyncpa [#allocation3], 0
    %21 = vsyncpa [#allocation5], 0
    // Predicated region
    $region2: #{three_stream_forward.1} parent=1 // pred_check
      _
    $region3: #{three_stream_forward.1} parent=1 // pred_check_branch
      %23 = sbr.rel (0) target = $region5
    $region4: #{three_stream_forward.1} parent=1 // pred_region
      _
    $region5: #{three_stream_forward.1} parent=1 // pred_fallthru
      _
    // Predicated region
    $region6: #{three_stream_forward.1} parent=1 // pred_check
      _
    $region7: #{three_stream_forward.1} parent=1 // pred_check_branch
      %25 = sbr.rel (0) target = $region9
    $region8: #{three_stream_forward.1} parent=1 // pred_region
      _
    $region9: #{three_stream_forward.1} parent=1 // pred_fallthru
      _
    // Predicated region
    $region10: #{three_stream_forward.1} parent=1 // pred_check
      _
    $region11: #{three_stream_forward.1} parent=1 // pred_check_branch
      %27 = sbr.rel (0) target = $region13
    $region12: #{three_stream_forward.1} parent=1 // pred_region
      _
    $region13: #{three_stream_forward.1} parent=1 // pred_fallthru
      _
    // Predicated region
    $region14: #{three_stream_forward.1} parent=1 // pred_check
      _
    $region15: #{three_stream_forward.1} parent=1 // pred_check_branch
      %29 = sbr.rel (0) target = $region17
    $region16: #{three_stream_forward.1} parent=1 // pred_region
      _
    $region17: #{three_stream_forward.1} parent=1 // pred_fallthru
      _
    // Predicated region
    $region18: #{three_stream_forward.1} parent=1 // pred_check
      _
    $region19: #{three_stream_forward.1} parent=1 // pred_check_branch
      %31 = sbr.rel (0) target = $region21
    $region20: #{three_stream_forward.1} parent=1 // pred_region
      _
    $region21: #{three_stream_forward.1} parent=1 // pred_fallthru
      _
    // Predicated region
    $region22: #{three_stream_forward.1} parent=1 // pred_check
      _
    $region23: #{three_stream_forward.1} parent=1 // pred_check_branch
      %33 = sbr.rel (0) target = $region25
    $region24: #{three_stream_forward.1} parent=1 // pred_region
      _
    $region25: #{three_stream_forward.1} parent=1 // pred_fallthru
      _
    // Predicated region
    $region26: #{three_stream_forward.1} parent=1 // pred_check
      _
    $region27: #{three_stream_forward.1} parent=1 // pred_check_branch
      %35 = sbr.rel (0) target = $region29
    $region28: #{three_stream_forward.1} parent=1 // pred_region
      _
    $region29: #{three_stream_forward.1} parent=1 // pred_fallthru
      _
    // Predicated region
    $region30: #{three_stream_forward.1} parent=1 // pred_check
      _
    $region31: #{three_stream_forward.1} parent=1 // pred_check_branch
      %37 = sbr.rel (0) target = $region33
    $region32: #{three_stream_forward.1} parent=1 // pred_region
      _
    $region33: #{three_stream_forward.1} parent=1 // pred_fallthru
      _
    // Predicated region
    $region34: #{three_stream_forward.1} parent=1 // pred_check
      _
    $region35: #{three_stream_forward.1} parent=1 // pred_check_branch
      %39 = sbr.rel (0) target = $region37
    $region36: #{three_stream_forward.1} parent=1 // pred_region
      _
    $region37: #{three_stream_forward.1} parent=1 // pred_fallthru
      _
    // Predicated region
    $region38: #{three_stream_forward.1} parent=1 // pred_check
      _
    $region39: #{three_stream_forward.1} parent=1 // pred_check_branch
      %41 = sbr.rel (0) target = $region41
    $region40: #{three_stream_forward.1} parent=1 // pred_region
      _
    $region41: #{three_stream_forward.1} parent=1 // pred_fallthru
      _
    // Predicated region
    $region42: #{three_stream_forward.1} parent=1 // pred_check
      _
    $region43: #{three_stream_forward.1} parent=1 // pred_check_branch
      %43 = sbr.rel (0) target = $region45
    $region44: #{three_stream_forward.1} parent=1 // pred_region
      _
    $region45: #{three_stream_forward.1} parent=1 // pred_fallthru
      _
    // Predicated region
    $region46: #{three_stream_forward.1} parent=1 // pred_check
      _
    $region47: #{three_stream_forward.1} parent=1 // pred_check_branch
      %45 = sbr.rel (0) target = $region49
    $region48: #{three_stream_forward.1} parent=1 // pred_region
      _
    $region49: #{three_stream_forward.1} parent=1 // pred_fallthru
      _
    %v46 = vld [vmem:[%s0] sm:$0xff]
    %v47 = vld [vmem:[%s0 + $0x8] sm:$0xff]
    %v48 = vld [vmem:[%s0 + $0x10] sm:$0xff]
    %v49 = vld [vmem:[%s0 + $0x18] sm:$0xff]
    %v50 = vld [vmem:[%s0 + $0x20] sm:$0xff]
    %v51 = vld [vmem:[%s0 + $0x28] sm:$0xff]
    %v52 = vld [vmem:[%s0 + $0x30] sm:$0xff]
    %v53 = vld [vmem:[%s0 + $0x38] sm:$0xff]
    %v54 = vld [vmem:[%s3] sm:$0x7f]
    %v55 = vld [vmem:[%s4] sm:$0xff]
    %v56 = vld [vmem:[%s4 + $0x8] sm:$0xf]
    %v57 = vld [vmem:[%s5] sm:$0x3]
    %v58 = vlaneseq
    %v59 = vshrl.u32 %v58, 7
    %v60 = vsub.s32 0, %v59
    %v61 = vrot.slane %v57, %v60
    %vm62 = vcmask 48128
    %v64 = vsel %vm62, %v46, 0
    %v67 = vsel %vm62, %v47, 0
    %v70 = vsel %vm62, %v48, 0
    %v73 = vsel %vm62, %v49, 0
    %v76 = vsel %vm62, %v50, 0
    %v79 = vsel %vm62, %v51, 0
    %v82 = vsel %vm62, %v52, 0
    %v85 = vsel %vm62, %v53, 0
    %vm87 = vcmask 1045504
    %v89 = vsel %vm87, %v54, 0
    %91 = vmatprep.subr.mxu0 0.0
    %92 = vmatpush1.msra.mxu0 %v89
    %93 = vmatprep.subr.mxu0 0.0
    %94 = vmatpush1.msra.mxu0 0.0
    %95 = vmatprep.subr.mxu0 0.0
    %96 = vmatpush1.msra.mxu0 0.0
    %97 = vmatprep.subr.mxu0 0.0
    %98 = vmatpush1.msra.mxu0 0.0
    %99 = vmatprep.subr.mxu0 0.0
    %100 = vmatpush1.msra.mxu0 0.0
    %101 = vmatprep.subr.mxu0 0.0
    %102 = vmatpush1.msra.mxu0 0.0
    %103 = vmatprep.subr.mxu0 0.0
    %104 = vmatpush1.msra.mxu0 0.0
    %105 = vmatprep.subr.mxu0 0.0
    %106 = vmatpush1.msra.mxu0 0.0
    %107 = vmatprep.subr.mxu0 0.0
    %108 = vmatpush1.msra.mxu0 0.0
    %109 = vmatprep.subr.mxu0 0.0
    %110 = vmatpush1.msra.mxu0 0.0
    %111 = vmatprep.subr.mxu0 0.0
    %112 = vmatpush1.msra.mxu0 0.0
    %113 = vmatprep.subr.mxu0 0.0
    %114 = vmatpush1.msra.mxu0 0.0
    %115 = vmatprep.subr.mxu0 0.0
    %116 = vmatpush1.msra.mxu0 0.0
    %117 = vmatprep.subr.mxu0 0.0
    %118 = vmatpush1.msra.mxu0 0.0
    %119 = vmatprep.subr.mxu0 0.0
    %120 = vmatpush1.msra.mxu0 0.0
    %121 = vmatprep.subr.mxu0 0.0
    %122 = vmatpush1.msra.mxu0 0.0
    %123 = vmatprep.subr.mxu0 0.0
    %124 = vmatpush1.msra.mxu0 0.0
    %125 = vmatprep.subr.mxu0 0.0
    %126 = vmatpush1.msra.mxu0 0.0
    %127 = vmatprep.subr.mxu0 0.0
    %128 = vmatpush1.msra.mxu0 0.0
    %129 = vmatprep.subr.mxu0 0.0
    %130 = vmatpush1.msra.mxu0 0.0
    %131 = vmatprep.subr.mxu0 0.0
    %132 = vmatpush1.msra.mxu0 0.0
    %133 = vmatprep.subr.mxu0 0.0
    %134 = vmatpush1.msra.mxu0 0.0
    %135 = vmatprep.subr.mxu0 0.0
    %136 = vmatpush1.msra.mxu0 0.0
    %137 = vmatprep.subr.mxu0 0.0
    %138 = vmatpush1.msra.mxu0 0.0
    %139 = vmatprep.subr.mxu0 0.0
    %140 = vmatpush1.msra.mxu0 0.0
    %141 = vmatprep.subr.mxu0 0.0
    %142 = vmatpush1.msra.mxu0 0.0
    %143 = vmatprep.subr.mxu0 0.0
    %144 = vmatpush1.msra.mxu0 0.0
    %145 = vmatprep.subr.mxu0 0.0
    %146 = vmatpush1.msra.mxu0 0.0
    %147 = vmatprep.subr.mxu0 0.0
    %148 = vmatpush1.msra.mxu0 0.0
    %149 = vmatprep.subr.mxu0 0.0
    %150 = vmatpush1.msra.mxu0 0.0
    %151 = vmatprep.subr.mxu0 0.0
    %152 = vmatpush1.msra.mxu0 0.0
    %153 = vmatprep.subr.mxu0 0.0
    %154 = vmatpush1.msra.mxu0 0.0
    %155 = vmatprep.mubr.f32.mxu0 0.0
    %156 = vmatmul.mubr.f32.gmra.mrb[0].mxu0 %v64
    %v157 = vpop.f32.mrb[0].mxu0
    %v158 = vadd.f32 %v61, %v157
    %v159 = vpop.f32.mrb[0].mxu0
    %160 = vmatprep.mubr.f32.mxu0 0.0
    %161 = vmatmul.mubr.f32.gmra.mrb[0].mxu0 %v67
    %v162 = vpop.f32.mrb[0].mxu0
    %v163 = vadd.f32 %v61, %v162
    %v164 = vpop.f32.mrb[0].mxu0
    %165 = vmatprep.mubr.f32.mxu0 0.0
    %166 = vmatmul.mubr.f32.gmra.mrb[0].mxu0 %v70
    %v167 = vpop.f32.mrb[0].mxu0
    %v168 = vadd.f32 %v61, %v167
    %v169 = vpop.f32.mrb[0].mxu0
    %170 = vmatprep.mubr.f32.mxu0 0.0
    %171 = vmatmul.mubr.f32.gmra.mrb[0].mxu0 %v73
    %v172 = vpop.f32.mrb[0].mxu0
    %v173 = vadd.f32 %v61, %v172
    %v174 = vpop.f32.mrb[0].mxu0
    %175 = vmatprep.mubr.f32.mxu0 0.0
    %176 = vmatmul.mubr.f32.gmra.mrb[0].mxu0 %v76
    %v177 = vpop.f32.mrb[0].mxu0
    %v178 = vadd.f32 %v61, %v177
    %v179 = vpop.f32.mrb[0].mxu0
    %180 = vmatprep.mubr.f32.mxu0 0.0
    %181 = vmatmul.mubr.f32.gmra.mrb[0].mxu0 %v79
    %v182 = vpop.f32.mrb[0].mxu0
    %v183 = vadd.f32 %v61, %v182
    %v184 = vpop.f32.mrb[0].mxu0
    %185 = vmatprep.mubr.f32.mxu0 0.0
    %186 = vmatmul.mubr.f32.gmra.mrb[0].mxu0 %v82
    %v187 = vpop.f32.mrb[0].mxu0
    %v188 = vadd.f32 %v61, %v187
    %v189 = vpop.f32.mrb[0].mxu0
    %190 = vmatprep.mubr.f32.mxu0 0.0
    %191 = vmatmul.mubr.f32.gmra.mrb[0].mxu0 %v85
    %v192 = vpop.f32.mrb[0].mxu0
    %v193 = vadd.f32 %v61, %v192
    %v194 = vpop.f32.mrb[0].mxu0
    %195 = vdwg.mxu0
    %vm196 = vcmp.ge.f32.partialorder %v158, 0.0
    %vm197 = vcmp.ge.f32.partialorder %v163, 0.0
    %vm198 = vcmp.ge.f32.partialorder %v168, 0.0
    %vm199 = vcmp.ge.f32.partialorder %v173, 0.0
    %vm200 = vcmp.ge.f32.partialorder %v178, 0.0
    %vm201 = vcmp.ge.f32.partialorder %v183, 0.0
    %vm202 = vcmp.ge.f32.partialorder %v188, 0.0
    %vm203 = vcmp.ge.f32.partialorder %v193, 0.0
    %v204 = vmul.f32 %v158, 0.2
    %v205 = vmul.f32 %v163, 0.2
    %v206 = vmul.f32 %v168, 0.2
    %v207 = vmul.f32 %v173, 0.2
    %v208 = vmul.f32 %v178, 0.2
    %v209 = vmul.f32 %v183, 0.2
    %v210 = vmul.f32 %v188, 0.2
    %v211 = vmul.f32 %v193, 0.2
    %v212 = vsel %vm196, %v158, %v204
    %v213 = vsel %vm197, %v163, %v205
    %v214 = vsel %vm198, %v168, %v206
    %v215 = vsel %vm199, %v173, %v207
    %v216 = vsel %vm200, %v178, %v208
    %v217 = vsel %vm201, %v183, %v209
    %v218 = vsel %vm202, %v188, %v210
    %v219 = vsel %vm203, %v193, %v211
    %v220 = vlaneseq
    %v221 = vshrl.u32 %v220, 7
    %v222 = vsub.s32 1, %v221
    %v223 = vrot.slane %v57, %v222
    %vm224 = vcmask 97280
    %v226 = vsel %vm224, %v212, 0
    %v229 = vsel %vm224, %v213, 0
    %v232 = vsel %vm224, %v214, 0
    %v235 = vsel %vm224, %v215, 0
    %v238 = vsel %vm224, %v216, 0
    %v241 = vsel %vm224, %v217, 0
    %v244 = vsel %vm224, %v218, 0
    %v247 = vsel %vm224, %v219, 0
    %vm249 = vcmask 1043456
    %v251 = vsel %vm249, %v56, 0
    %253 = vmatprep.subr.mxu0 0.0
    %254 = vmatpush1.msra.mxu0 %v55
    %255 = vmatprep.subr.mxu0 0.0
    %256 = vmatpush1.msra.mxu0 %v251
    %257 = vmatprep.subr.mxu0 0.0
    %258 = vmatpush1.msra.mxu0 0.0
    %259 = vmatprep.subr.mxu0 0.0
    %260 = vmatpush1.msra.mxu0 0.0
    %261 = vmatprep.subr.mxu0 0.0
    %262 = vmatpush1.msra.mxu0 0.0
    %263 = vmatprep.subr.mxu0 0.0
    %264 = vmatpush1.msra.mxu0 0.0
    %265 = vmatprep.subr.mxu0 0.0
    %266 = vmatpush1.msra.mxu0 0.0
    %267 = vmatprep.subr.mxu0 0.0
    %268 = vmatpush1.msra.mxu0 0.0
    %269 = vmatprep.subr.mxu0 0.0
    %270 = vmatpush1.msra.mxu0 0.0
    %271 = vmatprep.subr.mxu0 0.0
    %272 = vmatpush1.msra.mxu0 0.0
    %273 = vmatprep.subr.mxu0 0.0
    %274 = vmatpush1.msra.mxu0 0.0
    %275 = vmatprep.subr.mxu0 0.0
    %276 = vmatpush1.msra.mxu0 0.0
    %277 = vmatprep.subr.mxu0 0.0
    %278 = vmatpush1.msra.mxu0 0.0
    %279 = vmatprep.subr.mxu0 0.0
    %280 = vmatpush1.msra.mxu0 0.0
    %281 = vmatprep.subr.mxu0 0.0
    %282 = vmatpush1.msra.mxu0 0.0
    %283 = vmatprep.subr.mxu0 0.0
    %284 = vmatpush1.msra.mxu0 0.0
    %285 = vmatprep.subr.mxu0 0.0
    %286 = vmatpush1.msra.mxu0 0.0
    %287 = vmatprep.subr.mxu0 0.0
    %288 = vmatpush1.msra.mxu0 0.0
    %289 = vmatprep.subr.mxu0 0.0
    %290 = vmatpush1.msra.mxu0 0.0
    %291 = vmatprep.subr.mxu0 0.0
    %292 = vmatpush1.msra.mxu0 0.0
    %293 = vmatprep.subr.mxu0 0.0
    %294 = vmatpush1.msra.mxu0 0.0
    %295 = vmatprep.subr.mxu0 0.0
    %296 = vmatpush1.msra.mxu0 0.0
    %297 = vmatprep.subr.mxu0 0.0
    %298 = vmatpush1.msra.mxu0 0.0
    %299 = vmatprep.subr.mxu0 0.0
    %300 = vmatpush1.msra.mxu0 0.0
    %301 = vmatprep.subr.mxu0 0.0
    %302 = vmatpush1.msra.mxu0 0.0
    %303 = vmatprep.subr.mxu0 0.0
    %304 = vmatpush1.msra.mxu0 0.0
    %305 = vmatprep.subr.mxu0 0.0
    %306 = vmatpush1.msra.mxu0 0.0
    %307 = vmatprep.subr.mxu0 0.0
    %308 = vmatpush1.msra.mxu0 0.0
    %309 = vmatprep.subr.mxu0 0.0
    %310 = vmatpush1.msra.mxu0 0.0
    %311 = vmatprep.subr.mxu0 0.0
    %312 = vmatpush1.msra.mxu0 0.0
    %313 = vmatprep.subr.mxu0 0.0
    %314 = vmatpush1.msra.mxu0 0.0
    %315 = vmatprep.subr.mxu0 0.0
    %316 = vmatpush1.msra.mxu0 0.0
    %317 = vmatprep.mubr.f32.mxu0 0.0
    %318 = vmatmul.mubr.f32.gmra.mrb[0].mxu0 %v226
    %v319 = vpop.f32.mrb[0].mxu0
    %v320 = vadd.f32 %v223, %v319
    %v321 = vpop.f32.mrb[0].mxu0
    %322 = vmatprep.mubr.f32.mxu0 0.0
    %323 = vmatmul.mubr.f32.gmra.mrb[0].mxu0 %v229
    %v324 = vpop.f32.mrb[0].mxu0
    %v325 = vadd.f32 %v223, %v324
    %v326 = vpop.f32.mrb[0].mxu0
    %327 = vmatprep.mubr.f32.mxu0 0.0
    %328 = vmatmul.mubr.f32.gmra.mrb[0].mxu0 %v232
    %v329 = vpop.f32.mrb[0].mxu0
    %v330 = vadd.f32 %v223, %v329
    %v331 = vpop.f32.mrb[0].mxu0
    %332 = vmatprep.mubr.f32.mxu0 0.0
    %333 = vmatmul.mubr.f32.gmra.mrb[0].mxu0 %v235
    %v334 = vpop.f32.mrb[0].mxu0
    %v335 = vadd.f32 %v223, %v334
    %v336 = vpop.f32.mrb[0].mxu0
    %337 = vmatprep.mubr.f32.mxu0 0.0
    %338 = vmatmul.mubr.f32.gmra.mrb[0].mxu0 %v238
    %v339 = vpop.f32.mrb[0].mxu0
    %v340 = vadd.f32 %v223, %v339
    %v341 = vpop.f32.mrb[0].mxu0
    %342 = vmatprep.mubr.f32.mxu0 0.0
    %343 = vmatmul.mubr.f32.gmra.mrb[0].mxu0 %v241
    %v344 = vpop.f32.mrb[0].mxu0
    %v345 = vadd.f32 %v223, %v344
    %v346 = vpop.f32.mrb[0].mxu0
    %347 = vmatprep.mubr.f32.mxu0 0.0
    %348 = vmatmul.mubr.f32.gmra.mrb[0].mxu0 %v244
    %v349 = vpop.f32.mrb[0].mxu0
    %v350 = vadd.f32 %v223, %v349
    %v351 = vpop.f32.mrb[0].mxu0
    %352 = vmatprep.mubr.f32.mxu0 0.0
    %353 = vmatmul.mubr.f32.gmra.mrb[0].mxu0 %v247
    %v354 = vpop.f32.mrb[0].mxu0
    %v355 = vadd.f32 %v223, %v354
    %v356 = vpop.f32.mrb[0].mxu0
    %357 = vdwg.mxu0
    %v358 = vld [vmem:[%s1] sm:$0xff]
    %v359 = vld [vmem:[%s1 + $0x8] sm:$0xff]
    %v360 = vld [vmem:[%s1 + $0x10] sm:$0xff]
    %v361 = vld [vmem:[%s1 + $0x18] sm:$0xff]
    %v362 = vld [vmem:[%s1 + $0x20] sm:$0xff]
    %v363 = vld [vmem:[%s1 + $0x28] sm:$0xff]
    %v364 = vld [vmem:[%s1 + $0x30] sm:$0xff]
    %v365 = vld [vmem:[%s1 + $0x38] sm:$0xff]
    %s366 = scalar_lea.vmem %s3, 8
    %v367 = vld [vmem:[%s366] sm:$0x7f]
    %s368 = scalar_lea.vmem %s4, 16
    %v369 = vld [vmem:[%s368] sm:$0xff]
    %v370 = vld [vmem:[%s368 + $0x8] sm:$0xf]
    %s371 = scalar_lea.vmem %s5, 2
    %v372 = vld [vmem:[%s371] sm:$0x3]
    %v373 = vlaneseq
    %v374 = vshrl.u32 %v373, 7
    %v375 = vsub.s32 0, %v374
    %v376 = vrot.slane %v372, %v375
    %vm377 = vcmask 39936
    %v379 = vsel %vm377, %v358, 0
    %v382 = vsel %vm377, %v359, 0
    %v385 = vsel %vm377, %v360, 0
    %v388 = vsel %vm377, %v361, 0
    %v391 = vsel %vm377, %v362, 0
    %v394 = vsel %vm377, %v363, 0
    %v397 = vsel %vm377, %v364, 0
    %v400 = vsel %vm377, %v365, 0
    %vm402 = vcmask 1044480
    %v404 = vsel %vm402, %v367, 0
    %406 = vmatprep.subr.mxu0 0.0
    %407 = vmatpush1.msra.mxu0 %v404
    %408 = vmatprep.subr.mxu0 0.0
    %409 = vmatpush1.msra.mxu0 0.0
    %410 = vmatprep.subr.mxu0 0.0
    %411 = vmatpush1.msra.mxu0 0.0
    %412 = vmatprep.subr.mxu0 0.0
    %413 = vmatpush1.msra.mxu0 0.0
    %414 = vmatprep.subr.mxu0 0.0
    %415 = vmatpush1.msra.mxu0 0.0
    %416 = vmatprep.subr.mxu0 0.0
    %417 = vmatpush1.msra.mxu0 0.0
    %418 = vmatprep.subr.mxu0 0.0
    %419 = vmatpush1.msra.mxu0 0.0
    %420 = vmatprep.subr.mxu0 0.0
    %421 = vmatpush1.msra.mxu0 0.0
    %422 = vmatprep.subr.mxu0 0.0
    %423 = vmatpush1.msra.mxu0 0.0
    %424 = vmatprep.subr.mxu0 0.0
    %425 = vmatpush1.msra.mxu0 0.0
    %426 = vmatprep.subr.mxu0 0.0
    %427 = vmatpush1.msra.mxu0 0.0
    %428 = vmatprep.subr.mxu0 0.0
    %429 = vmatpush1.msra.mxu0 0.0
    %430 = vmatprep.subr.mxu0 0.0
    %431 = vmatpush1.msra.mxu0 0.0
    %432 = vmatprep.subr.mxu0 0.0
    %433 = vmatpush1.msra.mxu0 0.0
    %434 = vmatprep.subr.mxu0 0.0
    %435 = vmatpush1.msra.mxu0 0.0
    %436 = vmatprep.subr.mxu0 0.0
    %437 = vmatpush1.msra.mxu0 0.0
    %438 = vmatprep.subr.mxu0 0.0
    %439 = vmatpush1.msra.mxu0 0.0
    %440 = vmatprep.subr.mxu0 0.0
    %441 = vmatpush1.msra.mxu0 0.0
    %442 = vmatprep.subr.mxu0 0.0
    %443 = vmatpush1.msra.mxu0 0.0
    %444 = vmatprep.subr.mxu0 0.0
    %445 = vmatpush1.msra.mxu0 0.0
    %446 = vmatprep.subr.mxu0 0.0
    %447 = vmatpush1.msra.mxu0 0.0
    %448 = vmatprep.subr.mxu0 0.0
    %449 = vmatpush1.msra.mxu0 0.0
    %450 = vmatprep.subr.mxu0 0.0
    %451 = vmatpush1.msra.mxu0 0.0
    %452 = vmatprep.subr.mxu0 0.0
    %453 = vmatpush1.msra.mxu0 0.0
    %454 = vmatprep.subr.mxu0 0.0
    %455 = vmatpush1.msra.mxu0 0.0
    %456 = vmatprep.subr.mxu0 0.0
    %457 = vmatpush1.msra.mxu0 0.0
    %458 = vmatprep.subr.mxu0 0.0
    %459 = vmatpush1.msra.mxu0 0.0
    %460 = vmatprep.subr.mxu0 0.0
    %461 = vmatpush1.msra.mxu0 0.0
    %462 = vmatprep.subr.mxu0 0.0
    %463 = vmatpush1.msra.mxu0 0.0
    %464 = vmatprep.subr.mxu0 0.0
    %465 = vmatpush1.msra.mxu0 0.0
    %466 = vmatprep.subr.mxu0 0.0
    %467 = vmatpush1.msra.mxu0 0.0
    %468 = vmatprep.subr.mxu0 0.0
    %469 = vmatpush1.msra.mxu0 0.0
    %470 = vmatprep.mubr.f32.mxu0 0.0
    %471 = vmatmul.mubr.f32.gmra.mrb[0].mxu0 %v379
    %v472 = vpop.f32.mrb[0].mxu0
    %v473 = vadd.f32 %v376, %v472
    %v474 = vpop.f32.mrb[0].mxu0
    %475 = vmatprep.mubr.f32.mxu0 0.0
    %476 = vmatmul.mubr.f32.gmra.mrb[0].mxu0 %v382
    %v477 = vpop.f32.mrb[0].mxu0
    %v478 = vadd.f32 %v376, %v477
    %v479 = vpop.f32.mrb[0].mxu0
    %480 = vmatprep.mubr.f32.mxu0 0.0
    %481 = vmatmul.mubr.f32.gmra.mrb[0].mxu0 %v385
    %v482 = vpop.f32.mrb[0].mxu0
    %v483 = vadd.f32 %v376, %v482
    %v484 = vpop.f32.mrb[0].mxu0
    %485 = vmatprep.mubr.f32.mxu0 0.0
    %486 = vmatmul.mubr.f32.gmra.mrb[0].mxu0 %v388
    %v487 = vpop.f32.mrb[0].mxu0
    %v488 = vadd.f32 %v376, %v487
    %v489 = vpop.f32.mrb[0].mxu0
    %490 = vmatprep.mubr.f32.mxu0 0.0
    %491 = vmatmul.mubr.f32.gmra.mrb[0].mxu0 %v391
    %v492 = vpop.f32.mrb[0].mxu0
    %v493 = vadd.f32 %v376, %v492
    %v494 = vpop.f32.mrb[0].mxu0
    %495 = vmatprep.mubr.f32.mxu0 0.0
    %496 = vmatmul.mubr.f32.gmra.mrb[0].mxu0 %v394
    %v497 = vpop.f32.mrb[0].mxu0
    %v498 = vadd.f32 %v376, %v497
    %v499 = vpop.f32.mrb[0].mxu0
    %500 = vmatprep.mubr.f32.mxu0 0.0
    %501 = vmatmul.mubr.f32.gmra.mrb[0].mxu0 %v397
    %v502 = vpop.f32.mrb[0].mxu0
    %v503 = vadd.f32 %v376, %v502
    %v504 = vpop.f32.mrb[0].mxu0
    %505 = vmatprep.mubr.f32.mxu0 0.0
    %506 = vmatmul.mubr.f32.gmra.mrb[0].mxu0 %v400
    %v507 = vpop.f32.mrb[0].mxu0
    %v508 = vadd.f32 %v376, %v507
    %v509 = vpop.f32.mrb[0].mxu0
    %510 = vdwg.mxu0
    %vm511 = vcmp.ge.f32.partialorder %v473, 0.0
    %vm512 = vcmp.ge.f32.partialorder %v478, 0.0
    %vm513 = vcmp.ge.f32.partialorder %v483, 0.0
    %vm514 = vcmp.ge.f32.partialorder %v488, 0.0
    %vm515 = vcmp.ge.f32.partialorder %v493, 0.0
    %vm516 = vcmp.ge.f32.partialorder %v498, 0.0
    %vm517 = vcmp.ge.f32.partialorder %v503, 0.0
    %vm518 = vcmp.ge.f32.partialorder %v508, 0.0
    %v519 = vmul.f32 %v473, 0.2
    %v520 = vmul.f32 %v478, 0.2
    %v521 = vmul.f32 %v483, 0.2
    %v522 = vmul.f32 %v488, 0.2
    %v523 = vmul.f32 %v493, 0.2
    %v524 = vmul.f32 %v498, 0.2
    %v525 = vmul.f32 %v503, 0.2
    %v526 = vmul.f32 %v508, 0.2
    %v527 = vsel %vm511, %v473, %v519
    %v528 = vsel %vm512, %v478, %v520
    %v529 = vsel %vm513, %v483, %v521
    %v530 = vsel %vm514, %v488, %v522
    %v531 = vsel %vm515, %v493, %v523
    %v532 = vsel %vm516, %v498, %v524
    %v533 = vsel %vm517, %v503, %v525
    %v534 = vsel %vm518, %v508, %v526
    %v535 = vlaneseq
    %v536 = vshrl.u32 %v535, 7
    %v537 = vsub.s32 1, %v536
    %v538 = vrot.slane %v372, %v537
    %v540 = vsel %vm224, %v527, 0
    %v543 = vsel %vm224, %v528, 0
    %v546 = vsel %vm224, %v529, 0
    %v549 = vsel %vm224, %v530, 0
    %v552 = vsel %vm224, %v531, 0
    %v555 = vsel %vm224, %v532, 0
    %v558 = vsel %vm224, %v533, 0
    %v561 = vsel %vm224, %v534, 0
    %v564 = vsel %vm249, %v370, 0
    %566 = vmatprep.subr.mxu0 0.0
    %567 = vmatpush1.msra.mxu0 %v369
    %568 = vmatprep.subr.mxu0 0.0
    %569 = vmatpush1.msra.mxu0 %v564
    %570 = vmatprep.subr.mxu0 0.0
    %571 = vmatpush1.msra.mxu0 0.0
    %572 = vmatprep.subr.mxu0 0.0
    %573 = vmatpush1.msra.mxu0 0.0
    %574 = vmatprep.subr.mxu0 0.0
    %575 = vmatpush1.msra.mxu0 0.0
    %576 = vmatprep.subr.mxu0 0.0
    %577 = vmatpush1.msra.mxu0 0.0
    %578 = vmatprep.subr.mxu0 0.0
    %579 = vmatpush1.msra.mxu0 0.0
    %580 = vmatprep.subr.mxu0 0.0
    %581 = vmatpush1.msra.mxu0 0.0
    %582 = vmatprep.subr.mxu0 0.0
    %583 = vmatpush1.msra.mxu0 0.0
    %584 = vmatprep.subr.mxu0 0.0
    %585 = vmatpush1.msra.mxu0 0.0
    %586 = vmatprep.subr.mxu0 0.0
    %587 = vmatpush1.msra.mxu0 0.0
    %588 = vmatprep.subr.mxu0 0.0
    %589 = vmatpush1.msra.mxu0 0.0
    %590 = vmatprep.subr.mxu0 0.0
    %591 = vmatpush1.msra.mxu0 0.0
    %592 = vmatprep.subr.mxu0 0.0
    %593 = vmatpush1.msra.mxu0 0.0
    %594 = vmatprep.subr.mxu0 0.0
    %595 = vmatpush1.msra.mxu0 0.0
    %596 = vmatprep.subr.mxu0 0.0
    %597 = vmatpush1.msra.mxu0 0.0
    %598 = vmatprep.subr.mxu0 0.0
    %599 = vmatpush1.msra.mxu0 0.0
    %600 = vmatprep.subr.mxu0 0.0
    %601 = vmatpush1.msra.mxu0 0.0
    %602 = vmatprep.subr.mxu0 0.0
    %603 = vmatpush1.msra.mxu0 0.0
    %604 = vmatprep.subr.mxu0 0.0
    %605 = vmatpush1.msra.mxu0 0.0
    %606 = vmatprep.subr.mxu0 0.0
    %607 = vmatpush1.msra.mxu0 0.0
    %608 = vmatprep.subr.mxu0 0.0
    %609 = vmatpush1.msra.mxu0 0.0
    %610 = vmatprep.subr.mxu0 0.0
    %611 = vmatpush1.msra.mxu0 0.0
    %612 = vmatprep.subr.mxu0 0.0
    %613 = vmatpush1.msra.mxu0 0.0
    %614 = vmatprep.subr.mxu0 0.0
    %615 = vmatpush1.msra.mxu0 0.0
    %616 = vmatprep.subr.mxu0 0.0
    %617 = vmatpush1.msra.mxu0 0.0
    %618 = vmatprep.subr.mxu0 0.0
    %619 = vmatpush1.msra.mxu0 0.0
    %620 = vmatprep.subr.mxu0 0.0
    %621 = vmatpush1.msra.mxu0 0.0
    %622 = vmatprep.subr.mxu0 0.0
    %623 = vmatpush1.msra.mxu0 0.0
    %624 = vmatprep.subr.mxu0 0.0
    %625 = vmatpush1.msra.mxu0 0.0
    %626 = vmatprep.subr.mxu0 0.0
    %627 = vmatpush1.msra.mxu0 0.0
    %628 = vmatprep.subr.mxu0 0.0
    %629 = vmatpush1.msra.mxu0 0.0
    %630 = vmatprep.mubr.f32.mxu0 0.0
    %631 = vmatmul.mubr.f32.gmra.mrb[0].mxu0 %v540
    %v632 = vpop.f32.mrb[0].mxu0
    %v633 = vadd.f32 %v538, %v632
    %v634 = vpop.f32.mrb[0].mxu0
    %635 = vmatprep.mubr.f32.mxu0 0.0
    %636 = vmatmul.mubr.f32.gmra.mrb[0].mxu0 %v543
    %v637 = vpop.f32.mrb[0].mxu0
    %v638 = vadd.f32 %v538, %v637
    %v639 = vpop.f32.mrb[0].mxu0
    %640 = vmatprep.mubr.f32.mxu0 0.0
    %641 = vmatmul.mubr.f32.gmra.mrb[0].mxu0 %v546
    %v642 = vpop.f32.mrb[0].mxu0
    %v643 = vadd.f32 %v538, %v642
    %v644 = vpop.f32.mrb[0].mxu0
    %645 = vmatprep.mubr.f32.mxu0 0.0
    %646 = vmatmul.mubr.f32.gmra.mrb[0].mxu0 %v549
    %v647 = vpop.f32.mrb[0].mxu0
    %v648 = vadd.f32 %v538, %v647
    %v649 = vpop.f32.mrb[0].mxu0
    %650 = vmatprep.mubr.f32.mxu0 0.0
    %651 = vmatmul.mubr.f32.gmra.mrb[0].mxu0 %v552
    %v652 = vpop.f32.mrb[0].mxu0
    %v653 = vadd.f32 %v538, %v652
    %v654 = vpop.f32.mrb[0].mxu0
    %655 = vmatprep.mubr.f32.mxu0 0.0
    %656 = vmatmul.mubr.f32.gmra.mrb[0].mxu0 %v555
    %v657 = vpop.f32.mrb[0].mxu0
    %v658 = vadd.f32 %v538, %v657
    %v659 = vpop.f32.mrb[0].mxu0
    %660 = vmatprep.mubr.f32.mxu0 0.0
    %661 = vmatmul.mubr.f32.gmra.mrb[0].mxu0 %v558
    %v662 = vpop.f32.mrb[0].mxu0
    %v663 = vadd.f32 %v538, %v662
    %v664 = vpop.f32.mrb[0].mxu0
    %665 = vmatprep.mubr.f32.mxu0 0.0
    %666 = vmatmul.mubr.f32.gmra.mrb[0].mxu0 %v561
    %v667 = vpop.f32.mrb[0].mxu0
    %v668 = vadd.f32 %v538, %v667
    %v669 = vpop.f32.mrb[0].mxu0
    %670 = vdwg.mxu0
    %v671 = vld [vmem:[%s2] sm:$0xff]
    %v672 = vld [vmem:[%s2 + $0x8] sm:$0xff]
    %v673 = vld [vmem:[%s2 + $0x10] sm:$0xff]
    %v674 = vld [vmem:[%s2 + $0x18] sm:$0xff]
    %v675 = vld [vmem:[%s2 + $0x20] sm:$0xff]
    %v676 = vld [vmem:[%s2 + $0x28] sm:$0xff]
    %v677 = vld [vmem:[%s2 + $0x30] sm:$0xff]
    %v678 = vld [vmem:[%s2 + $0x38] sm:$0xff]
    %s679 = scalar_lea.vmem %s3, 16
    %v680 = vld [vmem:[%s679] sm:$0x7f]
    %s681 = scalar_lea.vmem %s4, 32
    %v682 = vld [vmem:[%s681] sm:$0xff]
    %v683 = vld [vmem:[%s681 + $0x8] sm:$0xf]
    %s684 = scalar_lea.vmem %s5, 4
    %v685 = vld [vmem:[%s684] sm:$0x3]
    %v686 = vlaneseq
    %v687 = vshrl.u32 %v686, 7
    %v688 = vsub.s32 0, %v687
    %v689 = vrot.slane %v685, %v688
    %vm690 = vcmask 56320
    %v692 = vsel %vm690, %v671, 0
    %v695 = vsel %vm690, %v672, 0
    %v698 = vsel %vm690, %v673, 0
    %v701 = vsel %vm690, %v674, 0
    %v704 = vsel %vm690, %v675, 0
    %v707 = vsel %vm690, %v676, 0
    %v710 = vsel %vm690, %v677, 0
    %v713 = vsel %vm690, %v678, 0
    %vm715 = vcmask 1046528
    %v717 = vsel %vm715, %v680, 0
    %719 = vmatprep.subr.mxu0 0.0
    %720 = vmatpush1.msra.mxu0 %v717
    %721 = vmatprep.subr.mxu0 0.0
    %722 = vmatpush1.msra.mxu0 0.0
    %723 = vmatprep.subr.mxu0 0.0
    %724 = vmatpush1.msra.mxu0 0.0
    %725 = vmatprep.subr.mxu0 0.0
    %726 = vmatpush1.msra.mxu0 0.0
    %727 = vmatprep.subr.mxu0 0.0
    %728 = vmatpush1.msra.mxu0 0.0
    %729 = vmatprep.subr.mxu0 0.0
    %730 = vmatpush1.msra.mxu0 0.0
    %731 = vmatprep.subr.mxu0 0.0
    %732 = vmatpush1.msra.mxu0 0.0
    %733 = vmatprep.subr.mxu0 0.0
    %734 = vmatpush1.msra.mxu0 0.0
    %735 = vmatprep.subr.mxu0 0.0
    %736 = vmatpush1.msra.mxu0 0.0
    %737 = vmatprep.subr.mxu0 0.0
    %738 = vmatpush1.msra.mxu0 0.0
    %739 = vmatprep.subr.mxu0 0.0
    %740 = vmatpush1.msra.mxu0 0.0
    %741 = vmatprep.subr.mxu0 0.0
    %742 = vmatpush1.msra.mxu0 0.0
    %743 = vmatprep.subr.mxu0 0.0
    %744 = vmatpush1.msra.mxu0 0.0
    %745 = vmatprep.subr.mxu0 0.0
    %746 = vmatpush1.msra.mxu0 0.0
    %747 = vmatprep.subr.mxu0 0.0
    %748 = vmatpush1.msra.mxu0 0.0
    %749 = vmatprep.subr.mxu0 0.0
    %750 = vmatpush1.msra.mxu0 0.0
    %751 = vmatprep.subr.mxu0 0.0
    %752 = vmatpush1.msra.mxu0 0.0
    %753 = vmatprep.subr.mxu0 0.0
    %754 = vmatpush1.msra.mxu0 0.0
    %755 = vmatprep.subr.mxu0 0.0
    %756 = vmatpush1.msra.mxu0 0.0
    %757 = vmatprep.subr.mxu0 0.0
    %758 = vmatpush1.msra.mxu0 0.0
    %759 = vmatprep.subr.mxu0 0.0
    %760 = vmatpush1.msra.mxu0 0.0
    %761 = vmatprep.subr.mxu0 0.0
    %762 = vmatpush1.msra.mxu0 0.0
    %763 = vmatprep.subr.mxu0 0.0
    %764 = vmatpush1.msra.mxu0 0.0
    %765 = vmatprep.subr.mxu0 0.0
    %766 = vmatpush1.msra.mxu0 0.0
    %767 = vmatprep.subr.mxu0 0.0
    %768 = vmatpush1.msra.mxu0 0.0
    %769 = vmatprep.subr.mxu0 0.0
    %770 = vmatpush1.msra.mxu0 0.0
    %771 = vmatprep.subr.mxu0 0.0
    %772 = vmatpush1.msra.mxu0 0.0
    %773 = vmatprep.subr.mxu0 0.0
    %774 = vmatpush1.msra.mxu0 0.0
    %775 = vmatprep.subr.mxu0 0.0
    %776 = vmatpush1.msra.mxu0 0.0
    %777 = vmatprep.subr.mxu0 0.0
    %778 = vmatpush1.msra.mxu0 0.0
    %779 = vmatprep.subr.mxu0 0.0
    %780 = vmatpush1.msra.mxu0 0.0
    %781 = vmatprep.subr.mxu0 0.0
    %782 = vmatpush1.msra.mxu0 0.0
    %783 = vmatprep.mubr.f32.mxu0 0.0
    %784 = vmatmul.mubr.f32.gmra.mrb[0].mxu0 %v692
    %v785 = vpop.f32.mrb[0].mxu0
    %v786 = vadd.f32 %v689, %v785
    %v787 = vpop.f32.mrb[0].mxu0
    %788 = vmatprep.mubr.f32.mxu0 0.0
    %789 = vmatmul.mubr.f32.gmra.mrb[0].mxu0 %v695
    %v790 = vpop.f32.mrb[0].mxu0
    %v791 = vadd.f32 %v689, %v790
    %v792 = vpop.f32.mrb[0].mxu0
    %793 = vmatprep.mubr.f32.mxu0 0.0
    %794 = vmatmul.mubr.f32.gmra.mrb[0].mxu0 %v698
    %v795 = vpop.f32.mrb[0].mxu0
    %v796 = vadd.f32 %v689, %v795
    %v797 = vpop.f32.mrb[0].mxu0
    %798 = vmatprep.mubr.f32.mxu0 0.0
    %799 = vmatmul.mubr.f32.gmra.mrb[0].mxu0 %v701
    %v800 = vpop.f32.mrb[0].mxu0
    %v801 = vadd.f32 %v689, %v800
    %v802 = vpop.f32.mrb[0].mxu0
    %803 = vmatprep.mubr.f32.mxu0 0.0
    %804 = vmatmul.mubr.f32.gmra.mrb[0].mxu0 %v704
    %v805 = vpop.f32.mrb[0].mxu0
    %v806 = vadd.f32 %v689, %v805
    %v807 = vpop.f32.mrb[0].mxu0
    %808 = vmatprep.mubr.f32.mxu0 0.0
    %809 = vmatmul.mubr.f32.gmra.mrb[0].mxu0 %v707
    %v810 = vpop.f32.mrb[0].mxu0
    %v811 = vadd.f32 %v689, %v810
    %v812 = vpop.f32.mrb[0].mxu0
    %813 = vmatprep.mubr.f32.mxu0 0.0
    %814 = vmatmul.mubr.f32.gmra.mrb[0].mxu0 %v710
    %v815 = vpop.f32.mrb[0].mxu0
    %v816 = vadd.f32 %v689, %v815
    %v817 = vpop.f32.mrb[0].mxu0
    %818 = vmatprep.mubr.f32.mxu0 0.0
    %819 = vmatmul.mubr.f32.gmra.mrb[0].mxu0 %v713
    %v820 = vpop.f32.mrb[0].mxu0
    %v821 = vadd.f32 %v689, %v820
    %v822 = vpop.f32.mrb[0].mxu0
    %823 = vdwg.mxu0
    %vm824 = vcmp.ge.f32.partialorder %v786, 0.0
    %vm825 = vcmp.ge.f32.partialorder %v791, 0.0
    %vm826 = vcmp.ge.f32.partialorder %v796, 0.0
    %vm827 = vcmp.ge.f32.partialorder %v801, 0.0
    %vm828 = vcmp.ge.f32.partialorder %v806, 0.0
    %vm829 = vcmp.ge.f32.partialorder %v811, 0.0
    %vm830 = vcmp.ge.f32.partialorder %v816, 0.0
    %vm831 = vcmp.ge.f32.partialorder %v821, 0.0
    %v832 = vmul.f32 %v786, 0.2
    %v833 = vmul.f32 %v791, 0.2
    %v834 = vmul.f32 %v796, 0.2
    %v835 = vmul.f32 %v801, 0.2
    %v836 = vmul.f32 %v806, 0.2
    %v837 = vmul.f32 %v811, 0.2
    %v838 = vmul.f32 %v816, 0.2
    %v839 = vmul.f32 %v821, 0.2
    %v840 = vsel %vm824, %v786, %v832
    %v841 = vsel %vm825, %v791, %v833
    %v842 = vsel %vm826, %v796, %v834
    %v843 = vsel %vm827, %v801, %v835
    %v844 = vsel %vm828, %v806, %v836
    %v845 = vsel %vm829, %v811, %v837
    %v846 = vsel %vm830, %v816, %v838
    %v847 = vsel %vm831, %v821, %v839
    %v848 = vlaneseq
    %v849 = vshrl.u32 %v848, 7
    %v850 = vsub.s32 1, %v849
    %v851 = vrot.slane %v685, %v850
    %v853 = vsel %vm224, %v840, 0
    %v856 = vsel %vm224, %v841, 0
    %v859 = vsel %vm224, %v842, 0
    %v862 = vsel %vm224, %v843, 0
    %v865 = vsel %vm224, %v844, 0
    %v868 = vsel %vm224, %v845, 0
    %v871 = vsel %vm224, %v846, 0
    %v874 = vsel %vm224, %v847, 0
    %v877 = vsel %vm249, %v683, 0
    %879 = vmatprep.subr.mxu0 0.0
    %880 = vmatpush1.msra.mxu0 %v682
    %881 = vmatprep.subr.mxu0 0.0
    %882 = vmatpush1.msra.mxu0 %v877
    %883 = vmatprep.subr.mxu0 0.0
    %884 = vmatpush1.msra.mxu0 0.0
    %885 = vmatprep.subr.mxu0 0.0
    %886 = vmatpush1.msra.mxu0 0.0
    %887 = vmatprep.subr.mxu0 0.0
    %888 = vmatpush1.msra.mxu0 0.0
    %889 = vmatprep.subr.mxu0 0.0
    %890 = vmatpush1.msra.mxu0 0.0
    %891 = vmatprep.subr.mxu0 0.0
    %892 = vmatpush1.msra.mxu0 0.0
    %893 = vmatprep.subr.mxu0 0.0
    %894 = vmatpush1.msra.mxu0 0.0
    %895 = vmatprep.subr.mxu0 0.0
    %896 = vmatpush1.msra.mxu0 0.0
    %897 = vmatprep.subr.mxu0 0.0
    %898 = vmatpush1.msra.mxu0 0.0
    %899 = vmatprep.subr.mxu0 0.0
    %900 = vmatpush1.msra.mxu0 0.0
    %901 = vmatprep.subr.mxu0 0.0
    %902 = vmatpush1.msra.mxu0 0.0
    %903 = vmatprep.subr.mxu0 0.0
    %904 = vmatpush1.msra.mxu0 0.0
    %905 = vmatprep.subr.mxu0 0.0
    %906 = vmatpush1.msra.mxu0 0.0
    %907 = vmatprep.subr.mxu0 0.0
    %908 = vmatpush1.msra.mxu0 0.0
    %909 = vmatprep.subr.mxu0 0.0
    %910 = vmatpush1.msra.mxu0 0.0
    %911 = vmatprep.subr.mxu0 0.0
    %912 = vmatpush1.msra.mxu0 0.0
    %913 = vmatprep.subr.mxu0 0.0
    %914 = vmatpush1.msra.mxu0 0.0
    %915 = vmatprep.subr.mxu0 0.0
    %916 = vmatpush1.msra.mxu0 0.0
    %917 = vmatprep.subr.mxu0 0.0
    %918 = vmatpush1.msra.mxu0 0.0
    %919 = vmatprep.subr.mxu0 0.0
    %920 = vmatpush1.msra.mxu0 0.0
    %921 = vmatprep.subr.mxu0 0.0
    %922 = vmatpush1.msra.mxu0 0.0
    %923 = vmatprep.subr.mxu0 0.0
    %924 = vmatpush1.msra.mxu0 0.0
    %925 = vmatprep.subr.mxu0 0.0
    %926 = vmatpush1.msra.mxu0 0.0
    %927 = vmatprep.subr.mxu0 0.0
    %928 = vmatpush1.msra.mxu0 0.0
    %929 = vmatprep.subr.mxu0 0.0
    %930 = vmatpush1.msra.mxu0 0.0
    %931 = vmatprep.subr.mxu0 0.0
    %932 = vmatpush1.msra.mxu0 0.0
    %933 = vmatprep.subr.mxu0 0.0
    %934 = vmatpush1.msra.mxu0 0.0
    %935 = vmatprep.subr.mxu0 0.0
    %936 = vmatpush1.msra.mxu0 0.0
    %937 = vmatprep.subr.mxu0 0.0
    %938 = vmatpush1.msra.mxu0 0.0
    %939 = vmatprep.subr.mxu0 0.0
    %940 = vmatpush1.msra.mxu0 0.0
    %941 = vmatprep.subr.mxu0 0.0
    %942 = vmatpush1.msra.mxu0 0.0
    %943 = vmatprep.mubr.f32.mxu0 0.0
    %944 = vmatmul.mubr.f32.gmra.mrb[0].mxu0 %v853
    %v945 = vpop.f32.mrb[0].mxu0
    %v946 = vadd.f32 %v851, %v945
    %v947 = vpop.f32.mrb[0].mxu0
    %948 = vmatprep.mubr.f32.mxu0 0.0
    %949 = vmatmul.mubr.f32.gmra.mrb[0].mxu0 %v856
    %v950 = vpop.f32.mrb[0].mxu0
    %v951 = vadd.f32 %v851, %v950
    %v952 = vpop.f32.mrb[0].mxu0
    %953 = vmatprep.mubr.f32.mxu0 0.0
    %954 = vmatmul.mubr.f32.gmra.mrb[0].mxu0 %v859
    %v955 = vpop.f32.mrb[0].mxu0
    %v956 = vadd.f32 %v851, %v955
    %v957 = vpop.f32.mrb[0].mxu0
    %958 = vmatprep.mubr.f32.mxu0 0.0
    %959 = vmatmul.mubr.f32.gmra.mrb[0].mxu0 %v862
    %v960 = vpop.f32.mrb[0].mxu0
    %v961 = vadd.f32 %v851, %v960
    %v962 = vpop.f32.mrb[0].mxu0
    %963 = vmatprep.mubr.f32.mxu0 0.0
    %964 = vmatmul.mubr.f32.gmra.mrb[0].mxu0 %v865
    %v965 = vpop.f32.mrb[0].mxu0
    %v966 = vadd.f32 %v851, %v965
    %v967 = vpop.f32.mrb[0].mxu0
    %968 = vmatprep.mubr.f32.mxu0 0.0
    %969 = vmatmul.mubr.f32.gmra.mrb[0].mxu0 %v868
    %v970 = vpop.f32.mrb[0].mxu0
    %v971 = vadd.f32 %v851, %v970
    %v972 = vpop.f32.mrb[0].mxu0
    %973 = vmatprep.mubr.f32.mxu0 0.0
    %974 = vmatmul.mubr.f32.gmra.mrb[0].mxu0 %v871
    %v975 = vpop.f32.mrb[0].mxu0
    %v976 = vadd.f32 %v851, %v975
    %v977 = vpop.f32.mrb[0].mxu0
    %978 = vmatprep.mubr.f32.mxu0 0.0
    %979 = vmatmul.mubr.f32.gmra.mrb[0].mxu0 %v874
    %v980 = vpop.f32.mrb[0].mxu0
    %v981 = vadd.f32 %v851, %v980
    %v982 = vpop.f32.mrb[0].mxu0
    %983 = vdwg.mxu0
    %992 = vrot.lane.b32.xlu0 %v633, 16
    %v993 = vpop.permute.xlu0 %992
    %994 = vrot.lane.b32.xlu0 %v638, 16
    %v995 = vpop.permute.xlu0 %994
    %996 = vrot.lane.b32.xlu0 %v643, 16
    %v997 = vpop.permute.xlu0 %996
    %998 = vrot.lane.b32.xlu0 %v648, 16
    %v999 = vpop.permute.xlu0 %998
    %1000 = vrot.lane.b32.xlu0 %v653, 16
    %v1001 = vpop.permute.xlu0 %1000
    %1002 = vrot.lane.b32.xlu0 %v658, 16
    %v1003 = vpop.permute.xlu0 %1002
    %1004 = vrot.lane.b32.xlu0 %v663, 16
    %v1005 = vpop.permute.xlu0 %1004
    %1006 = vrot.lane.b32.xlu0 %v668, 16
    %v1007 = vpop.permute.xlu0 %1006
    %1024 = vrot.lane.b32.xlu0 %v946, 32
    %v1025 = vpop.permute.xlu0 %1024
    %1026 = vrot.lane.b32.xlu0 %v951, 32
    %v1027 = vpop.permute.xlu0 %1026
    %1028 = vrot.lane.b32.xlu0 %v956, 32
    %v1029 = vpop.permute.xlu0 %1028
    %1030 = vrot.lane.b32.xlu0 %v961, 32
    %v1031 = vpop.permute.xlu0 %1030
    %1032 = vrot.lane.b32.xlu0 %v966, 32
    %v1033 = vpop.permute.xlu0 %1032
    %1034 = vrot.lane.b32.xlu0 %v971, 32
    %v1035 = vpop.permute.xlu0 %1034
    %1036 = vrot.lane.b32.xlu0 %v976, 32
    %v1037 = vpop.permute.xlu0 %1036
    %1038 = vrot.lane.b32.xlu0 %v981, 32
    %v1039 = vpop.permute.xlu0 %1038
    %vm1048 = vcmask 130048
    %v1049 = vsel %vm1048, %v320, %v993
    %v1050 = vsel %vm1048, %v325, %v995
    %v1051 = vsel %vm1048, %v330, %v997
    %v1052 = vsel %vm1048, %v335, %v999
    %v1053 = vsel %vm1048, %v340, %v1001
    %v1054 = vsel %vm1048, %v345, %v1003
    %v1055 = vsel %vm1048, %v350, %v1005
    %v1056 = vsel %vm1048, %v355, %v1007
    %vm1057 = vcmask 261120
    %v1058 = vsel %vm1057, %v1049, %v1025
    %v1059 = vsel %vm1057, %v1050, %v1027
    %v1060 = vsel %vm1057, %v1051, %v1029
    %v1061 = vsel %vm1057, %v1052, %v1031
    %v1062 = vsel %vm1057, %v1053, %v1033
    %v1063 = vsel %vm1057, %v1054, %v1035
    %v1064 = vsel %vm1057, %v1055, %v1037
    %v1065 = vsel %vm1057, %v1056, %v1039
    %v1066 = vld [vmem:[%s6] sm:$0xff]
    %v1067 = vld [vmem:[%s6 + $0x8] sm:$0xff]
    %v1068 = vld [vmem:[%s6 + $0x10] sm:$0xff]
    %v1069 = vld [vmem:[%s6 + $0x18] sm:$0xff]
    %v1070 = vld [vmem:[%s6 + $0x20] sm:$0xff]
    %v1071 = vld [vmem:[%s6 + $0x28] sm:$0xff]
    %v1072 = vld [vmem:[%s6 + $0x30] sm:$0xff]
    %v1073 = vld [vmem:[%s6 + $0x38] sm:$0xff]
    %v1074 = vld [vmem:[%s6 + $0x40] sm:$0xff]
    %v1075 = vld [vmem:[%s6 + $0x48] sm:$0xff]
    %v1076 = vld [vmem:[%s6 + $0x50] sm:$0xff]
    %v1077 = vld [vmem:[%s6 + $0x58] sm:$0xff]
    %v1078 = vld [vmem:[%s7] sm:$0x3]
    %v1080 = vlaneseq
    %v1081 = vshrl.u32 %v1080, 7
    %v1082 = vsub.s32 0, %v1081
    %v1083 = vrot.slane %v1078, %v1082
    %v1084 = vlaneseq
    %v1085 = vshrl.u32 %v1084, 7
    %v1086 = vsub.s32 1, %v1085
    %v1087 = vrot.slane %v1078, %v1086
    %vm1090 = vcmask 392192
    %v1092 = vsel %vm1090, %v1058, 0
    %v1095 = vsel %vm1090, %v1059, 0
    %v1098 = vsel %vm1090, %v1060, 0
    %v1101 = vsel %vm1090, %v1061, 0
    %v1104 = vsel %vm1090, %v1062, 0
    %v1107 = vsel %vm1090, %v1063, 0
    %v1110 = vsel %vm1090, %v1064, 0
    %v1113 = vsel %vm1090, %v1065, 0
    %1115 = vmatprep.subr.mxu0 %v1067
    %1116 = vmatpush1.msra.mxu0 %v1066
    %1117 = vmatprep.subr.mxu0 %v1069
    %1118 = vmatpush1.msra.mxu0 %v1068
    %1119 = vmatprep.subr.mxu0 %v1071
    %1120 = vmatpush1.msra.mxu0 %v1070
    %1121 = vmatprep.subr.mxu0 %v1073
    %1122 = vmatpush1.msra.mxu0 %v1072
    %1123 = vmatprep.subr.mxu0 %v1075
    %1124 = vmatpush1.msra.mxu0 %v1074
    %1125 = vmatprep.subr.mxu0 %v1077
    %1126 = vmatpush1.msra.mxu0 %v1076
    %1127 = vmatprep.subr.mxu0 0.0
    %1128 = vmatpush1.msra.mxu0 0.0
    %1129 = vmatprep.subr.mxu0 0.0
    %1130 = vmatpush1.msra.mxu0 0.0
    %1131 = vmatprep.subr.mxu0 0.0
    %1132 = vmatpush1.msra.mxu0 0.0
    %1133 = vmatprep.subr.mxu0 0.0
    %1134 = vmatpush1.msra.mxu0 0.0
    %1135 = vmatprep.subr.mxu0 0.0
    %1136 = vmatpush1.msra.mxu0 0.0
    %1137 = vmatprep.subr.mxu0 0.0
    %1138 = vmatpush1.msra.mxu0 0.0
    %1139 = vmatprep.subr.mxu0 0.0
    %1140 = vmatpush1.msra.mxu0 0.0
    %1141 = vmatprep.subr.mxu0 0.0
    %1142 = vmatpush1.msra.mxu0 0.0
    %1143 = vmatprep.subr.mxu0 0.0
    %1144 = vmatpush1.msra.mxu0 0.0
    %1145 = vmatprep.subr.mxu0 0.0
    %1146 = vmatpush1.msra.mxu0 0.0
    %1147 = vmatprep.subr.mxu0 0.0
    %1148 = vmatpush1.msra.mxu0 0.0
    %1149 = vmatprep.subr.mxu0 0.0
    %1150 = vmatpush1.msra.mxu0 0.0
    %1151 = vmatprep.subr.mxu0 0.0
    %1152 = vmatpush1.msra.mxu0 0.0
    %1153 = vmatprep.subr.mxu0 0.0
    %1154 = vmatpush1.msra.mxu0 0.0
    %1155 = vmatprep.subr.mxu0 0.0
    %1156 = vmatpush1.msra.mxu0 0.0
    %1157 = vmatprep.subr.mxu0 0.0
    %1158 = vmatpush1.msra.mxu0 0.0
    %1159 = vmatprep.subr.mxu0 0.0
    %1160 = vmatpush1.msra.mxu0 0.0
    %1161 = vmatprep.subr.mxu0 0.0
    %1162 = vmatpush1.msra.mxu0 0.0
    %1163 = vmatprep.subr.mxu0 0.0
    %1164 = vmatpush1.msra.mxu0 0.0
    %1165 = vmatprep.subr.mxu0 0.0
    %1166 = vmatpush1.msra.mxu0 0.0
    %1167 = vmatprep.subr.mxu0 0.0
    %1168 = vmatpush1.msra.mxu0 0.0
    %1169 = vmatprep.subr.mxu0 0.0
    %1170 = vmatpush1.msra.mxu0 0.0
    %1171 = vmatprep.subr.mxu0 0.0
    %1172 = vmatpush1.msra.mxu0 0.0
    %1173 = vmatprep.subr.mxu0 0.0
    %1174 = vmatpush1.msra.mxu0 0.0
    %1175 = vmatprep.subr.mxu0 0.0
    %1176 = vmatpush1.msra.mxu0 0.0
    %1177 = vmatprep.subr.mxu0 0.0
    %1178 = vmatpush1.msra.mxu0 0.0
    %1179 = vmatprep.mubr.f32.mxu0 0.0
    %1180 = vmatmul.mubr.f32.gmra.mrb[0].mxu0 %v1092
    %v1181 = vpop.f32.mrb[0].mxu0
    %v1182 = vadd.f32 %v1083, %v1181
    %v1183 = vpop.f32.mrb[0].mxu0
    %v1184 = vadd.f32 %v1087, %v1183
    %1185 = vmatprep.mubr.f32.mxu0 0.0
    %1186 = vmatmul.mubr.f32.gmra.mrb[0].mxu0 %v1095
    %v1187 = vpop.f32.mrb[0].mxu0
    %v1188 = vadd.f32 %v1083, %v1187
    %v1189 = vpop.f32.mrb[0].mxu0
    %v1190 = vadd.f32 %v1087, %v1189
    %1191 = vmatprep.mubr.f32.mxu0 0.0
    %1192 = vmatmul.mubr.f32.gmra.mrb[0].mxu0 %v1098
    %v1193 = vpop.f32.mrb[0].mxu0
    %v1194 = vadd.f32 %v1083, %v1193
    %v1195 = vpop.f32.mrb[0].mxu0
    %v1196 = vadd.f32 %v1087, %v1195
    %1197 = vmatprep.mubr.f32.mxu0 0.0
    %1198 = vmatmul.mubr.f32.gmra.mrb[0].mxu0 %v1101
    %v1199 = vpop.f32.mrb[0].mxu0
    %v1200 = vadd.f32 %v1083, %v1199
    %v1201 = vpop.f32.mrb[0].mxu0
    %v1202 = vadd.f32 %v1087, %v1201
    %1203 = vmatprep.mubr.f32.mxu0 0.0
    %1204 = vmatmul.mubr.f32.gmra.mrb[0].mxu0 %v1104
    %v1205 = vpop.f32.mrb[0].mxu0
    %v1206 = vadd.f32 %v1083, %v1205
    %v1207 = vpop.f32.mrb[0].mxu0
    %v1208 = vadd.f32 %v1087, %v1207
    %1209 = vmatprep.mubr.f32.mxu0 0.0
    %1210 = vmatmul.mubr.f32.gmra.mrb[0].mxu0 %v1107
    %v1211 = vpop.f32.mrb[0].mxu0
    %v1212 = vadd.f32 %v1083, %v1211
    %v1213 = vpop.f32.mrb[0].mxu0
    %v1214 = vadd.f32 %v1087, %v1213
    %1215 = vmatprep.mubr.f32.mxu0 0.0
    %1216 = vmatmul.mubr.f32.gmra.mrb[0].mxu0 %v1110
    %v1217 = vpop.f32.mrb[0].mxu0
    %v1218 = vadd.f32 %v1083, %v1217
    %v1219 = vpop.f32.mrb[0].mxu0
    %v1220 = vadd.f32 %v1087, %v1219
    %1221 = vmatprep.mubr.f32.mxu0 0.0
    %1222 = vmatmul.mubr.f32.gmra.mrb[0].mxu0 %v1113
    %v1223 = vpop.f32.mrb[0].mxu0
    %v1224 = vadd.f32 %v1083, %v1223
    %v1225 = vpop.f32.mrb[0].mxu0
    %v1226 = vadd.f32 %v1087, %v1225
    %1227 = vdwg.mxu0
    %s1228 = scalar_lea.vmem %s6, 96
    %v1229 = vld [vmem:[%s1228] sm:$0xff]
    %v1230 = vld [vmem:[%s1228 + $0x8] sm:$0xff]
    %v1231 = vld [vmem:[%s1228 + $0x10] sm:$0xff]
    %v1232 = vld [vmem:[%s1228 + $0x18] sm:$0xff]
    %v1233 = vld [vmem:[%s1228 + $0x20] sm:$0xff]
    %v1234 = vld [vmem:[%s1228 + $0x28] sm:$0xff]
    %v1235 = vld [vmem:[%s1228 + $0x30] sm:$0xff]
    %v1236 = vld [vmem:[%s1228 + $0x38] sm:$0xff]
    %v1237 = vld [vmem:[%s1228 + $0x40] sm:$0xff]
    %v1238 = vld [vmem:[%s1228 + $0x48] sm:$0xff]
    %v1239 = vld [vmem:[%s1228 + $0x50] sm:$0xff]
    %v1240 = vld [vmem:[%s1228 + $0x58] sm:$0xff]
    %s1241 = scalar_lea.vmem %s7, 2
    %v1242 = vld [vmem:[%s1241] sm:$0x3]
    %v1244 = vlaneseq
    %v1245 = vshrl.u32 %v1244, 7
    %v1246 = vsub.s32 0, %v1245
    %v1247 = vrot.slane %v1242, %v1246
    %v1248 = vlaneseq
    %v1249 = vshrl.u32 %v1248, 7
    %v1250 = vsub.s32 1, %v1249
    %v1251 = vrot.slane %v1242, %v1250
    %v1255 = vsel %vm1090, 0.0, 0
    %1257 = vmatprep.subr.mxu0 %v1230
    %1258 = vmatpush1.msra.mxu0 %v1229
    %1259 = vmatprep.subr.mxu0 %v1232
    %1260 = vmatpush1.msra.mxu0 %v1231
    %1261 = vmatprep.subr.mxu0 %v1234
    %1262 = vmatpush1.msra.mxu0 %v1233
    %1263 = vmatprep.subr.mxu0 %v1236
    %1264 = vmatpush1.msra.mxu0 %v1235
    %1265 = vmatprep.subr.mxu0 %v1238
    %1266 = vmatpush1.msra.mxu0 %v1237
    %1267 = vmatprep.subr.mxu0 %v1240
    %1268 = vmatpush1.msra.mxu0 %v1239
    %1269 = vmatprep.subr.mxu0 0.0
    %1270 = vmatpush1.msra.mxu0 0.0
    %1271 = vmatprep.subr.mxu0 0.0
    %1272 = vmatpush1.msra.mxu0 0.0
    %1273 = vmatprep.subr.mxu0 0.0
    %1274 = vmatpush1.msra.mxu0 0.0
    %1275 = vmatprep.subr.mxu0 0.0
    %1276 = vmatpush1.msra.mxu0 0.0
    %1277 = vmatprep.subr.mxu0 0.0
    %1278 = vmatpush1.msra.mxu0 0.0
    %1279 = vmatprep.subr.mxu0 0.0
    %1280 = vmatpush1.msra.mxu0 0.0
    %1281 = vmatprep.subr.mxu0 0.0
    %1282 = vmatpush1.msra.mxu0 0.0
    %1283 = vmatprep.subr.mxu0 0.0
    %1284 = vmatpush1.msra.mxu0 0.0
    %1285 = vmatprep.subr.mxu0 0.0
    %1286 = vmatpush1.msra.mxu0 0.0
    %1287 = vmatprep.subr.mxu0 0.0
    %1288 = vmatpush1.msra.mxu0 0.0
    %1289 = vmatprep.subr.mxu0 0.0
    %1290 = vmatpush1.msra.mxu0 0.0
    %1291 = vmatprep.subr.mxu0 0.0
    %1292 = vmatpush1.msra.mxu0 0.0
    %1293 = vmatprep.subr.mxu0 0.0
    %1294 = vmatpush1.msra.mxu0 0.0
    %1295 = vmatprep.subr.mxu0 0.0
    %1296 = vmatpush1.msra.mxu0 0.0
    %1297 = vmatprep.subr.mxu0 0.0
    %1298 = vmatpush1.msra.mxu0 0.0
    %1299 = vmatprep.subr.mxu0 0.0
    %1300 = vmatpush1.msra.mxu0 0.0
    %1301 = vmatprep.subr.mxu0 0.0
    %1302 = vmatpush1.msra.mxu0 0.0
    %1303 = vmatprep.subr.mxu0 0.0
    %1304 = vmatpush1.msra.mxu0 0.0
    %1305 = vmatprep.subr.mxu0 0.0
    %1306 = vmatpush1.msra.mxu0 0.0
    %1307 = vmatprep.subr.mxu0 0.0
    %1308 = vmatpush1.msra.mxu0 0.0
    %1309 = vmatprep.subr.mxu0 0.0
    %1310 = vmatpush1.msra.mxu0 0.0
    %1311 = vmatprep.subr.mxu0 0.0
    %1312 = vmatpush1.msra.mxu0 0.0
    %1313 = vmatprep.subr.mxu0 0.0
    %1314 = vmatpush1.msra.mxu0 0.0
    %1315 = vmatprep.subr.mxu0 0.0
    %1316 = vmatpush1.msra.mxu0 0.0
    %1317 = vmatprep.subr.mxu0 0.0
    %1318 = vmatpush1.msra.mxu0 0.0
    %1319 = vmatprep.subr.mxu0 0.0
    %1320 = vmatpush1.msra.mxu0 0.0
    %1321 = vmatprep.mubr.f32.mxu0 0.0
    %1322 = vmatmul.mubr.f32.gmra.mrb[0].mxu0 %v1255
    %v1323 = vpop.f32.mrb[0].mxu0
    %v1324 = vadd.f32 %v1247, %v1323
    %v1325 = vpop.f32.mrb[0].mxu0
    %v1326 = vadd.f32 %v1251, %v1325
    %1327 = vdwg.mxu0
    %v1329 = vrot.slane %v1324, 1
    %v1330 = vrot.slane %v1324, 2
    %v1331 = vrot.slane %v1324, 3
    %v1332 = vrot.slane %v1324, 4
    %v1333 = vrot.slane %v1324, 5
    %v1334 = vrot.slane %v1324, 6
    %v1335 = vrot.slane %v1324, 7
    %v1344 = vadd.f32 %v1182, %v1324
    %v1345 = vadd.f32 %v1188, %v1329
    %v1346 = vadd.f32 %v1194, %v1330
    %v1347 = vadd.f32 %v1200, %v1331
    %v1348 = vadd.f32 %v1206, %v1332
    %v1349 = vadd.f32 %v1212, %v1333
    %v1350 = vadd.f32 %v1218, %v1334
    %v1351 = vadd.f32 %v1224, %v1335
    %v1352 = vxor.u32 %v1344, 2147483648
    %v1353 = vxor.u32 %v1345, 2147483648
    %v1354 = vxor.u32 %v1346, 2147483648
    %v1355 = vxor.u32 %v1347, 2147483648
    %v1356 = vxor.u32 %v1348, 2147483648
    %v1357 = vxor.u32 %v1349, 2147483648
    %v1358 = vxor.u32 %v1350, 2147483648
    %v1359 = vxor.u32 %v1351, 2147483648
    %v1360 = vmul.f32 %v1352, 1.442695
    %v1361 = vpow.pop %v1360
    %v1362 = vmul.f32 %v1353, 1.442695
    %v1363 = vpow.pop %v1362
    %v1364 = vmul.f32 %v1354, 1.442695
    %v1365 = vpow.pop %v1364
    %v1366 = vmul.f32 %v1355, 1.442695
    %v1367 = vpow.pop %v1366
    %v1368 = vmul.f32 %v1356, 1.442695
    %v1369 = vpow.pop %v1368
    %v1370 = vmul.f32 %v1357, 1.442695
    %v1371 = vpow.pop %v1370
    %v1372 = vmul.f32 %v1358, 1.442695
    %v1373 = vpow.pop %v1372
    %v1374 = vmul.f32 %v1359, 1.442695
    %v1375 = vpow.pop %v1374
    %v1376 = vadd.f32 %v1361, 1.0
    %v1377 = vadd.f32 %v1363, 1.0
    %v1378 = vadd.f32 %v1365, 1.0
    %v1379 = vadd.f32 %v1367, 1.0
    %v1380 = vadd.f32 %v1369, 1.0
    %v1381 = vadd.f32 %v1371, 1.0
    %v1382 = vadd.f32 %v1373, 1.0
    %v1383 = vadd.f32 %v1375, 1.0
    %v1384 = vrcp.pop %v1376
    %v1385 = vmul.f32 1.0, %v1384
    %v1386 = vrcp.pop %v1377
    %v1387 = vmul.f32 1.0, %v1386
    %v1388 = vrcp.pop %v1378
    %v1389 = vmul.f32 1.0, %v1388
    %v1390 = vrcp.pop %v1379
    %v1391 = vmul.f32 1.0, %v1390
    %v1392 = vrcp.pop %v1380
    %v1393 = vmul.f32 1.0, %v1392
    %v1394 = vrcp.pop %v1381
    %v1395 = vmul.f32 1.0, %v1394
    %v1396 = vrcp.pop %v1382
    %v1397 = vmul.f32 1.0, %v1396
    %v1398 = vrcp.pop %v1383
    %v1399 = vmul.f32 1.0, %v1398
    %v1401 = vrot.slane %v1326, 1
    %v1402 = vrot.slane %v1326, 2
    %v1403 = vrot.slane %v1326, 3
    %v1404 = vrot.slane %v1326, 4
    %v1405 = vrot.slane %v1326, 5
    %v1406 = vrot.slane %v1326, 6
    %v1407 = vrot.slane %v1326, 7
    %1408 = vrot.lane.b32.xlu0 %v1324, 32
    %v1409 = vpop.permute.xlu0 %1408
    %1410 = vrot.lane.b32.xlu0 %v1326, 32
    %v1411 = vpop.permute.xlu0 %1410
    %1412 = vrot.lane.b32.xlu0 %v1329, 32
    %v1413 = vpop.permute.xlu0 %1412
    %1414 = vrot.lane.b32.xlu0 %v1401, 32
    %v1415 = vpop.permute.xlu0 %1414
    %1416 = vrot.lane.b32.xlu0 %v1330, 32
    %v1417 = vpop.permute.xlu0 %1416
    %1418 = vrot.lane.b32.xlu0 %v1402, 32
    %v1419 = vpop.permute.xlu0 %1418
    %1420 = vrot.lane.b32.xlu0 %v1331, 32
    %v1421 = vpop.permute.xlu0 %1420
    %1422 = vrot.lane.b32.xlu0 %v1403, 32
    %v1423 = vpop.permute.xlu0 %1422
    %1424 = vrot.lane.b32.xlu0 %v1332, 32
    %v1425 = vpop.permute.xlu0 %1424
    %1426 = vrot.lane.b32.xlu0 %v1404, 32
    %v1427 = vpop.permute.xlu0 %1426
    %1428 = vrot.lane.b32.xlu0 %v1333, 32
    %v1429 = vpop.permute.xlu0 %1428
    %1430 = vrot.lane.b32.xlu0 %v1405, 32
    %v1431 = vpop.permute.xlu0 %1430
    %1432 = vrot.lane.b32.xlu0 %v1334, 32
    %v1433 = vpop.permute.xlu0 %1432
    %1434 = vrot.lane.b32.xlu0 %v1406, 32
    %v1435 = vpop.permute.xlu0 %1434
    %1436 = vrot.lane.b32.xlu0 %v1335, 32
    %v1437 = vpop.permute.xlu0 %1436
    %1438 = vrot.lane.b32.xlu0 %v1407, 32
    %v1439 = vpop.permute.xlu0 %1438
    %v1440 = vsel %vm1057, %v1409, %v1411
    %v1441 = vsel %vm1057, %v1413, %v1415
    %v1442 = vsel %vm1057, %v1417, %v1419
    %v1443 = vsel %vm1057, %v1421, %v1423
    %v1444 = vsel %vm1057, %v1425, %v1427
    %v1445 = vsel %vm1057, %v1429, %v1431
    %v1446 = vsel %vm1057, %v1433, %v1435
    %v1447 = vsel %vm1057, %v1437, %v1439
    %v1456 = vmul.f32 %v1385, %v1440
    %v1457 = vmul.f32 %v1387, %v1441
    %v1458 = vmul.f32 %v1389, %v1442
    %v1459 = vmul.f32 %v1391, %v1443
    %v1460 = vmul.f32 %v1393, %v1444
    %v1461 = vmul.f32 %v1395, %v1445
    %v1462 = vmul.f32 %v1397, %v1446
    %v1463 = vmul.f32 %v1399, %v1447
    %1472 = vrot.lane.b32.xlu0 %v1456, 96
    %v1473 = vpop.permute.xlu0 %1472
    %1474 = vrot.lane.b32.xlu0 %v1457, 96
    %v1475 = vpop.permute.xlu0 %1474
    %1476 = vrot.lane.b32.xlu0 %v1458, 96
    %v1477 = vpop.permute.xlu0 %1476
    %1478 = vrot.lane.b32.xlu0 %v1459, 96
    %v1479 = vpop.permute.xlu0 %1478
    %1480 = vrot.lane.b32.xlu0 %v1460, 96
    %v1481 = vpop.permute.xlu0 %1480
    %1482 = vrot.lane.b32.xlu0 %v1461, 96
    %v1483 = vpop.permute.xlu0 %1482
    %1484 = vrot.lane.b32.xlu0 %v1462, 96
    %v1485 = vpop.permute.xlu0 %1484
    %1486 = vrot.lane.b32.xlu0 %v1463, 96
    %v1487 = vpop.permute.xlu0 %1486
    %v1496 = vadd.f32 %v1182, %v1473
    %v1497 = vadd.f32 %v1184, %v1473
    %v1498 = vadd.f32 %v1188, %v1475
    %v1499 = vadd.f32 %v1190, %v1475
    %v1500 = vadd.f32 %v1194, %v1477
    %v1501 = vadd.f32 %v1196, %v1477
    %v1502 = vadd.f32 %v1200, %v1479
    %v1503 = vadd.f32 %v1202, %v1479
    %v1504 = vadd.f32 %v1206, %v1481
    %v1505 = vadd.f32 %v1208, %v1481
    %v1506 = vadd.f32 %v1212, %v1483
    %v1507 = vadd.f32 %v1214, %v1483
    %v1508 = vadd.f32 %v1218, %v1485
    %v1509 = vadd.f32 %v1220, %v1485
    %v1510 = vadd.f32 %v1224, %v1487
    %v1511 = vadd.f32 %v1226, %v1487
    %v1512 = vtanh.pop %v1496
    %v1513 = vtanh.pop %v1497
    %v1514 = vtanh.pop %v1498
    %v1515 = vtanh.pop %v1499
    %v1516 = vtanh.pop %v1500
    %v1517 = vtanh.pop %v1501
    %v1518 = vtanh.pop %v1502
    %v1519 = vtanh.pop %v1503
    %v1520 = vtanh.pop %v1504
    %v1521 = vtanh.pop %v1505
    %v1522 = vtanh.pop %v1506
    %v1523 = vtanh.pop %v1507
    %v1524 = vtanh.pop %v1508
    %v1525 = vtanh.pop %v1509
    %v1526 = vtanh.pop %v1510
    %v1527 = vtanh.pop %v1511
    %v1528 = vsub.f32 1.0, %v1385
    %v1529 = vsub.f32 1.0, %v1387
    %v1530 = vsub.f32 1.0, %v1389
    %v1531 = vsub.f32 1.0, %v1391
    %v1532 = vsub.f32 1.0, %v1393
    %v1533 = vsub.f32 1.0, %v1395
    %v1534 = vsub.f32 1.0, %v1397
    %v1535 = vsub.f32 1.0, %v1399
    %1552 = vrot.lane.b32.xlu0 %v1512, 80
    %v1553 = vpop.permute.xlu0 %1552
    %1554 = vrot.lane.b32.xlu0 %v1513, 80
    %v1555 = vpop.permute.xlu0 %1554
    %1556 = vrot.lane.b32.xlu0 %v1514, 80
    %v1557 = vpop.permute.xlu0 %1556
    %1558 = vrot.lane.b32.xlu0 %v1515, 80
    %v1559 = vpop.permute.xlu0 %1558
    %1560 = vrot.lane.b32.xlu0 %v1516, 80
    %v1561 = vpop.permute.xlu0 %1560
    %1562 = vrot.lane.b32.xlu0 %v1517, 80
    %v1563 = vpop.permute.xlu0 %1562
    %1564 = vrot.lane.b32.xlu0 %v1518, 80
    %v1565 = vpop.permute.xlu0 %1564
    %1566 = vrot.lane.b32.xlu0 %v1519, 80
    %v1567 = vpop.permute.xlu0 %1566
    %1568 = vrot.lane.b32.xlu0 %v1520, 80
    %v1569 = vpop.permute.xlu0 %1568
    %1570 = vrot.lane.b32.xlu0 %v1521, 80
    %v1571 = vpop.permute.xlu0 %1570
    %1572 = vrot.lane.b32.xlu0 %v1522, 80
    %v1573 = vpop.permute.xlu0 %1572
    %1574 = vrot.lane.b32.xlu0 %v1523, 80
    %v1575 = vpop.permute.xlu0 %1574
    %1576 = vrot.lane.b32.xlu0 %v1524, 80
    %v1577 = vpop.permute.xlu0 %1576
    %1578 = vrot.lane.b32.xlu0 %v1525, 80
    %v1579 = vpop.permute.xlu0 %1578
    %1580 = vrot.lane.b32.xlu0 %v1526, 80
    %v1581 = vpop.permute.xlu0 %1580
    %1582 = vrot.lane.b32.xlu0 %v1527, 80
    %v1583 = vpop.permute.xlu0 %1582
    %vm1584 = vcmask 654336
    %v1585 = vsel %vm1584, %v1553, %v1555
    %v1586 = vsel %vm1584, %v1557, %v1559
    %v1587 = vsel %vm1584, %v1561, %v1563
    %v1588 = vsel %vm1584, %v1565, %v1567
    %v1589 = vsel %vm1584, %v1569, %v1571
    %v1590 = vsel %vm1584, %v1573, %v1575
    %v1591 = vsel %vm1584, %v1577, %v1579
    %v1592 = vsel %vm1584, %v1581, %v1583
    %v1601 = vmul.f32 %v1528, %v1585
    %v1602 = vmul.f32 %v1529, %v1586
    %v1603 = vmul.f32 %v1530, %v1587
    %v1604 = vmul.f32 %v1531, %v1588
    %v1605 = vmul.f32 %v1532, %v1589
    %v1606 = vmul.f32 %v1533, %v1590
    %v1607 = vmul.f32 %v1534, %v1591
    %v1608 = vmul.f32 %v1535, %v1592
    %v1609 = vmul.f32 %v1385, 0.0
    %v1610 = vmul.f32 %v1387, 0.0
    %v1611 = vmul.f32 %v1389, 0.0
    %v1612 = vmul.f32 %v1391, 0.0
    %v1613 = vmul.f32 %v1393, 0.0
    %v1614 = vmul.f32 %v1395, 0.0
    %v1615 = vmul.f32 %v1397, 0.0
    %v1616 = vmul.f32 %v1399, 0.0
    %v1617 = vadd.f32 %v1601, %v1609
    %v1618 = vadd.f32 %v1602, %v1610
    %v1619 = vadd.f32 %v1603, %v1611
    %v1620 = vadd.f32 %v1604, %v1612
    %v1621 = vadd.f32 %v1605, %v1613
    %v1622 = vadd.f32 %v1606, %v1614
    %v1623 = vadd.f32 %v1607, %v1615
    %v1624 = vadd.f32 %v1608, %v1616
    %v1633 = vrot.slane %v1618, 7
    %vm1634 = vcmask 1041409
    %v1635 = vsel %vm1634, %v1633, %v1617
    %v1636 = vrot.slane %v1619, 6
    %vm1637 = vcmask 1042434
    %v1638 = vsel %vm1637, %v1636, %v1635
    %v1639 = vrot.slane %v1620, 5
    %vm1640 = vcmask 1043459
    %v1641 = vsel %vm1640, %v1639, %v1638
    %v1642 = vrot.slane %v1621, 4
    %vm1643 = vcmask 1044484
    %v1644 = vsel %vm1643, %v1642, %v1641
    %v1645 = vrot.slane %v1622, 3
    %vm1646 = vcmask 1045509
    %v1647 = vsel %vm1646, %v1645, %v1644
    %v1648 = vrot.slane %v1623, 2
    %vm1649 = vcmask 1046534
    %v1650 = vsel %vm1649, %v1648, %v1647
    %v1651 = vrot.slane %v1624, 1
    %vm1652 = vcmask 1047559
    %v1653 = vsel %vm1652, %v1651, %v1650
    %1654 = vrot.lane.b32.xlu0 %v1653, 80
    %v1655 = vpop.permute.xlu0 %1654
    %v1656 = vsel %vm1090, %v1655, 0
    %1658 = vmatprep.subr.mxu0 %v1230
    %1659 = vmatpush1.msra.mxu0 %v1229
    %1660 = vmatprep.subr.mxu0 %v1232
    %1661 = vmatpush1.msra.mxu0 %v1231
    %1662 = vmatprep.subr.mxu0 %v1234
    %1663 = vmatpush1.msra.mxu0 %v1233
    %1664 = vmatprep.subr.mxu0 %v1236
    %1665 = vmatpush1.msra.mxu0 %v1235
    %1666 = vmatprep.subr.mxu0 %v1238
    %1667 = vmatpush1.msra.mxu0 %v1237
    %1668 = vmatprep.subr.mxu0 %v1240
    %1669 = vmatpush1.msra.mxu0 %v1239
    %1670 = vmatprep.subr.mxu0 0.0
    %1671 = vmatpush1.msra.mxu0 0.0
    %1672 = vmatprep.subr.mxu0 0.0
    %1673 = vmatpush1.msra.mxu0 0.0
    %1674 = vmatprep.subr.mxu0 0.0
    %1675 = vmatpush1.msra.mxu0 0.0
    %1676 = vmatprep.subr.mxu0 0.0
    %1677 = vmatpush1.msra.mxu0 0.0
    %1678 = vmatprep.subr.mxu0 0.0
    %1679 = vmatpush1.msra.mxu0 0.0
    %1680 = vmatprep.subr.mxu0 0.0
    %1681 = vmatpush1.msra.mxu0 0.0
    %1682 = vmatprep.subr.mxu0 0.0
    %1683 = vmatpush1.msra.mxu0 0.0
    %1684 = vmatprep.subr.mxu0 0.0
    %1685 = vmatpush1.msra.mxu0 0.0
    %1686 = vmatprep.subr.mxu0 0.0
    %1687 = vmatpush1.msra.mxu0 0.0
    %1688 = vmatprep.subr.mxu0 0.0
    %1689 = vmatpush1.msra.mxu0 0.0
    %1690 = vmatprep.subr.mxu0 0.0
    %1691 = vmatpush1.msra.mxu0 0.0
    %1692 = vmatprep.subr.mxu0 0.0
    %1693 = vmatpush1.msra.mxu0 0.0
    %1694 = vmatprep.subr.mxu0 0.0
    %1695 = vmatpush1.msra.mxu0 0.0
    %1696 = vmatprep.subr.mxu0 0.0
    %1697 = vmatpush1.msra.mxu0 0.0
    %1698 = vmatprep.subr.mxu0 0.0
    %1699 = vmatpush1.msra.mxu0 0.0
    %1700 = vmatprep.subr.mxu0 0.0
    %1701 = vmatpush1.msra.mxu0 0.0
    %1702 = vmatprep.subr.mxu0 0.0
    %1703 = vmatpush1.msra.mxu0 0.0
    %1704 = vmatprep.subr.mxu0 0.0
    %1705 = vmatpush1.msra.mxu0 0.0
    %1706 = vmatprep.subr.mxu0 0.0
    %1707 = vmatpush1.msra.mxu0 0.0
    %1708 = vmatprep.subr.mxu0 0.0
    %1709 = vmatpush1.msra.mxu0 0.0
    %1710 = vmatprep.subr.mxu0 0.0
    %1711 = vmatpush1.msra.mxu0 0.0
    %1712 = vmatprep.subr.mxu0 0.0
    %1713 = vmatpush1.msra.mxu0 0.0
    %1714 = vmatprep.subr.mxu0 0.0
    %1715 = vmatpush1.msra.mxu0 0.0
    %1716 = vmatprep.subr.mxu0 0.0
    %1717 = vmatpush1.msra.mxu0 0.0
    %1718 = vmatprep.subr.mxu0 0.0
    %1719 = vmatpush1.msra.mxu0 0.0
    %1720 = vmatprep.subr.mxu0 0.0
    %1721 = vmatpush1.msra.mxu0 0.0
    %1722 = vmatprep.mubr.f32.mxu0 0.0
    %1723 = vmatmul.mubr.f32.gmra.mrb[0].mxu0 %v1656
    %v1724 = vpop.f32.mrb[0].mxu0
    %v1725 = vadd.f32 %v1247, %v1724
    %v1726 = vpop.f32.mrb[0].mxu0
    %v1727 = vadd.f32 %v1251, %v1726
    %1728 = vdwg.mxu0
    %v1730 = vrot.slane %v1725, 7
    %v1731 = vrot.slane %v1725, 1
    %v1732 = vrot.slane %v1725, 2
    %v1733 = vrot.slane %v1725, 3
    %v1734 = vrot.slane %v1725, 4
    %v1735 = vrot.slane %v1725, 5
    %v1736 = vrot.slane %v1725, 6
    %v1745 = vadd.f32 %v1182, %v1730
    %v1746 = vadd.f32 %v1188, %v1725
    %v1747 = vadd.f32 %v1194, %v1731
    %v1748 = vadd.f32 %v1200, %v1732
    %v1749 = vadd.f32 %v1206, %v1733
    %v1750 = vadd.f32 %v1212, %v1734
    %v1751 = vadd.f32 %v1218, %v1735
    %v1752 = vadd.f32 %v1224, %v1736
    %v1753 = vxor.u32 %v1745, 2147483648
    %v1754 = vxor.u32 %v1746, 2147483648
    %v1755 = vxor.u32 %v1747, 2147483648
    %v1756 = vxor.u32 %v1748, 2147483648
    %v1757 = vxor.u32 %v1749, 2147483648
    %v1758 = vxor.u32 %v1750, 2147483648
    %v1759 = vxor.u32 %v1751, 2147483648
    %v1760 = vxor.u32 %v1752, 2147483648
    %v1761 = vmul.f32 %v1753, 1.442695
    %v1762 = vpow.pop %v1761
    %v1763 = vmul.f32 %v1754, 1.442695
    %v1764 = vpow.pop %v1763
    %v1765 = vmul.f32 %v1755, 1.442695
    %v1766 = vpow.pop %v1765
    %v1767 = vmul.f32 %v1756, 1.442695
    %v1768 = vpow.pop %v1767
    %v1769 = vmul.f32 %v1757, 1.442695
    %v1770 = vpow.pop %v1769
    %v1771 = vmul.f32 %v1758, 1.442695
    %v1772 = vpow.pop %v1771
    %v1773 = vmul.f32 %v1759, 1.442695
    %v1774 = vpow.pop %v1773
    %v1775 = vmul.f32 %v1760, 1.442695
    %v1776 = vpow.pop %v1775
    %v1777 = vadd.f32 %v1762, 1.0
    %v1778 = vadd.f32 %v1764, 1.0
    %v1779 = vadd.f32 %v1766, 1.0
    %v1780 = vadd.f32 %v1768, 1.0
    %v1781 = vadd.f32 %v1770, 1.0
    %v1782 = vadd.f32 %v1772, 1.0
    %v1783 = vadd.f32 %v1774, 1.0
    %v1784 = vadd.f32 %v1776, 1.0
    %v1785 = vrcp.pop %v1777
    %v1786 = vmul.f32 1.0, %v1785
    %v1787 = vrcp.pop %v1778
    %v1788 = vmul.f32 1.0, %v1787
    %v1789 = vrcp.pop %v1779
    %v1790 = vmul.f32 1.0, %v1789
    %v1791 = vrcp.pop %v1780
    %v1792 = vmul.f32 1.0, %v1791
    %v1793 = vrcp.pop %v1781
    %v1794 = vmul.f32 1.0, %v1793
    %v1795 = vrcp.pop %v1782
    %v1796 = vmul.f32 1.0, %v1795
    %v1797 = vrcp.pop %v1783
    %v1798 = vmul.f32 1.0, %v1797
    %v1799 = vrcp.pop %v1784
    %v1800 = vmul.f32 1.0, %v1799
    %v1802 = vrot.slane %v1727, 7
    %v1803 = vrot.slane %v1727, 1
    %v1804 = vrot.slane %v1727, 2
    %v1805 = vrot.slane %v1727, 3
    %v1806 = vrot.slane %v1727, 4
    %v1807 = vrot.slane %v1727, 5
    %v1808 = vrot.slane %v1727, 6
    %1809 = vrot.lane.b32.xlu0 %v1730, 32
    %v1810 = vpop.permute.xlu0 %1809
    %1811 = vrot.lane.b32.xlu0 %v1802, 32
    %v1812 = vpop.permute.xlu0 %1811
    %1813 = vrot.lane.b32.xlu0 %v1725, 32
    %v1814 = vpop.permute.xlu0 %1813
    %1815 = vrot.lane.b32.xlu0 %v1727, 32
    %v1816 = vpop.permute.xlu0 %1815
    %1817 = vrot.lane.b32.xlu0 %v1731, 32
    %v1818 = vpop.permute.xlu0 %1817
    %1819 = vrot.lane.b32.xlu0 %v1803, 32
    %v1820 = vpop.permute.xlu0 %1819
    %1821 = vrot.lane.b32.xlu0 %v1732, 32
    %v1822 = vpop.permute.xlu0 %1821
    %1823 = vrot.lane.b32.xlu0 %v1804, 32
    %v1824 = vpop.permute.xlu0 %1823
    %1825 = vrot.lane.b32.xlu0 %v1733, 32
    %v1826 = vpop.permute.xlu0 %1825
    %1827 = vrot.lane.b32.xlu0 %v1805, 32
    %v1828 = vpop.permute.xlu0 %1827
    %1829 = vrot.lane.b32.xlu0 %v1734, 32
    %v1830 = vpop.permute.xlu0 %1829
    %1831 = vrot.lane.b32.xlu0 %v1806, 32
    %v1832 = vpop.permute.xlu0 %1831
    %1833 = vrot.lane.b32.xlu0 %v1735, 32
    %v1834 = vpop.permute.xlu0 %1833
    %1835 = vrot.lane.b32.xlu0 %v1807, 32
    %v1836 = vpop.permute.xlu0 %1835
    %1837 = vrot.lane.b32.xlu0 %v1736, 32
    %v1838 = vpop.permute.xlu0 %1837
    %1839 = vrot.lane.b32.xlu0 %v1808, 32
    %v1840 = vpop.permute.xlu0 %1839
    %v1841 = vsel %vm1057, %v1810, %v1812
    %v1842 = vsel %vm1057, %v1814, %v1816
    %v1843 = vsel %vm1057, %v1818, %v1820
    %v1844 = vsel %vm1057, %v1822, %v1824
    %v1845 = vsel %vm1057, %v1826, %v1828
    %v1846 = vsel %vm1057, %v1830, %v1832
    %v1847 = vsel %vm1057, %v1834, %v1836
    %v1848 = vsel %vm1057, %v1838, %v1840
    %v1857 = vmul.f32 %v1786, %v1841
    %v1858 = vmul.f32 %v1788, %v1842
    %v1859 = vmul.f32 %v1790, %v1843
    %v1860 = vmul.f32 %v1792, %v1844
    %v1861 = vmul.f32 %v1794, %v1845
    %v1862 = vmul.f32 %v1796, %v1846
    %v1863 = vmul.f32 %v1798, %v1847
    %v1864 = vmul.f32 %v1800, %v1848
    %1873 = vrot.lane.b32.xlu0 %v1857, 96
    %v1874 = vpop.permute.xlu0 %1873
    %1875 = vrot.lane.b32.xlu0 %v1858, 96
    %v1876 = vpop.permute.xlu0 %1875
    %1877 = vrot.lane.b32.xlu0 %v1859, 96
    %v1878 = vpop.permute.xlu0 %1877
    %1879 = vrot.lane.b32.xlu0 %v1860, 96
    %v1880 = vpop.permute.xlu0 %1879
    %1881 = vrot.lane.b32.xlu0 %v1861, 96
    %v1882 = vpop.permute.xlu0 %1881
    %1883 = vrot.lane.b32.xlu0 %v1862, 96
    %v1884 = vpop.permute.xlu0 %1883
    %1885 = vrot.lane.b32.xlu0 %v1863, 96
    %v1886 = vpop.permute.xlu0 %1885
    %1887 = vrot.lane.b32.xlu0 %v1864, 96
    %v1888 = vpop.permute.xlu0 %1887
    %v1897 = vadd.f32 %v1182, %v1874
    %v1898 = vadd.f32 %v1184, %v1874
    %v1899 = vadd.f32 %v1188, %v1876
    %v1900 = vadd.f32 %v1190, %v1876
    %v1901 = vadd.f32 %v1194, %v1878
    %v1902 = vadd.f32 %v1196, %v1878
    %v1903 = vadd.f32 %v1200, %v1880
    %v1904 = vadd.f32 %v1202, %v1880
    %v1905 = vadd.f32 %v1206, %v1882
    %v1906 = vadd.f32 %v1208, %v1882
    %v1907 = vadd.f32 %v1212, %v1884
    %v1908 = vadd.f32 %v1214, %v1884
    %v1909 = vadd.f32 %v1218, %v1886
    %v1910 = vadd.f32 %v1220, %v1886
    %v1911 = vadd.f32 %v1224, %v1888
    %v1912 = vadd.f32 %v1226, %v1888
    %v1913 = vtanh.pop %v1897
    %v1914 = vtanh.pop %v1898
    %v1915 = vtanh.pop %v1899
    %v1916 = vtanh.pop %v1900
    %v1917 = vtanh.pop %v1901
    %v1918 = vtanh.pop %v1902
    %v1919 = vtanh.pop %v1903
    %v1920 = vtanh.pop %v1904
    %v1921 = vtanh.pop %v1905
    %v1922 = vtanh.pop %v1906
    %v1923 = vtanh.pop %v1907
    %v1924 = vtanh.pop %v1908
    %v1925 = vtanh.pop %v1909
    %v1926 = vtanh.pop %v1910
    %v1927 = vtanh.pop %v1911
    %v1928 = vtanh.pop %v1912
    %v1929 = vsub.f32 1.0, %v1786
    %v1930 = vsub.f32 1.0, %v1788
    %v1931 = vsub.f32 1.0, %v1790
    %v1932 = vsub.f32 1.0, %v1792
    %v1933 = vsub.f32 1.0, %v1794
    %v1934 = vsub.f32 1.0, %v1796
    %v1935 = vsub.f32 1.0, %v1798
    %v1936 = vsub.f32 1.0, %v1800
    %1953 = vrot.lane.b32.xlu0 %v1913, 80
    %v1954 = vpop.permute.xlu0 %1953
    %1955 = vrot.lane.b32.xlu0 %v1914, 80
    %v1956 = vpop.permute.xlu0 %1955
    %1957 = vrot.lane.b32.xlu0 %v1915, 80
    %v1958 = vpop.permute.xlu0 %1957
    %1959 = vrot.lane.b32.xlu0 %v1916, 80
    %v1960 = vpop.permute.xlu0 %1959
    %1961 = vrot.lane.b32.xlu0 %v1917, 80
    %v1962 = vpop.permute.xlu0 %1961
    %1963 = vrot.lane.b32.xlu0 %v1918, 80
    %v1964 = vpop.permute.xlu0 %1963
    %1965 = vrot.lane.b32.xlu0 %v1919, 80
    %v1966 = vpop.permute.xlu0 %1965
    %1967 = vrot.lane.b32.xlu0 %v1920, 80
    %v1968 = vpop.permute.xlu0 %1967
    %1969 = vrot.lane.b32.xlu0 %v1921, 80
    %v1970 = vpop.permute.xlu0 %1969
    %1971 = vrot.lane.b32.xlu0 %v1922, 80
    %v1972 = vpop.permute.xlu0 %1971
    %1973 = vrot.lane.b32.xlu0 %v1923, 80
    %v1974 = vpop.permute.xlu0 %1973
    %1975 = vrot.lane.b32.xlu0 %v1924, 80
    %v1976 = vpop.permute.xlu0 %1975
    %1977 = vrot.lane.b32.xlu0 %v1925, 80
    %v1978 = vpop.permute.xlu0 %1977
    %1979 = vrot.lane.b32.xlu0 %v1926, 80
    %v1980 = vpop.permute.xlu0 %1979
    %1981 = vrot.lane.b32.xlu0 %v1927, 80
    %v1982 = vpop.permute.xlu0 %1981
    %1983 = vrot.lane.b32.xlu0 %v1928, 80
    %v1984 = vpop.permute.xlu0 %1983
    %v1985 = vsel %vm1584, %v1954, %v1956
    %v1986 = vsel %vm1584, %v1958, %v1960
    %v1987 = vsel %vm1584, %v1962, %v1964
    %v1988 = vsel %vm1584, %v1966, %v1968
    %v1989 = vsel %vm1584, %v1970, %v1972
    %v1990 = vsel %vm1584, %v1974, %v1976
    %v1991 = vsel %vm1584, %v1978, %v1980
    %v1992 = vsel %vm1584, %v1982, %v1984
    %v2001 = vmul.f32 %v1929, %v1985
    %v2002 = vmul.f32 %v1930, %v1986
    %v2003 = vmul.f32 %v1931, %v1987
    %v2004 = vmul.f32 %v1932, %v1988
    %v2005 = vmul.f32 %v1933, %v1989
    %v2006 = vmul.f32 %v1934, %v1990
    %v2007 = vmul.f32 %v1935, %v1991
    %v2008 = vmul.f32 %v1936, %v1992
    %v2009 = vrot.slane %v1617, 7
    %v2010 = vrot.slane %v1619, 7
    %v2011 = vrot.slane %v1620, 7
    %v2012 = vrot.slane %v1621, 7
    %v2013 = vrot.slane %v1622, 7
    %v2014 = vrot.slane %v1623, 7
    %v2015 = vrot.slane %v1624, 7
    %v2024 = vmul.f32 %v1786, %v2009
    %v2025 = vmul.f32 %v1788, %v1633
    %v2026 = vmul.f32 %v1790, %v2010
    %v2027 = vmul.f32 %v1792, %v2011
    %v2028 = vmul.f32 %v1794, %v2012
    %v2029 = vmul.f32 %v1796, %v2013
    %v2030 = vmul.f32 %v1798, %v2014
    %v2031 = vmul.f32 %v1800, %v2015
    %v2032 = vadd.f32 %v2001, %v2024
    %v2033 = vadd.f32 %v2002, %v2025
    %v2034 = vadd.f32 %v2003, %v2026
    %v2035 = vadd.f32 %v2004, %v2027
    %v2036 = vadd.f32 %v2005, %v2028
    %v2037 = vadd.f32 %v2006, %v2029
    %v2038 = vadd.f32 %v2007, %v2030
    %v2039 = vadd.f32 %v2008, %v2031
    %v2048 = vrot.slane %v2032, 1
    %v2049 = vsel %vm1634, %v2033, %v2048
    %v2050 = vrot.slane %v2034, 7
    %v2051 = vsel %vm1637, %v2050, %v2049
    %v2052 = vrot.slane %v2035, 6
    %v2053 = vsel %vm1640, %v2052, %v2051
    %v2054 = vrot.slane %v2036, 5
    %v2055 = vsel %vm1643, %v2054, %v2053
    %v2056 = vrot.slane %v2037, 4
    %v2057 = vsel %vm1646, %v2056, %v2055
    %v2058 = vrot.slane %v2038, 3
    %v2059 = vsel %vm1649, %v2058, %v2057
    %v2060 = vrot.slane %v2039, 2
    %v2061 = vsel %vm1652, %v2060, %v2059
    %2062 = vrot.lane.b32.xlu0 %v2061, 80
    %v2063 = vpop.permute.xlu0 %2062
    %v2064 = vsel %vm1090, %v2063, 0
    %2066 = vmatprep.subr.mxu0 %v1230
    %2067 = vmatpush1.msra.mxu0 %v1229
    %2068 = vmatprep.subr.mxu0 %v1232
    %2069 = vmatpush1.msra.mxu0 %v1231
    %2070 = vmatprep.subr.mxu0 %v1234
    %2071 = vmatpush1.msra.mxu0 %v1233
    %2072 = vmatprep.subr.mxu0 %v1236
    %2073 = vmatpush1.msra.mxu0 %v1235
    %2074 = vmatprep.subr.mxu0 %v1238
    %2075 = vmatpush1.msra.mxu0 %v1237
    %2076 = vmatprep.subr.mxu0 %v1240
    %2077 = vmatpush1.msra.mxu0 %v1239
    %2078 = vmatprep.subr.mxu0 0.0
    %2079 = vmatpush1.msra.mxu0 0.0
    %2080 = vmatprep.subr.mxu0 0.0
    %2081 = vmatpush1.msra.mxu0 0.0
    %2082 = vmatprep.subr.mxu0 0.0
    %2083 = vmatpush1.msra.mxu0 0.0
    %2084 = vmatprep.subr.mxu0 0.0
    %2085 = vmatpush1.msra.mxu0 0.0
    %2086 = vmatprep.subr.mxu0 0.0
    %2087 = vmatpush1.msra.mxu0 0.0
    %2088 = vmatprep.subr.mxu0 0.0
    %2089 = vmatpush1.msra.mxu0 0.0
    %2090 = vmatprep.subr.mxu0 0.0
    %2091 = vmatpush1.msra.mxu0 0.0
    %2092 = vmatprep.subr.mxu0 0.0
    %2093 = vmatpush1.msra.mxu0 0.0
    %2094 = vmatprep.subr.mxu0 0.0
    %2095 = vmatpush1.msra.mxu0 0.0
    %2096 = vmatprep.subr.mxu0 0.0
    %2097 = vmatpush1.msra.mxu0 0.0
    %2098 = vmatprep.subr.mxu0 0.0
    %2099 = vmatpush1.msra.mxu0 0.0
    %2100 = vmatprep.subr.mxu0 0.0
    %2101 = vmatpush1.msra.mxu0 0.0
    %2102 = vmatprep.subr.mxu0 0.0
    %2103 = vmatpush1.msra.mxu0 0.0
    %2104 = vmatprep.subr.mxu0 0.0
    %2105 = vmatpush1.msra.mxu0 0.0
    %2106 = vmatprep.subr.mxu0 0.0
    %2107 = vmatpush1.msra.mxu0 0.0
    %2108 = vmatprep.subr.mxu0 0.0
    %2109 = vmatpush1.msra.mxu0 0.0
    %2110 = vmatprep.subr.mxu0 0.0
    %2111 = vmatpush1.msra.mxu0 0.0
    %2112 = vmatprep.subr.mxu0 0.0
    %2113 = vmatpush1.msra.mxu0 0.0
    %2114 = vmatprep.subr.mxu0 0.0
    %2115 = vmatpush1.msra.mxu0 0.0
    %2116 = vmatprep.subr.mxu0 0.0
    %2117 = vmatpush1.msra.mxu0 0.0
    %2118 = vmatprep.subr.mxu0 0.0
    %2119 = vmatpush1.msra.mxu0 0.0
    %2120 = vmatprep.subr.mxu0 0.0
    %2121 = vmatpush1.msra.mxu0 0.0
    %2122 = vmatprep.subr.mxu0 0.0
    %2123 = vmatpush1.msra.mxu0 0.0
    %2124 = vmatprep.subr.mxu0 0.0
    %2125 = vmatpush1.msra.mxu0 0.0
    %2126 = vmatprep.subr.mxu0 0.0
    %2127 = vmatpush1.msra.mxu0 0.0
    %2128 = vmatprep.subr.mxu0 0.0
    %2129 = vmatpush1.msra.mxu0 0.0
    %2130 = vmatprep.mubr.f32.mxu0 0.0
    %2131 = vmatmul.mubr.f32.gmra.mrb[0].mxu0 %v2064
    %v2132 = vpop.f32.mrb[0].mxu0
    %v2133 = vadd.f32 %v1247, %v2132
    %v2134 = vpop.f32.mrb[0].mxu0
    %v2135 = vadd.f32 %v1251, %v2134
    %2136 = vdwg.mxu0
    %v2138 = vrot.slane %v2133, 6
    %v2139 = vrot.slane %v2133, 7
    %v2140 = vrot.slane %v2133, 1
    %v2141 = vrot.slane %v2133, 2
    %v2142 = vrot.slane %v2133, 3
    %v2143 = vrot.slane %v2133, 4
    %v2144 = vrot.slane %v2133, 5
    %v2153 = vadd.f32 %v1182, %v2138
    %v2154 = vadd.f32 %v1188, %v2139
    %v2155 = vadd.f32 %v1194, %v2133
    %v2156 = vadd.f32 %v1200, %v2140
    %v2157 = vadd.f32 %v1206, %v2141
    %v2158 = vadd.f32 %v1212, %v2142
    %v2159 = vadd.f32 %v1218, %v2143
    %v2160 = vadd.f32 %v1224, %v2144
    %v2161 = vxor.u32 %v2153, 2147483648
    %v2162 = vxor.u32 %v2154, 2147483648
    %v2163 = vxor.u32 %v2155, 2147483648
    %v2164 = vxor.u32 %v2156, 2147483648
    %v2165 = vxor.u32 %v2157, 2147483648
    %v2166 = vxor.u32 %v2158, 2147483648
    %v2167 = vxor.u32 %v2159, 2147483648
    %v2168 = vxor.u32 %v2160, 2147483648
    %v2169 = vmul.f32 %v2161, 1.442695
    %v2170 = vpow.pop %v2169
    %v2171 = vmul.f32 %v2162, 1.442695
    %v2172 = vpow.pop %v2171
    %v2173 = vmul.f32 %v2163, 1.442695
    %v2174 = vpow.pop %v2173
    %v2175 = vmul.f32 %v2164, 1.442695
    %v2176 = vpow.pop %v2175
    %v2177 = vmul.f32 %v2165, 1.442695
    %v2178 = vpow.pop %v2177
    %v2179 = vmul.f32 %v2166, 1.442695
    %v2180 = vpow.pop %v2179
    %v2181 = vmul.f32 %v2167, 1.442695
    %v2182 = vpow.pop %v2181
    %v2183 = vmul.f32 %v2168, 1.442695
    %v2184 = vpow.pop %v2183
    %v2185 = vadd.f32 %v2170, 1.0
    %v2186 = vadd.f32 %v2172, 1.0
    %v2187 = vadd.f32 %v2174, 1.0
    %v2188 = vadd.f32 %v2176, 1.0
    %v2189 = vadd.f32 %v2178, 1.0
    %v2190 = vadd.f32 %v2180, 1.0
    %v2191 = vadd.f32 %v2182, 1.0
    %v2192 = vadd.f32 %v2184, 1.0
    %v2193 = vrcp.pop %v2185
    %v2194 = vmul.f32 1.0, %v2193
    %v2195 = vrcp.pop %v2186
    %v2196 = vmul.f32 1.0, %v2195
    %v2197 = vrcp.pop %v2187
    %v2198 = vmul.f32 1.0, %v2197
    %v2199 = vrcp.pop %v2188
    %v2200 = vmul.f32 1.0, %v2199
    %v2201 = vrcp.pop %v2189
    %v2202 = vmul.f32 1.0, %v2201
    %v2203 = vrcp.pop %v2190
    %v2204 = vmul.f32 1.0, %v2203
    %v2205 = vrcp.pop %v2191
    %v2206 = vmul.f32 1.0, %v2205
    %v2207 = vrcp.pop %v2192
    %v2208 = vmul.f32 1.0, %v2207
    %v2210 = vrot.slane %v2135, 6
    %v2211 = vrot.slane %v2135, 7
    %v2212 = vrot.slane %v2135, 1
    %v2213 = vrot.slane %v2135, 2
    %v2214 = vrot.slane %v2135, 3
    %v2215 = vrot.slane %v2135, 4
    %v2216 = vrot.slane %v2135, 5
    %2217 = vrot.lane.b32.xlu0 %v2138, 32
    %v2218 = vpop.permute.xlu0 %2217
    %2219 = vrot.lane.b32.xlu0 %v2210, 32
    %v2220 = vpop.permute.xlu0 %2219
    %2221 = vrot.lane.b32.xlu0 %v2139, 32
    %v2222 = vpop.permute.xlu0 %2221
    %2223 = vrot.lane.b32.xlu0 %v2211, 32
    %v2224 = vpop.permute.xlu0 %2223
    %2225 = vrot.lane.b32.xlu0 %v2133, 32
    %v2226 = vpop.permute.xlu0 %2225
    %2227 = vrot.lane.b32.xlu0 %v2135, 32
    %v2228 = vpop.permute.xlu0 %2227
    %2229 = vrot.lane.b32.xlu0 %v2140, 32
    %v2230 = vpop.permute.xlu0 %2229
    %2231 = vrot.lane.b32.xlu0 %v2212, 32
    %v2232 = vpop.permute.xlu0 %2231
    %2233 = vrot.lane.b32.xlu0 %v2141, 32
    %v2234 = vpop.permute.xlu0 %2233
    %2235 = vrot.lane.b32.xlu0 %v2213, 32
    %v2236 = vpop.permute.xlu0 %2235
    %2237 = vrot.lane.b32.xlu0 %v2142, 32
    %v2238 = vpop.permute.xlu0 %2237
    %2239 = vrot.lane.b32.xlu0 %v2214, 32
    %v2240 = vpop.permute.xlu0 %2239
    %2241 = vrot.lane.b32.xlu0 %v2143, 32
    %v2242 = vpop.permute.xlu0 %2241
    %2243 = vrot.lane.b32.xlu0 %v2215, 32
    %v2244 = vpop.permute.xlu0 %2243
    %2245 = vrot.lane.b32.xlu0 %v2144, 32
    %v2246 = vpop.permute.xlu0 %2245
    %2247 = vrot.lane.b32.xlu0 %v2216, 32
    %v2248 = vpop.permute.xlu0 %2247
    %v2249 = vsel %vm1057, %v2218, %v2220
    %v2250 = vsel %vm1057, %v2222, %v2224
    %v2251 = vsel %vm1057, %v2226, %v2228
    %v2252 = vsel %vm1057, %v2230, %v2232
    %v2253 = vsel %vm1057, %v2234, %v2236
    %v2254 = vsel %vm1057, %v2238, %v2240
    %v2255 = vsel %vm1057, %v2242, %v2244
    %v2256 = vsel %vm1057, %v2246, %v2248
    %v2265 = vmul.f32 %v2194, %v2249
    %v2266 = vmul.f32 %v2196, %v2250
    %v2267 = vmul.f32 %v2198, %v2251
    %v2268 = vmul.f32 %v2200, %v2252
    %v2269 = vmul.f32 %v2202, %v2253
    %v2270 = vmul.f32 %v2204, %v2254
    %v2271 = vmul.f32 %v2206, %v2255
    %v2272 = vmul.f32 %v2208, %v2256
    %2281 = vrot.lane.b32.xlu0 %v2265, 96
    %v2282 = vpop.permute.xlu0 %2281
    %2283 = vrot.lane.b32.xlu0 %v2266, 96
    %v2284 = vpop.permute.xlu0 %2283
    %2285 = vrot.lane.b32.xlu0 %v2267, 96
    %v2286 = vpop.permute.xlu0 %2285
    %2287 = vrot.lane.b32.xlu0 %v2268, 96
    %v2288 = vpop.permute.xlu0 %2287
    %2289 = vrot.lane.b32.xlu0 %v2269, 96
    %v2290 = vpop.permute.xlu0 %2289
    %2291 = vrot.lane.b32.xlu0 %v2270, 96
    %v2292 = vpop.permute.xlu0 %2291
    %2293 = vrot.lane.b32.xlu0 %v2271, 96
    %v2294 = vpop.permute.xlu0 %2293
    %2295 = vrot.lane.b32.xlu0 %v2272, 96
    %v2296 = vpop.permute.xlu0 %2295
    %v2305 = vadd.f32 %v1182, %v2282
    %v2306 = vadd.f32 %v1184, %v2282
    %v2307 = vadd.f32 %v1188, %v2284
    %v2308 = vadd.f32 %v1190, %v2284
    %v2309 = vadd.f32 %v1194, %v2286
    %v2310 = vadd.f32 %v1196, %v2286
    %v2311 = vadd.f32 %v1200, %v2288
    %v2312 = vadd.f32 %v1202, %v2288
    %v2313 = vadd.f32 %v1206, %v2290
    %v2314 = vadd.f32 %v1208, %v2290
    %v2315 = vadd.f32 %v1212, %v2292
    %v2316 = vadd.f32 %v1214, %v2292
    %v2317 = vadd.f32 %v1218, %v2294
    %v2318 = vadd.f32 %v1220, %v2294
    %v2319 = vadd.f32 %v1224, %v2296
    %v2320 = vadd.f32 %v1226, %v2296
    %v2321 = vtanh.pop %v2305
    %v2322 = vtanh.pop %v2306
    %v2323 = vtanh.pop %v2307
    %v2324 = vtanh.pop %v2308
    %v2325 = vtanh.pop %v2309
    %v2326 = vtanh.pop %v2310
    %v2327 = vtanh.pop %v2311
    %v2328 = vtanh.pop %v2312
    %v2329 = vtanh.pop %v2313
    %v2330 = vtanh.pop %v2314
    %v2331 = vtanh.pop %v2315
    %v2332 = vtanh.pop %v2316
    %v2333 = vtanh.pop %v2317
    %v2334 = vtanh.pop %v2318
    %v2335 = vtanh.pop %v2319
    %v2336 = vtanh.pop %v2320
    %v2337 = vsub.f32 1.0, %v2194
    %v2338 = vsub.f32 1.0, %v2196
    %v2339 = vsub.f32 1.0, %v2198
    %v2340 = vsub.f32 1.0, %v2200
    %v2341 = vsub.f32 1.0, %v2202
    %v2342 = vsub.f32 1.0, %v2204
    %v2343 = vsub.f32 1.0, %v2206
    %v2344 = vsub.f32 1.0, %v2208
    %2361 = vrot.lane.b32.xlu0 %v2321, 80
    %v2362 = vpop.permute.xlu0 %2361
    %2363 = vrot.lane.b32.xlu0 %v2322, 80
    %v2364 = vpop.permute.xlu0 %2363
    %2365 = vrot.lane.b32.xlu0 %v2323, 80
    %v2366 = vpop.permute.xlu0 %2365
    %2367 = vrot.lane.b32.xlu0 %v2324, 80
    %v2368 = vpop.permute.xlu0 %2367
    %2369 = vrot.lane.b32.xlu0 %v2325, 80
    %v2370 = vpop.permute.xlu0 %2369
    %2371 = vrot.lane.b32.xlu0 %v2326, 80
    %v2372 = vpop.permute.xlu0 %2371
    %2373 = vrot.lane.b32.xlu0 %v2327, 80
    %v2374 = vpop.permute.xlu0 %2373
    %2375 = vrot.lane.b32.xlu0 %v2328, 80
    %v2376 = vpop.permute.xlu0 %2375
    %2377 = vrot.lane.b32.xlu0 %v2329, 80
    %v2378 = vpop.permute.xlu0 %2377
    %2379 = vrot.lane.b32.xlu0 %v2330, 80
    %v2380 = vpop.permute.xlu0 %2379
    %2381 = vrot.lane.b32.xlu0 %v2331, 80
    %v2382 = vpop.permute.xlu0 %2381
    %2383 = vrot.lane.b32.xlu0 %v2332, 80
    %v2384 = vpop.permute.xlu0 %2383
    %2385 = vrot.lane.b32.xlu0 %v2333, 80
    %v2386 = vpop.permute.xlu0 %2385
    %2387 = vrot.lane.b32.xlu0 %v2334, 80
    %v2388 = vpop.permute.xlu0 %2387
    %2389 = vrot.lane.b32.xlu0 %v2335, 80
    %v2390 = vpop.permute.xlu0 %2389
    %2391 = vrot.lane.b32.xlu0 %v2336, 80
    %v2392 = vpop.permute.xlu0 %2391
    %v2393 = vsel %vm1584, %v2362, %v2364
    %v2394 = vsel %vm1584, %v2366, %v2368
    %v2395 = vsel %vm1584, %v2370, %v2372
    %v2396 = vsel %vm1584, %v2374, %v2376
    %v2397 = vsel %vm1584, %v2378, %v2380
    %v2398 = vsel %vm1584, %v2382, %v2384
    %v2399 = vsel %vm1584, %v2386, %v2388
    %v2400 = vsel %vm1584, %v2390, %v2392
    %v2409 = vmul.f32 %v2337, %v2393
    %v2410 = vmul.f32 %v2338, %v2394
    %v2411 = vmul.f32 %v2339, %v2395
    %v2412 = vmul.f32 %v2340, %v2396
    %v2413 = vmul.f32 %v2341, %v2397
    %v2414 = vmul.f32 %v2342, %v2398
    %v2415 = vmul.f32 %v2343, %v2399
    %v2416 = vmul.f32 %v2344, %v2400
    %v2417 = vrot.slane %v2032, 7
    %v2418 = vrot.slane %v2033, 7
    %v2419 = vrot.slane %v2035, 7
    %v2420 = vrot.slane %v2036, 7
    %v2421 = vrot.slane %v2037, 7
    %v2422 = vrot.slane %v2038, 7
    %v2423 = vrot.slane %v2039, 7
    %v2432 = vmul.f32 %v2194, %v2417
    %v2433 = vmul.f32 %v2196, %v2418
    %v2434 = vmul.f32 %v2198, %v2050
    %v2435 = vmul.f32 %v2200, %v2419
    %v2436 = vmul.f32 %v2202, %v2420
    %v2437 = vmul.f32 %v2204, %v2421
    %v2438 = vmul.f32 %v2206, %v2422
    %v2439 = vmul.f32 %v2208, %v2423
    %v2440 = vadd.f32 %v2409, %v2432
    %v2441 = vadd.f32 %v2410, %v2433
    %v2442 = vadd.f32 %v2411, %v2434
    %v2443 = vadd.f32 %v2412, %v2435
    %v2444 = vadd.f32 %v2413, %v2436
    %v2445 = vadd.f32 %v2414, %v2437
    %v2446 = vadd.f32 %v2415, %v2438
    %v2447 = vadd.f32 %v2416, %v2439
    %v2456 = vrot.slane %v2440, 2
    %v2457 = vrot.slane %v2441, 1
    %v2458 = vsel %vm1634, %v2457, %v2456
    %v2459 = vsel %vm1637, %v2442, %v2458
    %v2460 = vrot.slane %v2443, 7
    %v2461 = vsel %vm1640, %v2460, %v2459
    %v2462 = vrot.slane %v2444, 6
    %v2463 = vsel %vm1643, %v2462, %v2461
    %v2464 = vrot.slane %v2445, 5
    %v2465 = vsel %vm1646, %v2464, %v2463
    %v2466 = vrot.slane %v2446, 4
    %v2467 = vsel %vm1649, %v2466, %v2465
    %v2468 = vrot.slane %v2447, 3
    %v2469 = vsel %vm1652, %v2468, %v2467
    %2470 = vrot.lane.b32.xlu0 %v2469, 80
    %v2471 = vpop.permute.xlu0 %2470
    %v2472 = vsel %vm1090, %v2471, 0
    %2474 = vmatprep.subr.mxu0 %v1230
    %2475 = vmatpush1.msra.mxu0 %v1229
    %2476 = vmatprep.subr.mxu0 %v1232
    %2477 = vmatpush1.msra.mxu0 %v1231
    %2478 = vmatprep.subr.mxu0 %v1234
    %2479 = vmatpush1.msra.mxu0 %v1233
    %2480 = vmatprep.subr.mxu0 %v1236
    %2481 = vmatpush1.msra.mxu0 %v1235
    %2482 = vmatprep.subr.mxu0 %v1238
    %2483 = vmatpush1.msra.mxu0 %v1237
    %2484 = vmatprep.subr.mxu0 %v1240
    %2485 = vmatpush1.msra.mxu0 %v1239
    %2486 = vmatprep.subr.mxu0 0.0
    %2487 = vmatpush1.msra.mxu0 0.0
    %2488 = vmatprep.subr.mxu0 0.0
    %2489 = vmatpush1.msra.mxu0 0.0
    %2490 = vmatprep.subr.mxu0 0.0
    %2491 = vmatpush1.msra.mxu0 0.0
    %2492 = vmatprep.subr.mxu0 0.0
    %2493 = vmatpush1.msra.mxu0 0.0
    %2494 = vmatprep.subr.mxu0 0.0
    %2495 = vmatpush1.msra.mxu0 0.0
    %2496 = vmatprep.subr.mxu0 0.0
    %2497 = vmatpush1.msra.mxu0 0.0
    %2498 = vmatprep.subr.mxu0 0.0
    %2499 = vmatpush1.msra.mxu0 0.0
    %2500 = vmatprep.subr.mxu0 0.0
    %2501 = vmatpush1.msra.mxu0 0.0
    %2502 = vmatprep.subr.mxu0 0.0
    %2503 = vmatpush1.msra.mxu0 0.0
    %2504 = vmatprep.subr.mxu0 0.0
    %2505 = vmatpush1.msra.mxu0 0.0
    %2506 = vmatprep.subr.mxu0 0.0
    %2507 = vmatpush1.msra.mxu0 0.0
    %2508 = vmatprep.subr.mxu0 0.0
    %2509 = vmatpush1.msra.mxu0 0.0
    %2510 = vmatprep.subr.mxu0 0.0
    %2511 = vmatpush1.msra.mxu0 0.0
    %2512 = vmatprep.subr.mxu0 0.0
    %2513 = vmatpush1.msra.mxu0 0.0
    %2514 = vmatprep.subr.mxu0 0.0
    %2515 = vmatpush1.msra.mxu0 0.0
    %2516 = vmatprep.subr.mxu0 0.0
    %2517 = vmatpush1.msra.mxu0 0.0
    %2518 = vmatprep.subr.mxu0 0.0
    %2519 = vmatpush1.msra.mxu0 0.0
    %2520 = vmatprep.subr.mxu0 0.0
    %2521 = vmatpush1.msra.mxu0 0.0
    %2522 = vmatprep.subr.mxu0 0.0
    %2523 = vmatpush1.msra.mxu0 0.0
    %2524 = vmatprep.subr.mxu0 0.0
    %2525 = vmatpush1.msra.mxu0 0.0
    %2526 = vmatprep.subr.mxu0 0.0
    %2527 = vmatpush1.msra.mxu0 0.0
    %2528 = vmatprep.subr.mxu0 0.0
    %2529 = vmatpush1.msra.mxu0 0.0
    %2530 = vmatprep.subr.mxu0 0.0
    %2531 = vmatpush1.msra.mxu0 0.0
    %2532 = vmatprep.subr.mxu0 0.0
    %2533 = vmatpush1.msra.mxu0 0.0
    %2534 = vmatprep.subr.mxu0 0.0
    %2535 = vmatpush1.msra.mxu0 0.0
    %2536 = vmatprep.subr.mxu0 0.0
    %2537 = vmatpush1.msra.mxu0 0.0
    %2538 = vmatprep.mubr.f32.mxu0 0.0
    %2539 = vmatmul.mubr.f32.gmra.mrb[0].mxu0 %v2472
    %v2540 = vpop.f32.mrb[0].mxu0
    %v2541 = vadd.f32 %v1247, %v2540
    %v2542 = vpop.f32.mrb[0].mxu0
    %v2543 = vadd.f32 %v1251, %v2542
    %2544 = vdwg.mxu0
    %v2546 = vrot.slane %v2541, 5
    %v2547 = vrot.slane %v2541, 6
    %v2548 = vrot.slane %v2541, 7
    %v2549 = vrot.slane %v2541, 1
    %v2550 = vrot.slane %v2541, 2
    %v2551 = vrot.slane %v2541, 3
    %v2552 = vrot.slane %v2541, 4
    %v2561 = vadd.f32 %v1182, %v2546
    %v2562 = vadd.f32 %v1188, %v2547
    %v2563 = vadd.f32 %v1194, %v2548
    %v2564 = vadd.f32 %v1200, %v2541
    %v2565 = vadd.f32 %v1206, %v2549
    %v2566 = vadd.f32 %v1212, %v2550
    %v2567 = vadd.f32 %v1218, %v2551
    %v2568 = vadd.f32 %v1224, %v2552
    %v2569 = vxor.u32 %v2561, 2147483648
    %v2570 = vxor.u32 %v2562, 2147483648
    %v2571 = vxor.u32 %v2563, 2147483648
    %v2572 = vxor.u32 %v2564, 2147483648
    %v2573 = vxor.u32 %v2565, 2147483648
    %v2574 = vxor.u32 %v2566, 2147483648
    %v2575 = vxor.u32 %v2567, 2147483648
    %v2576 = vxor.u32 %v2568, 2147483648
    %v2577 = vmul.f32 %v2569, 1.442695
    %v2578 = vpow.pop %v2577
    %v2579 = vmul.f32 %v2570, 1.442695
    %v2580 = vpow.pop %v2579
    %v2581 = vmul.f32 %v2571, 1.442695
    %v2582 = vpow.pop %v2581
    %v2583 = vmul.f32 %v2572, 1.442695
    %v2584 = vpow.pop %v2583
    %v2585 = vmul.f32 %v2573, 1.442695
    %v2586 = vpow.pop %v2585
    %v2587 = vmul.f32 %v2574, 1.442695
    %v2588 = vpow.pop %v2587
    %v2589 = vmul.f32 %v2575, 1.442695
    %v2590 = vpow.pop %v2589
    %v2591 = vmul.f32 %v2576, 1.442695
    %v2592 = vpow.pop %v2591
    %v2593 = vadd.f32 %v2578, 1.0
    %v2594 = vadd.f32 %v2580, 1.0
    %v2595 = vadd.f32 %v2582, 1.0
    %v2596 = vadd.f32 %v2584, 1.0
    %v2597 = vadd.f32 %v2586, 1.0
    %v2598 = vadd.f32 %v2588, 1.0
    %v2599 = vadd.f32 %v2590, 1.0
    %v2600 = vadd.f32 %v2592, 1.0
    %v2601 = vrcp.pop %v2593
    %v2602 = vmul.f32 1.0, %v2601
    %v2603 = vrcp.pop %v2594
    %v2604 = vmul.f32 1.0, %v2603
    %v2605 = vrcp.pop %v2595
    %v2606 = vmul.f32 1.0, %v2605
    %v2607 = vrcp.pop %v2596
    %v2608 = vmul.f32 1.0, %v2607
    %v2609 = vrcp.pop %v2597
    %v2610 = vmul.f32 1.0, %v2609
    %v2611 = vrcp.pop %v2598
    %v2612 = vmul.f32 1.0, %v2611
    %v2613 = vrcp.pop %v2599
    %v2614 = vmul.f32 1.0, %v2613
    %v2615 = vrcp.pop %v2600
    %v2616 = vmul.f32 1.0, %v2615
    %v2618 = vrot.slane %v2543, 5
    %v2619 = vrot.slane %v2543, 6
    %v2620 = vrot.slane %v2543, 7
    %v2621 = vrot.slane %v2543, 1
    %v2622 = vrot.slane %v2543, 2
    %v2623 = vrot.slane %v2543, 3
    %v2624 = vrot.slane %v2543, 4
    %2625 = vrot.lane.b32.xlu0 %v2546, 32
    %v2626 = vpop.permute.xlu0 %2625
    %2627 = vrot.lane.b32.xlu0 %v2618, 32
    %v2628 = vpop.permute.xlu0 %2627
    %2629 = vrot.lane.b32.xlu0 %v2547, 32
    %v2630 = vpop.permute.xlu0 %2629
    %2631 = vrot.lane.b32.xlu0 %v2619, 32
    %v2632 = vpop.permute.xlu0 %2631
    %2633 = vrot.lane.b32.xlu0 %v2548, 32
    %v2634 = vpop.permute.xlu0 %2633
    %2635 = vrot.lane.b32.xlu0 %v2620, 32
    %v2636 = vpop.permute.xlu0 %2635
    %2637 = vrot.lane.b32.xlu0 %v2541, 32
    %v2638 = vpop.permute.xlu0 %2637
    %2639 = vrot.lane.b32.xlu0 %v2543, 32
    %v2640 = vpop.permute.xlu0 %2639
    %2641 = vrot.lane.b32.xlu0 %v2549, 32
    %v2642 = vpop.permute.xlu0 %2641
    %2643 = vrot.lane.b32.xlu0 %v2621, 32
    %v2644 = vpop.permute.xlu0 %2643
    %2645 = vrot.lane.b32.xlu0 %v2550, 32
    %v2646 = vpop.permute.xlu0 %2645
    %2647 = vrot.lane.b32.xlu0 %v2622, 32
    %v2648 = vpop.permute.xlu0 %2647
    %2649 = vrot.lane.b32.xlu0 %v2551, 32
    %v2650 = vpop.permute.xlu0 %2649
    %2651 = vrot.lane.b32.xlu0 %v2623, 32
    %v2652 = vpop.permute.xlu0 %2651
    %2653 = vrot.lane.b32.xlu0 %v2552, 32
    %v2654 = vpop.permute.xlu0 %2653
    %2655 = vrot.lane.b32.xlu0 %v2624, 32
    %v2656 = vpop.permute.xlu0 %2655
    %v2657 = vsel %vm1057, %v2626, %v2628
    %v2658 = vsel %vm1057, %v2630, %v2632
    %v2659 = vsel %vm1057, %v2634, %v2636
    %v2660 = vsel %vm1057, %v2638, %v2640
    %v2661 = vsel %vm1057, %v2642, %v2644
    %v2662 = vsel %vm1057, %v2646, %v2648
    %v2663 = vsel %vm1057, %v2650, %v2652
    %v2664 = vsel %vm1057, %v2654, %v2656
    %v2673 = vmul.f32 %v2602, %v2657
    %v2674 = vmul.f32 %v2604, %v2658
    %v2675 = vmul.f32 %v2606, %v2659
    %v2676 = vmul.f32 %v2608, %v2660
    %v2677 = vmul.f32 %v2610, %v2661
    %v2678 = vmul.f32 %v2612, %v2662
    %v2679 = vmul.f32 %v2614, %v2663
    %v2680 = vmul.f32 %v2616, %v2664
    %2689 = vrot.lane.b32.xlu0 %v2673, 96
    %v2690 = vpop.permute.xlu0 %2689
    %2691 = vrot.lane.b32.xlu0 %v2674, 96
    %v2692 = vpop.permute.xlu0 %2691
    %2693 = vrot.lane.b32.xlu0 %v2675, 96
    %v2694 = vpop.permute.xlu0 %2693
    %2695 = vrot.lane.b32.xlu0 %v2676, 96
    %v2696 = vpop.permute.xlu0 %2695
    %2697 = vrot.lane.b32.xlu0 %v2677, 96
    %v2698 = vpop.permute.xlu0 %2697
    %2699 = vrot.lane.b32.xlu0 %v2678, 96
    %v2700 = vpop.permute.xlu0 %2699
    %2701 = vrot.lane.b32.xlu0 %v2679, 96
    %v2702 = vpop.permute.xlu0 %2701
    %2703 = vrot.lane.b32.xlu0 %v2680, 96
    %v2704 = vpop.permute.xlu0 %2703
    %v2713 = vadd.f32 %v1182, %v2690
    %v2714 = vadd.f32 %v1184, %v2690
    %v2715 = vadd.f32 %v1188, %v2692
    %v2716 = vadd.f32 %v1190, %v2692
    %v2717 = vadd.f32 %v1194, %v2694
    %v2718 = vadd.f32 %v1196, %v2694
    %v2719 = vadd.f32 %v1200, %v2696
    %v2720 = vadd.f32 %v1202, %v2696
    %v2721 = vadd.f32 %v1206, %v2698
    %v2722 = vadd.f32 %v1208, %v2698
    %v2723 = vadd.f32 %v1212, %v2700
    %v2724 = vadd.f32 %v1214, %v2700
    %v2725 = vadd.f32 %v1218, %v2702
    %v2726 = vadd.f32 %v1220, %v2702
    %v2727 = vadd.f32 %v1224, %v2704
    %v2728 = vadd.f32 %v1226, %v2704
    %v2729 = vtanh.pop %v2713
    %v2730 = vtanh.pop %v2714
    %v2731 = vtanh.pop %v2715
    %v2732 = vtanh.pop %v2716
    %v2733 = vtanh.pop %v2717
    %v2734 = vtanh.pop %v2718
    %v2735 = vtanh.pop %v2719
    %v2736 = vtanh.pop %v2720
    %v2737 = vtanh.pop %v2721
    %v2738 = vtanh.pop %v2722
    %v2739 = vtanh.pop %v2723
    %v2740 = vtanh.pop %v2724
    %v2741 = vtanh.pop %v2725
    %v2742 = vtanh.pop %v2726
    %v2743 = vtanh.pop %v2727
    %v2744 = vtanh.pop %v2728
    %v2745 = vsub.f32 1.0, %v2602
    %v2746 = vsub.f32 1.0, %v2604
    %v2747 = vsub.f32 1.0, %v2606
    %v2748 = vsub.f32 1.0, %v2608
    %v2749 = vsub.f32 1.0, %v2610
    %v2750 = vsub.f32 1.0, %v2612
    %v2751 = vsub.f32 1.0, %v2614
    %v2752 = vsub.f32 1.0, %v2616
    %2769 = vrot.lane.b32.xlu0 %v2729, 80
    %v2770 = vpop.permute.xlu0 %2769
    %2771 = vrot.lane.b32.xlu0 %v2730, 80
    %v2772 = vpop.permute.xlu0 %2771
    %2773 = vrot.lane.b32.xlu0 %v2731, 80
    %v2774 = vpop.permute.xlu0 %2773
    %2775 = vrot.lane.b32.xlu0 %v2732, 80
    %v2776 = vpop.permute.xlu0 %2775
    %2777 = vrot.lane.b32.xlu0 %v2733, 80
    %v2778 = vpop.permute.xlu0 %2777
    %2779 = vrot.lane.b32.xlu0 %v2734, 80
    %v2780 = vpop.permute.xlu0 %2779
    %2781 = vrot.lane.b32.xlu0 %v2735, 80
    %v2782 = vpop.permute.xlu0 %2781
    %2783 = vrot.lane.b32.xlu0 %v2736, 80
    %v2784 = vpop.permute.xlu0 %2783
    %2785 = vrot.lane.b32.xlu0 %v2737, 80
    %v2786 = vpop.permute.xlu0 %2785
    %2787 = vrot.lane.b32.xlu0 %v2738, 80
    %v2788 = vpop.permute.xlu0 %2787
    %2789 = vrot.lane.b32.xlu0 %v2739, 80
    %v2790 = vpop.permute.xlu0 %2789
    %2791 = vrot.lane.b32.xlu0 %v2740, 80
    %v2792 = vpop.permute.xlu0 %2791
    %2793 = vrot.lane.b32.xlu0 %v2741, 80
    %v2794 = vpop.permute.xlu0 %2793
    %2795 = vrot.lane.b32.xlu0 %v2742, 80
    %v2796 = vpop.permute.xlu0 %2795
    %2797 = vrot.lane.b32.xlu0 %v2743, 80
    %v2798 = vpop.permute.xlu0 %2797
    %2799 = vrot.lane.b32.xlu0 %v2744, 80
    %v2800 = vpop.permute.xlu0 %2799
    %v2801 = vsel %vm1584, %v2770, %v2772
    %v2802 = vsel %vm1584, %v2774, %v2776
    %v2803 = vsel %vm1584, %v2778, %v2780
    %v2804 = vsel %vm1584, %v2782, %v2784
    %v2805 = vsel %vm1584, %v2786, %v2788
    %v2806 = vsel %vm1584, %v2790, %v2792
    %v2807 = vsel %vm1584, %v2794, %v2796
    %v2808 = vsel %vm1584, %v2798, %v2800
    %v2817 = vmul.f32 %v2745, %v2801
    %v2818 = vmul.f32 %v2746, %v2802
    %v2819 = vmul.f32 %v2747, %v2803
    %v2820 = vmul.f32 %v2748, %v2804
    %v2821 = vmul.f32 %v2749, %v2805
    %v2822 = vmul.f32 %v2750, %v2806
    %v2823 = vmul.f32 %v2751, %v2807
    %v2824 = vmul.f32 %v2752, %v2808
    %v2825 = vrot.slane %v2440, 7
    %v2826 = vrot.slane %v2441, 7
    %v2827 = vrot.slane %v2442, 7
    %v2828 = vrot.slane %v2444, 7
    %v2829 = vrot.slane %v2445, 7
    %v2830 = vrot.slane %v2446, 7
    %v2831 = vrot.slane %v2447, 7
    %v2840 = vmul.f32 %v2602, %v2825
    %v2841 = vmul.f32 %v2604, %v2826
    %v2842 = vmul.f32 %v2606, %v2827
    %v2843 = vmul.f32 %v2608, %v2460
    %v2844 = vmul.f32 %v2610, %v2828
    %v2845 = vmul.f32 %v2612, %v2829
    %v2846 = vmul.f32 %v2614, %v2830
    %v2847 = vmul.f32 %v2616, %v2831
    %v2848 = vadd.f32 %v2817, %v2840
    %v2849 = vadd.f32 %v2818, %v2841
    %v2850 = vadd.f32 %v2819, %v2842
    %v2851 = vadd.f32 %v2820, %v2843
    %v2852 = vadd.f32 %v2821, %v2844
    %v2853 = vadd.f32 %v2822, %v2845
    %v2854 = vadd.f32 %v2823, %v2846
    %v2855 = vadd.f32 %v2824, %v2847
    %v2864 = vrot.slane %v2848, 3
    %v2865 = vrot.slane %v2849, 2
    %v2866 = vsel %vm1634, %v2865, %v2864
    %v2867 = vrot.slane %v2850, 1
    %v2868 = vsel %vm1637, %v2867, %v2866
    %v2869 = vsel %vm1640, %v2851, %v2868
    %v2870 = vrot.slane %v2852, 7
    %v2871 = vsel %vm1643, %v2870, %v2869
    %v2872 = vrot.slane %v2853, 6
    %v2873 = vsel %vm1646, %v2872, %v2871
    %v2874 = vrot.slane %v2854, 5
    %v2875 = vsel %vm1649, %v2874, %v2873
    %v2876 = vrot.slane %v2855, 4
    %v2877 = vsel %vm1652, %v2876, %v2875
    %2878 = vrot.lane.b32.xlu0 %v2877, 80
    %v2879 = vpop.permute.xlu0 %2878
    %v2880 = vsel %vm1090, %v2879, 0
    %2882 = vmatprep.subr.mxu0 %v1230
    %2883 = vmatpush1.msra.mxu0 %v1229
    %2884 = vmatprep.subr.mxu0 %v1232
    %2885 = vmatpush1.msra.mxu0 %v1231
    %2886 = vmatprep.subr.mxu0 %v1234
    %2887 = vmatpush1.msra.mxu0 %v1233
    %2888 = vmatprep.subr.mxu0 %v1236
    %2889 = vmatpush1.msra.mxu0 %v1235
    %2890 = vmatprep.subr.mxu0 %v1238
    %2891 = vmatpush1.msra.mxu0 %v1237
    %2892 = vmatprep.subr.mxu0 %v1240
    %2893 = vmatpush1.msra.mxu0 %v1239
    %2894 = vmatprep.subr.mxu0 0.0
    %2895 = vmatpush1.msra.mxu0 0.0
    %2896 = vmatprep.subr.mxu0 0.0
    %2897 = vmatpush1.msra.mxu0 0.0
    %2898 = vmatprep.subr.mxu0 0.0
    %2899 = vmatpush1.msra.mxu0 0.0
    %2900 = vmatprep.subr.mxu0 0.0
    %2901 = vmatpush1.msra.mxu0 0.0
    %2902 = vmatprep.subr.mxu0 0.0
    %2903 = vmatpush1.msra.mxu0 0.0
    %2904 = vmatprep.subr.mxu0 0.0
    %2905 = vmatpush1.msra.mxu0 0.0
    %2906 = vmatprep.subr.mxu0 0.0
    %2907 = vmatpush1.msra.mxu0 0.0
    %2908 = vmatprep.subr.mxu0 0.0
    %2909 = vmatpush1.msra.mxu0 0.0
    %2910 = vmatprep.subr.mxu0 0.0
    %2911 = vmatpush1.msra.mxu0 0.0
    %2912 = vmatprep.subr.mxu0 0.0
    %2913 = vmatpush1.msra.mxu0 0.0
    %2914 = vmatprep.subr.mxu0 0.0
    %2915 = vmatpush1.msra.mxu0 0.0
    %2916 = vmatprep.subr.mxu0 0.0
    %2917 = vmatpush1.msra.mxu0 0.0
    %2918 = vmatprep.subr.mxu0 0.0
    %2919 = vmatpush1.msra.mxu0 0.0
    %2920 = vmatprep.subr.mxu0 0.0
    %2921 = vmatpush1.msra.mxu0 0.0
    %2922 = vmatprep.subr.mxu0 0.0
    %2923 = vmatpush1.msra.mxu0 0.0
    %2924 = vmatprep.subr.mxu0 0.0
    %2925 = vmatpush1.msra.mxu0 0.0
    %2926 = vmatprep.subr.mxu0 0.0
    %2927 = vmatpush1.msra.mxu0 0.0
    %2928 = vmatprep.subr.mxu0 0.0
    %2929 = vmatpush1.msra.mxu0 0.0
    %2930 = vmatprep.subr.mxu0 0.0
    %2931 = vmatpush1.msra.mxu0 0.0
    %2932 = vmatprep.subr.mxu0 0.0
    %2933 = vmatpush1.msra.mxu0 0.0
    %2934 = vmatprep.subr.mxu0 0.0
    %2935 = vmatpush1.msra.mxu0 0.0
    %2936 = vmatprep.subr.mxu0 0.0
    %2937 = vmatpush1.msra.mxu0 0.0
    %2938 = vmatprep.subr.mxu0 0.0
    %2939 = vmatpush1.msra.mxu0 0.0
    %2940 = vmatprep.subr.mxu0 0.0
    %2941 = vmatpush1.msra.mxu0 0.0
    %2942 = vmatprep.subr.mxu0 0.0
    %2943 = vmatpush1.msra.mxu0 0.0
    %2944 = vmatprep.subr.mxu0 0.0
    %2945 = vmatpush1.msra.mxu0 0.0
    %2946 = vmatprep.mubr.f32.mxu0 0.0
    %2947 = vmatmul.mubr.f32.gmra.mrb[0].mxu0 %v2880
    %v2948 = vpop.f32.mrb[0].mxu0
    %v2949 = vadd.f32 %v1247, %v2948
    %v2950 = vpop.f32.mrb[0].mxu0
    %v2951 = vadd.f32 %v1251, %v2950
    %2952 = vdwg.mxu0
    %v2954 = vrot.slane %v2949, 4
    %v2955 = vrot.slane %v2949, 5
    %v2956 = vrot.slane %v2949, 6
    %v2957 = vrot.slane %v2949, 7
    %v2958 = vrot.slane %v2949, 1
    %v2959 = vrot.slane %v2949, 2
    %v2960 = vrot.slane %v2949, 3
    %v2969 = vadd.f32 %v1182, %v2954
    %v2970 = vadd.f32 %v1188, %v2955
    %v2971 = vadd.f32 %v1194, %v2956
    %v2972 = vadd.f32 %v1200, %v2957
    %v2973 = vadd.f32 %v1206, %v2949
    %v2974 = vadd.f32 %v1212, %v2958
    %v2975 = vadd.f32 %v1218, %v2959
    %v2976 = vadd.f32 %v1224, %v2960
    %v2977 = vxor.u32 %v2969, 2147483648
    %v2978 = vxor.u32 %v2970, 2147483648
    %v2979 = vxor.u32 %v2971, 2147483648
    %v2980 = vxor.u32 %v2972, 2147483648
    %v2981 = vxor.u32 %v2973, 2147483648
    %v2982 = vxor.u32 %v2974, 2147483648
    %v2983 = vxor.u32 %v2975, 2147483648
    %v2984 = vxor.u32 %v2976, 2147483648
    %v2985 = vmul.f32 %v2977, 1.442695
    %v2986 = vpow.pop %v2985
    %v2987 = vmul.f32 %v2978, 1.442695
    %v2988 = vpow.pop %v2987
    %v2989 = vmul.f32 %v2979, 1.442695
    %v2990 = vpow.pop %v2989
    %v2991 = vmul.f32 %v2980, 1.442695
    %v2992 = vpow.pop %v2991
    %v2993 = vmul.f32 %v2981, 1.442695
    %v2994 = vpow.pop %v2993
    %v2995 = vmul.f32 %v2982, 1.442695
    %v2996 = vpow.pop %v2995
    %v2997 = vmul.f32 %v2983, 1.442695
    %v2998 = vpow.pop %v2997
    %v2999 = vmul.f32 %v2984, 1.442695
    %v3000 = vpow.pop %v2999
    %v3001 = vadd.f32 %v2986, 1.0
    %v3002 = vadd.f32 %v2988, 1.0
    %v3003 = vadd.f32 %v2990, 1.0
    %v3004 = vadd.f32 %v2992, 1.0
    %v3005 = vadd.f32 %v2994, 1.0
    %v3006 = vadd.f32 %v2996, 1.0
    %v3007 = vadd.f32 %v2998, 1.0
    %v3008 = vadd.f32 %v3000, 1.0
    %v3009 = vrcp.pop %v3001
    %v3010 = vmul.f32 1.0, %v3009
    %v3011 = vrcp.pop %v3002
    %v3012 = vmul.f32 1.0, %v3011
    %v3013 = vrcp.pop %v3003
    %v3014 = vmul.f32 1.0, %v3013
    %v3015 = vrcp.pop %v3004
    %v3016 = vmul.f32 1.0, %v3015
    %v3017 = vrcp.pop %v3005
    %v3018 = vmul.f32 1.0, %v3017
    %v3019 = vrcp.pop %v3006
    %v3020 = vmul.f32 1.0, %v3019
    %v3021 = vrcp.pop %v3007
    %v3022 = vmul.f32 1.0, %v3021
    %v3023 = vrcp.pop %v3008
    %v3024 = vmul.f32 1.0, %v3023
    %v3026 = vrot.slane %v2951, 4
    %v3027 = vrot.slane %v2951, 5
    %v3028 = vrot.slane %v2951, 6
    %v3029 = vrot.slane %v2951, 7
    %v3030 = vrot.slane %v2951, 1
    %v3031 = vrot.slane %v2951, 2
    %v3032 = vrot.slane %v2951, 3
    %3033 = vrot.lane.b32.xlu0 %v2954, 32
    %v3034 = vpop.permute.xlu0 %3033
    %3035 = vrot.lane.b32.xlu0 %v3026, 32
    %v3036 = vpop.permute.xlu0 %3035
    %3037 = vrot.lane.b32.xlu0 %v2955, 32
    %v3038 = vpop.permute.xlu0 %3037
    %3039 = vrot.lane.b32.xlu0 %v3027, 32
    %v3040 = vpop.permute.xlu0 %3039
    %3041 = vrot.lane.b32.xlu0 %v2956, 32
    %v3042 = vpop.permute.xlu0 %3041
    %3043 = vrot.lane.b32.xlu0 %v3028, 32
    %v3044 = vpop.permute.xlu0 %3043
    %3045 = vrot.lane.b32.xlu0 %v2957, 32
    %v3046 = vpop.permute.xlu0 %3045
    %3047 = vrot.lane.b32.xlu0 %v3029, 32
    %v3048 = vpop.permute.xlu0 %3047
    %3049 = vrot.lane.b32.xlu0 %v2949, 32
    %v3050 = vpop.permute.xlu0 %3049
    %3051 = vrot.lane.b32.xlu0 %v2951, 32
    %v3052 = vpop.permute.xlu0 %3051
    %3053 = vrot.lane.b32.xlu0 %v2958, 32
    %v3054 = vpop.permute.xlu0 %3053
    %3055 = vrot.lane.b32.xlu0 %v3030, 32
    %v3056 = vpop.permute.xlu0 %3055
    %3057 = vrot.lane.b32.xlu0 %v2959, 32
    %v3058 = vpop.permute.xlu0 %3057
    %3059 = vrot.lane.b32.xlu0 %v3031, 32
    %v3060 = vpop.permute.xlu0 %3059
    %3061 = vrot.lane.b32.xlu0 %v2960, 32
    %v3062 = vpop.permute.xlu0 %3061
    %3063 = vrot.lane.b32.xlu0 %v3032, 32
    %v3064 = vpop.permute.xlu0 %3063
    %v3065 = vsel %vm1057, %v3034, %v3036
    %v3066 = vsel %vm1057, %v3038, %v3040
    %v3067 = vsel %vm1057, %v3042, %v3044
    %v3068 = vsel %vm1057, %v3046, %v3048
    %v3069 = vsel %vm1057, %v3050, %v3052
    %v3070 = vsel %vm1057, %v3054, %v3056
    %v3071 = vsel %vm1057, %v3058, %v3060
    %v3072 = vsel %vm1057, %v3062, %v3064
    %v3081 = vmul.f32 %v3010, %v3065
    %v3082 = vmul.f32 %v3012, %v3066
    %v3083 = vmul.f32 %v3014, %v3067
    %v3084 = vmul.f32 %v3016, %v3068
    %v3085 = vmul.f32 %v3018, %v3069
    %v3086 = vmul.f32 %v3020, %v3070
    %v3087 = vmul.f32 %v3022, %v3071
    %v3088 = vmul.f32 %v3024, %v3072
    %3097 = vrot.lane.b32.xlu0 %v3081, 96
    %v3098 = vpop.permute.xlu0 %3097
    %3099 = vrot.lane.b32.xlu0 %v3082, 96
    %v3100 = vpop.permute.xlu0 %3099
    %3101 = vrot.lane.b32.xlu0 %v3083, 96
    %v3102 = vpop.permute.xlu0 %3101
    %3103 = vrot.lane.b32.xlu0 %v3084, 96
    %v3104 = vpop.permute.xlu0 %3103
    %3105 = vrot.lane.b32.xlu0 %v3085, 96
    %v3106 = vpop.permute.xlu0 %3105
    %3107 = vrot.lane.b32.xlu0 %v3086, 96
    %v3108 = vpop.permute.xlu0 %3107
    %3109 = vrot.lane.b32.xlu0 %v3087, 96
    %v3110 = vpop.permute.xlu0 %3109
    %3111 = vrot.lane.b32.xlu0 %v3088, 96
    %v3112 = vpop.permute.xlu0 %3111
    %v3121 = vadd.f32 %v1182, %v3098
    %v3122 = vadd.f32 %v1184, %v3098
    %v3123 = vadd.f32 %v1188, %v3100
    %v3124 = vadd.f32 %v1190, %v3100
    %v3125 = vadd.f32 %v1194, %v3102
    %v3126 = vadd.f32 %v1196, %v3102
    %v3127 = vadd.f32 %v1200, %v3104
    %v3128 = vadd.f32 %v1202, %v3104
    %v3129 = vadd.f32 %v1206, %v3106
    %v3130 = vadd.f32 %v1208, %v3106
    %v3131 = vadd.f32 %v1212, %v3108
    %v3132 = vadd.f32 %v1214, %v3108
    %v3133 = vadd.f32 %v1218, %v3110
    %v3134 = vadd.f32 %v1220, %v3110
    %v3135 = vadd.f32 %v1224, %v3112
    %v3136 = vadd.f32 %v1226, %v3112
    %v3137 = vtanh.pop %v3121
    %v3138 = vtanh.pop %v3122
    %v3139 = vtanh.pop %v3123
    %v3140 = vtanh.pop %v3124
    %v3141 = vtanh.pop %v3125
    %v3142 = vtanh.pop %v3126
    %v3143 = vtanh.pop %v3127
    %v3144 = vtanh.pop %v3128
    %v3145 = vtanh.pop %v3129
    %v3146 = vtanh.pop %v3130
    %v3147 = vtanh.pop %v3131
    %v3148 = vtanh.pop %v3132
    %v3149 = vtanh.pop %v3133
    %v3150 = vtanh.pop %v3134
    %v3151 = vtanh.pop %v3135
    %v3152 = vtanh.pop %v3136
    %v3153 = vsub.f32 1.0, %v3010
    %v3154 = vsub.f32 1.0, %v3012
    %v3155 = vsub.f32 1.0, %v3014
    %v3156 = vsub.f32 1.0, %v3016
    %v3157 = vsub.f32 1.0, %v3018
    %v3158 = vsub.f32 1.0, %v3020
    %v3159 = vsub.f32 1.0, %v3022
    %v3160 = vsub.f32 1.0, %v3024
    %3177 = vrot.lane.b32.xlu0 %v3137, 80
    %v3178 = vpop.permute.xlu0 %3177
    %3179 = vrot.lane.b32.xlu0 %v3138, 80
    %v3180 = vpop.permute.xlu0 %3179
    %3181 = vrot.lane.b32.xlu0 %v3139, 80
    %v3182 = vpop.permute.xlu0 %3181
    %3183 = vrot.lane.b32.xlu0 %v3140, 80
    %v3184 = vpop.permute.xlu0 %3183
    %3185 = vrot.lane.b32.xlu0 %v3141, 80
    %v3186 = vpop.permute.xlu0 %3185
    %3187 = vrot.lane.b32.xlu0 %v3142, 80
    %v3188 = vpop.permute.xlu0 %3187
    %3189 = vrot.lane.b32.xlu0 %v3143, 80
    %v3190 = vpop.permute.xlu0 %3189
    %3191 = vrot.lane.b32.xlu0 %v3144, 80
    %v3192 = vpop.permute.xlu0 %3191
    %3193 = vrot.lane.b32.xlu0 %v3145, 80
    %v3194 = vpop.permute.xlu0 %3193
    %3195 = vrot.lane.b32.xlu0 %v3146, 80
    %v3196 = vpop.permute.xlu0 %3195
    %3197 = vrot.lane.b32.xlu0 %v3147, 80
    %v3198 = vpop.permute.xlu0 %3197
    %3199 = vrot.lane.b32.xlu0 %v3148, 80
    %v3200 = vpop.permute.xlu0 %3199
    %3201 = vrot.lane.b32.xlu0 %v3149, 80
    %v3202 = vpop.permute.xlu0 %3201
    %3203 = vrot.lane.b32.xlu0 %v3150, 80
    %v3204 = vpop.permute.xlu0 %3203
    %3205 = vrot.lane.b32.xlu0 %v3151, 80
    %v3206 = vpop.permute.xlu0 %3205
    %3207 = vrot.lane.b32.xlu0 %v3152, 80
    %v3208 = vpop.permute.xlu0 %3207
    %v3209 = vsel %vm1584, %v3178, %v3180
    %v3210 = vsel %vm1584, %v3182, %v3184
    %v3211 = vsel %vm1584, %v3186, %v3188
    %v3212 = vsel %vm1584, %v3190, %v3192
    %v3213 = vsel %vm1584, %v3194, %v3196
    %v3214 = vsel %vm1584, %v3198, %v3200
    %v3215 = vsel %vm1584, %v3202, %v3204
    %v3216 = vsel %vm1584, %v3206, %v3208
    %v3225 = vmul.f32 %v3153, %v3209
    %v3226 = vmul.f32 %v3154, %v3210
    %v3227 = vmul.f32 %v3155, %v3211
    %v3228 = vmul.f32 %v3156, %v3212
    %v3229 = vmul.f32 %v3157, %v3213
    %v3230 = vmul.f32 %v3158, %v3214
    %v3231 = vmul.f32 %v3159, %v3215
    %v3232 = vmul.f32 %v3160, %v3216
    %v3233 = vrot.slane %v2848, 7
    %v3234 = vrot.slane %v2849, 7
    %v3235 = vrot.slane %v2850, 7
    %v3236 = vrot.slane %v2851, 7
    %v3237 = vrot.slane %v2853, 7
    %v3238 = vrot.slane %v2854, 7
    %v3239 = vrot.slane %v2855, 7
    %v3248 = vmul.f32 %v3010, %v3233
    %v3249 = vmul.f32 %v3012, %v3234
    %v3250 = vmul.f32 %v3014, %v3235
    %v3251 = vmul.f32 %v3016, %v3236
    %v3252 = vmul.f32 %v3018, %v2870
    %v3253 = vmul.f32 %v3020, %v3237
    %v3254 = vmul.f32 %v3022, %v3238
    %v3255 = vmul.f32 %v3024, %v3239
    %v3256 = vadd.f32 %v3225, %v3248
    %v3257 = vadd.f32 %v3226, %v3249
    %v3258 = vadd.f32 %v3227, %v3250
    %v3259 = vadd.f32 %v3228, %v3251
    %v3260 = vadd.f32 %v3229, %v3252
    %v3261 = vadd.f32 %v3230, %v3253
    %v3262 = vadd.f32 %v3231, %v3254
    %v3263 = vadd.f32 %v3232, %v3255
    %v3272 = vrot.slane %v3256, 4
    %v3273 = vrot.slane %v3257, 3
    %v3274 = vsel %vm1634, %v3273, %v3272
    %v3275 = vrot.slane %v3258, 2
    %v3276 = vsel %vm1637, %v3275, %v3274
    %v3277 = vrot.slane %v3259, 1
    %v3278 = vsel %vm1640, %v3277, %v3276
    %v3279 = vsel %vm1643, %v3260, %v3278
    %v3280 = vrot.slane %v3261, 7
    %v3281 = vsel %vm1646, %v3280, %v3279
    %v3282 = vrot.slane %v3262, 6
    %v3283 = vsel %vm1649, %v3282, %v3281
    %v3284 = vrot.slane %v3263, 5
    %v3285 = vsel %vm1652, %v3284, %v3283
    %3286 = vrot.lane.b32.xlu0 %v3285, 80
    %v3287 = vpop.permute.xlu0 %3286
    %v3288 = vsel %vm1090, %v3287, 0
    %3290 = vmatprep.subr.mxu0 %v1230
    %3291 = vmatpush1.msra.mxu0 %v1229
    %3292 = vmatprep.subr.mxu0 %v1232
    %3293 = vmatpush1.msra.mxu0 %v1231
    %3294 = vmatprep.subr.mxu0 %v1234
    %3295 = vmatpush1.msra.mxu0 %v1233
    %3296 = vmatprep.subr.mxu0 %v1236
    %3297 = vmatpush1.msra.mxu0 %v1235
    %3298 = vmatprep.subr.mxu0 %v1238
    %3299 = vmatpush1.msra.mxu0 %v1237
    %3300 = vmatprep.subr.mxu0 %v1240
    %3301 = vmatpush1.msra.mxu0 %v1239
    %3302 = vmatprep.subr.mxu0 0.0
    %3303 = vmatpush1.msra.mxu0 0.0
    %3304 = vmatprep.subr.mxu0 0.0
    %3305 = vmatpush1.msra.mxu0 0.0
    %3306 = vmatprep.subr.mxu0 0.0
    %3307 = vmatpush1.msra.mxu0 0.0
    %3308 = vmatprep.subr.mxu0 0.0
    %3309 = vmatpush1.msra.mxu0 0.0
    %3310 = vmatprep.subr.mxu0 0.0
    %3311 = vmatpush1.msra.mxu0 0.0
    %3312 = vmatprep.subr.mxu0 0.0
    %3313 = vmatpush1.msra.mxu0 0.0
    %3314 = vmatprep.subr.mxu0 0.0
    %3315 = vmatpush1.msra.mxu0 0.0
    %3316 = vmatprep.subr.mxu0 0.0
    %3317 = vmatpush1.msra.mxu0 0.0
    %3318 = vmatprep.subr.mxu0 0.0
    %3319 = vmatpush1.msra.mxu0 0.0
    %3320 = vmatprep.subr.mxu0 0.0
    %3321 = vmatpush1.msra.mxu0 0.0
    %3322 = vmatprep.subr.mxu0 0.0
    %3323 = vmatpush1.msra.mxu0 0.0
    %3324 = vmatprep.subr.mxu0 0.0
    %3325 = vmatpush1.msra.mxu0 0.0
    %3326 = vmatprep.subr.mxu0 0.0
    %3327 = vmatpush1.msra.mxu0 0.0
    %3328 = vmatprep.subr.mxu0 0.0
    %3329 = vmatpush1.msra.mxu0 0.0
    %3330 = vmatprep.subr.mxu0 0.0
    %3331 = vmatpush1.msra.mxu0 0.0
    %3332 = vmatprep.subr.mxu0 0.0
    %3333 = vmatpush1.msra.mxu0 0.0
    %3334 = vmatprep.subr.mxu0 0.0
    %3335 = vmatpush1.msra.mxu0 0.0
    %3336 = vmatprep.subr.mxu0 0.0
    %3337 = vmatpush1.msra.mxu0 0.0
    %3338 = vmatprep.subr.mxu0 0.0
    %3339 = vmatpush1.msra.mxu0 0.0
    %3340 = vmatprep.subr.mxu0 0.0
    %3341 = vmatpush1.msra.mxu0 0.0
    %3342 = vmatprep.subr.mxu0 0.0
    %3343 = vmatpush1.msra.mxu0 0.0
    %3344 = vmatprep.subr.mxu0 0.0
    %3345 = vmatpush1.msra.mxu0 0.0
    %3346 = vmatprep.subr.mxu0 0.0
    %3347 = vmatpush1.msra.mxu0 0.0
    %3348 = vmatprep.subr.mxu0 0.0
    %3349 = vmatpush1.msra.mxu0 0.0
    %3350 = vmatprep.subr.mxu0 0.0
    %3351 = vmatpush1.msra.mxu0 0.0
    %3352 = vmatprep.subr.mxu0 0.0
    %3353 = vmatpush1.msra.mxu0 0.0
    %3354 = vmatprep.mubr.f32.mxu0 0.0
    %3355 = vmatmul.mubr.f32.gmra.mrb[0].mxu0 %v3288
    %v3356 = vpop.f32.mrb[0].mxu0
    %v3357 = vadd.f32 %v1247, %v3356
    %v3358 = vpop.f32.mrb[0].mxu0
    %v3359 = vadd.f32 %v1251, %v3358
    %3360 = vdwg.mxu0
    %v3362 = vrot.slane %v3357, 3
    %v3363 = vrot.slane %v3357, 4
    %v3364 = vrot.slane %v3357, 5
    %v3365 = vrot.slane %v3357, 6
    %v3366 = vrot.slane %v3357, 7
    %v3367 = vrot.slane %v3357, 1
    %v3368 = vrot.slane %v3357, 2
    %v3377 = vadd.f32 %v1182, %v3362
    %v3378 = vadd.f32 %v1188, %v3363
    %v3379 = vadd.f32 %v1194, %v3364
    %v3380 = vadd.f32 %v1200, %v3365
    %v3381 = vadd.f32 %v1206, %v3366
    %v3382 = vadd.f32 %v1212, %v3357
    %v3383 = vadd.f32 %v1218, %v3367
    %v3384 = vadd.f32 %v1224, %v3368
    %v3385 = vxor.u32 %v3377, 2147483648
    %v3386 = vxor.u32 %v3378, 2147483648
    %v3387 = vxor.u32 %v3379, 2147483648
    %v3388 = vxor.u32 %v3380, 2147483648
    %v3389 = vxor.u32 %v3381, 2147483648
    %v3390 = vxor.u32 %v3382, 2147483648
    %v3391 = vxor.u32 %v3383, 2147483648
    %v3392 = vxor.u32 %v3384, 2147483648
    %v3393 = vmul.f32 %v3385, 1.442695
    %v3394 = vpow.pop %v3393
    %v3395 = vmul.f32 %v3386, 1.442695
    %v3396 = vpow.pop %v3395
    %v3397 = vmul.f32 %v3387, 1.442695
    %v3398 = vpow.pop %v3397
    %v3399 = vmul.f32 %v3388, 1.442695
    %v3400 = vpow.pop %v3399
    %v3401 = vmul.f32 %v3389, 1.442695
    %v3402 = vpow.pop %v3401
    %v3403 = vmul.f32 %v3390, 1.442695
    %v3404 = vpow.pop %v3403
    %v3405 = vmul.f32 %v3391, 1.442695
    %v3406 = vpow.pop %v3405
    %v3407 = vmul.f32 %v3392, 1.442695
    %v3408 = vpow.pop %v3407
    %v3409 = vadd.f32 %v3394, 1.0
    %v3410 = vadd.f32 %v3396, 1.0
    %v3411 = vadd.f32 %v3398, 1.0
    %v3412 = vadd.f32 %v3400, 1.0
    %v3413 = vadd.f32 %v3402, 1.0
    %v3414 = vadd.f32 %v3404, 1.0
    %v3415 = vadd.f32 %v3406, 1.0
    %v3416 = vadd.f32 %v3408, 1.0
    %v3417 = vrcp.pop %v3409
    %v3418 = vmul.f32 1.0, %v3417
    %v3419 = vrcp.pop %v3410
    %v3420 = vmul.f32 1.0, %v3419
    %v3421 = vrcp.pop %v3411
    %v3422 = vmul.f32 1.0, %v3421
    %v3423 = vrcp.pop %v3412
    %v3424 = vmul.f32 1.0, %v3423
    %v3425 = vrcp.pop %v3413
    %v3426 = vmul.f32 1.0, %v3425
    %v3427 = vrcp.pop %v3414
    %v3428 = vmul.f32 1.0, %v3427
    %v3429 = vrcp.pop %v3415
    %v3430 = vmul.f32 1.0, %v3429
    %v3431 = vrcp.pop %v3416
    %v3432 = vmul.f32 1.0, %v3431
    %v3434 = vrot.slane %v3359, 3
    %v3435 = vrot.slane %v3359, 4
    %v3436 = vrot.slane %v3359, 5
    %v3437 = vrot.slane %v3359, 6
    %v3438 = vrot.slane %v3359, 7
    %v3439 = vrot.slane %v3359, 1
    %v3440 = vrot.slane %v3359, 2
    %3441 = vrot.lane.b32.xlu0 %v3362, 32
    %v3442 = vpop.permute.xlu0 %3441
    %3443 = vrot.lane.b32.xlu0 %v3434, 32
    %v3444 = vpop.permute.xlu0 %3443
    %3445 = vrot.lane.b32.xlu0 %v3363, 32
    %v3446 = vpop.permute.xlu0 %3445
    %3447 = vrot.lane.b32.xlu0 %v3435, 32
    %v3448 = vpop.permute.xlu0 %3447
    %3449 = vrot.lane.b32.xlu0 %v3364, 32
    %v3450 = vpop.permute.xlu0 %3449
    %3451 = vrot.lane.b32.xlu0 %v3436, 32
    %v3452 = vpop.permute.xlu0 %3451
    %3453 = vrot.lane.b32.xlu0 %v3365, 32
    %v3454 = vpop.permute.xlu0 %3453
    %3455 = vrot.lane.b32.xlu0 %v3437, 32
    %v3456 = vpop.permute.xlu0 %3455
    %3457 = vrot.lane.b32.xlu0 %v3366, 32
    %v3458 = vpop.permute.xlu0 %3457
    %3459 = vrot.lane.b32.xlu0 %v3438, 32
    %v3460 = vpop.permute.xlu0 %3459
    %3461 = vrot.lane.b32.xlu0 %v3357, 32
    %v3462 = vpop.permute.xlu0 %3461
    %3463 = vrot.lane.b32.xlu0 %v3359, 32
    %v3464 = vpop.permute.xlu0 %3463
    %3465 = vrot.lane.b32.xlu0 %v3367, 32
    %v3466 = vpop.permute.xlu0 %3465
    %3467 = vrot.lane.b32.xlu0 %v3439, 32
    %v3468 = vpop.permute.xlu0 %3467
    %3469 = vrot.lane.b32.xlu0 %v3368, 32
    %v3470 = vpop.permute.xlu0 %3469
    %3471 = vrot.lane.b32.xlu0 %v3440, 32
    %v3472 = vpop.permute.xlu0 %3471
    %v3473 = vsel %vm1057, %v3442, %v3444
    %v3474 = vsel %vm1057, %v3446, %v3448
    %v3475 = vsel %vm1057, %v3450, %v3452
    %v3476 = vsel %vm1057, %v3454, %v3456
    %v3477 = vsel %vm1057, %v3458, %v3460
    %v3478 = vsel %vm1057, %v3462, %v3464
    %v3479 = vsel %vm1057, %v3466, %v3468
    %v3480 = vsel %vm1057, %v3470, %v3472
    %v3489 = vmul.f32 %v3418, %v3473
    %v3490 = vmul.f32 %v3420, %v3474
    %v3491 = vmul.f32 %v3422, %v3475
    %v3492 = vmul.f32 %v3424, %v3476
    %v3493 = vmul.f32 %v3426, %v3477
    %v3494 = vmul.f32 %v3428, %v3478
    %v3495 = vmul.f32 %v3430, %v3479
    %v3496 = vmul.f32 %v3432, %v3480
    %3505 = vrot.lane.b32.xlu0 %v3489, 96
    %v3506 = vpop.permute.xlu0 %3505
    %3507 = vrot.lane.b32.xlu0 %v3490, 96
    %v3508 = vpop.permute.xlu0 %3507
    %3509 = vrot.lane.b32.xlu0 %v3491, 96
    %v3510 = vpop.permute.xlu0 %3509
    %3511 = vrot.lane.b32.xlu0 %v3492, 96
    %v3512 = vpop.permute.xlu0 %3511
    %3513 = vrot.lane.b32.xlu0 %v3493, 96
    %v3514 = vpop.permute.xlu0 %3513
    %3515 = vrot.lane.b32.xlu0 %v3494, 96
    %v3516 = vpop.permute.xlu0 %3515
    %3517 = vrot.lane.b32.xlu0 %v3495, 96
    %v3518 = vpop.permute.xlu0 %3517
    %3519 = vrot.lane.b32.xlu0 %v3496, 96
    %v3520 = vpop.permute.xlu0 %3519
    %v3529 = vadd.f32 %v1182, %v3506
    %v3530 = vadd.f32 %v1184, %v3506
    %v3531 = vadd.f32 %v1188, %v3508
    %v3532 = vadd.f32 %v1190, %v3508
    %v3533 = vadd.f32 %v1194, %v3510
    %v3534 = vadd.f32 %v1196, %v3510
    %v3535 = vadd.f32 %v1200, %v3512
    %v3536 = vadd.f32 %v1202, %v3512
    %v3537 = vadd.f32 %v1206, %v3514
    %v3538 = vadd.f32 %v1208, %v3514
    %v3539 = vadd.f32 %v1212, %v3516
    %v3540 = vadd.f32 %v1214, %v3516
    %v3541 = vadd.f32 %v1218, %v3518
    %v3542 = vadd.f32 %v1220, %v3518
    %v3543 = vadd.f32 %v1224, %v3520
    %v3544 = vadd.f32 %v1226, %v3520
    %v3545 = vtanh.pop %v3529
    %v3546 = vtanh.pop %v3530
    %v3547 = vtanh.pop %v3531
    %v3548 = vtanh.pop %v3532
    %v3549 = vtanh.pop %v3533
    %v3550 = vtanh.pop %v3534
    %v3551 = vtanh.pop %v3535
    %v3552 = vtanh.pop %v3536
    %v3553 = vtanh.pop %v3537
    %v3554 = vtanh.pop %v3538
    %v3555 = vtanh.pop %v3539
    %v3556 = vtanh.pop %v3540
    %v3557 = vtanh.pop %v3541
    %v3558 = vtanh.pop %v3542
    %v3559 = vtanh.pop %v3543
    %v3560 = vtanh.pop %v3544
    %v3561 = vsub.f32 1.0, %v3418
    %v3562 = vsub.f32 1.0, %v3420
    %v3563 = vsub.f32 1.0, %v3422
    %v3564 = vsub.f32 1.0, %v3424
    %v3565 = vsub.f32 1.0, %v3426
    %v3566 = vsub.f32 1.0, %v3428
    %v3567 = vsub.f32 1.0, %v3430
    %v3568 = vsub.f32 1.0, %v3432
    %3585 = vrot.lane.b32.xlu0 %v3545, 80
    %v3586 = vpop.permute.xlu0 %3585
    %3587 = vrot.lane.b32.xlu0 %v3546, 80
    %v3588 = vpop.permute.xlu0 %3587
    %3589 = vrot.lane.b32.xlu0 %v3547, 80
    %v3590 = vpop.permute.xlu0 %3589
    %3591 = vrot.lane.b32.xlu0 %v3548, 80
    %v3592 = vpop.permute.xlu0 %3591
    %3593 = vrot.lane.b32.xlu0 %v3549, 80
    %v3594 = vpop.permute.xlu0 %3593
    %3595 = vrot.lane.b32.xlu0 %v3550, 80
    %v3596 = vpop.permute.xlu0 %3595
    %3597 = vrot.lane.b32.xlu0 %v3551, 80
    %v3598 = vpop.permute.xlu0 %3597
    %3599 = vrot.lane.b32.xlu0 %v3552, 80
    %v3600 = vpop.permute.xlu0 %3599
    %3601 = vrot.lane.b32.xlu0 %v3553, 80
    %v3602 = vpop.permute.xlu0 %3601
    %3603 = vrot.lane.b32.xlu0 %v3554, 80
    %v3604 = vpop.permute.xlu0 %3603
    %3605 = vrot.lane.b32.xlu0 %v3555, 80
    %v3606 = vpop.permute.xlu0 %3605
    %3607 = vrot.lane.b32.xlu0 %v3556, 80
    %v3608 = vpop.permute.xlu0 %3607
    %3609 = vrot.lane.b32.xlu0 %v3557, 80
    %v3610 = vpop.permute.xlu0 %3609
    %3611 = vrot.lane.b32.xlu0 %v3558, 80
    %v3612 = vpop.permute.xlu0 %3611
    %3613 = vrot.lane.b32.xlu0 %v3559, 80
    %v3614 = vpop.permute.xlu0 %3613
    %3615 = vrot.lane.b32.xlu0 %v3560, 80
    %v3616 = vpop.permute.xlu0 %3615
    %v3617 = vsel %vm1584, %v3586, %v3588
    %v3618 = vsel %vm1584, %v3590, %v3592
    %v3619 = vsel %vm1584, %v3594, %v3596
    %v3620 = vsel %vm1584, %v3598, %v3600
    %v3621 = vsel %vm1584, %v3602, %v3604
    %v3622 = vsel %vm1584, %v3606, %v3608
    %v3623 = vsel %vm1584, %v3610, %v3612
    %v3624 = vsel %vm1584, %v3614, %v3616
    %v3633 = vmul.f32 %v3561, %v3617
    %v3634 = vmul.f32 %v3562, %v3618
    %v3635 = vmul.f32 %v3563, %v3619
    %v3636 = vmul.f32 %v3564, %v3620
    %v3637 = vmul.f32 %v3565, %v3621
    %v3638 = vmul.f32 %v3566, %v3622
    %v3639 = vmul.f32 %v3567, %v3623
    %v3640 = vmul.f32 %v3568, %v3624
    %v3641 = vrot.slane %v3256, 7
    %v3642 = vrot.slane %v3257, 7
    %v3643 = vrot.slane %v3258, 7
    %v3644 = vrot.slane %v3259, 7
    %v3645 = vrot.slane %v3260, 7
    %v3646 = vrot.slane %v3262, 7
    %v3647 = vrot.slane %v3263, 7
    %v3656 = vmul.f32 %v3418, %v3641
    %v3657 = vmul.f32 %v3420, %v3642
    %v3658 = vmul.f32 %v3422, %v3643
    %v3659 = vmul.f32 %v3424, %v3644
    %v3660 = vmul.f32 %v3426, %v3645
    %v3661 = vmul.f32 %v3428, %v3280
    %v3662 = vmul.f32 %v3430, %v3646
    %v3663 = vmul.f32 %v3432, %v3647
    %v3664 = vadd.f32 %v3633, %v3656
    %v3665 = vadd.f32 %v3634, %v3657
    %v3666 = vadd.f32 %v3635, %v3658
    %v3667 = vadd.f32 %v3636, %v3659
    %v3668 = vadd.f32 %v3637, %v3660
    %v3669 = vadd.f32 %v3638, %v3661
    %v3670 = vadd.f32 %v3639, %v3662
    %v3671 = vadd.f32 %v3640, %v3663
    %v3680 = vrot.slane %v3664, 5
    %v3681 = vrot.slane %v3665, 4
    %v3682 = vsel %vm1634, %v3681, %v3680
    %v3683 = vrot.slane %v3666, 3
    %v3684 = vsel %vm1637, %v3683, %v3682
    %v3685 = vrot.slane %v3667, 2
    %v3686 = vsel %vm1640, %v3685, %v3684
    %v3687 = vrot.slane %v3668, 1
    %v3688 = vsel %vm1643, %v3687, %v3686
    %v3689 = vsel %vm1646, %v3669, %v3688
    %v3690 = vrot.slane %v3670, 7
    %v3691 = vsel %vm1649, %v3690, %v3689
    %v3692 = vrot.slane %v3671, 6
    %v3693 = vsel %vm1652, %v3692, %v3691
    %3694 = vrot.lane.b32.xlu0 %v3693, 80
    %v3695 = vpop.permute.xlu0 %3694
    %v3696 = vsel %vm1090, %v3695, 0
    %3698 = vmatprep.subr.mxu0 %v1230
    %3699 = vmatpush1.msra.mxu0 %v1229
    %3700 = vmatprep.subr.mxu0 %v1232
    %3701 = vmatpush1.msra.mxu0 %v1231
    %3702 = vmatprep.subr.mxu0 %v1234
    %3703 = vmatpush1.msra.mxu0 %v1233
    %3704 = vmatprep.subr.mxu0 %v1236
    %3705 = vmatpush1.msra.mxu0 %v1235
    %3706 = vmatprep.subr.mxu0 %v1238
    %3707 = vmatpush1.msra.mxu0 %v1237
    %3708 = vmatprep.subr.mxu0 %v1240
    %3709 = vmatpush1.msra.mxu0 %v1239
    %3710 = vmatprep.subr.mxu0 0.0
    %3711 = vmatpush1.msra.mxu0 0.0
    %3712 = vmatprep.subr.mxu0 0.0
    %3713 = vmatpush1.msra.mxu0 0.0
    %3714 = vmatprep.subr.mxu0 0.0
    %3715 = vmatpush1.msra.mxu0 0.0
    %3716 = vmatprep.subr.mxu0 0.0
    %3717 = vmatpush1.msra.mxu0 0.0
    %3718 = vmatprep.subr.mxu0 0.0
    %3719 = vmatpush1.msra.mxu0 0.0
    %3720 = vmatprep.subr.mxu0 0.0
    %3721 = vmatpush1.msra.mxu0 0.0
    %3722 = vmatprep.subr.mxu0 0.0
    %3723 = vmatpush1.msra.mxu0 0.0
    %3724 = vmatprep.subr.mxu0 0.0
    %3725 = vmatpush1.msra.mxu0 0.0
    %3726 = vmatprep.subr.mxu0 0.0
    %3727 = vmatpush1.msra.mxu0 0.0
    %3728 = vmatprep.subr.mxu0 0.0
    %3729 = vmatpush1.msra.mxu0 0.0
    %3730 = vmatprep.subr.mxu0 0.0
    %3731 = vmatpush1.msra.mxu0 0.0
    %3732 = vmatprep.subr.mxu0 0.0
    %3733 = vmatpush1.msra.mxu0 0.0
    %3734 = vmatprep.subr.mxu0 0.0
    %3735 = vmatpush1.msra.mxu0 0.0
    %3736 = vmatprep.subr.mxu0 0.0
    %3737 = vmatpush1.msra.mxu0 0.0
    %3738 = vmatprep.subr.mxu0 0.0
    %3739 = vmatpush1.msra.mxu0 0.0
    %3740 = vmatprep.subr.mxu0 0.0
    %3741 = vmatpush1.msra.mxu0 0.0
    %3742 = vmatprep.subr.mxu0 0.0
    %3743 = vmatpush1.msra.mxu0 0.0
    %3744 = vmatprep.subr.mxu0 0.0
    %3745 = vmatpush1.msra.mxu0 0.0
    %3746 = vmatprep.subr.mxu0 0.0
    %3747 = vmatpush1.msra.mxu0 0.0
    %3748 = vmatprep.subr.mxu0 0.0
    %3749 = vmatpush1.msra.mxu0 0.0
    %3750 = vmatprep.subr.mxu0 0.0
    %3751 = vmatpush1.msra.mxu0 0.0
    %3752 = vmatprep.subr.mxu0 0.0
    %3753 = vmatpush1.msra.mxu0 0.0
    %3754 = vmatprep.subr.mxu0 0.0
    %3755 = vmatpush1.msra.mxu0 0.0
    %3756 = vmatprep.subr.mxu0 0.0
    %3757 = vmatpush1.msra.mxu0 0.0
    %3758 = vmatprep.subr.mxu0 0.0
    %3759 = vmatpush1.msra.mxu0 0.0
    %3760 = vmatprep.subr.mxu0 0.0
    %3761 = vmatpush1.msra.mxu0 0.0
    %3762 = vmatprep.mubr.f32.mxu0 0.0
    %3763 = vmatmul.mubr.f32.gmra.mrb[0].mxu0 %v3696
    %v3764 = vpop.f32.mrb[0].mxu0
    %v3765 = vadd.f32 %v1247, %v3764
    %v3766 = vpop.f32.mrb[0].mxu0
    %v3767 = vadd.f32 %v1251, %v3766
    %3768 = vdwg.mxu0
    %v3770 = vrot.slane %v3765, 2
    %v3771 = vrot.slane %v3765, 3
    %v3772 = vrot.slane %v3765, 4
    %v3773 = vrot.slane %v3765, 5
    %v3774 = vrot.slane %v3765, 6
    %v3775 = vrot.slane %v3765, 7
    %v3776 = vrot.slane %v3765, 1
    %v3785 = vadd.f32 %v1182, %v3770
    %v3786 = vadd.f32 %v1188, %v3771
    %v3787 = vadd.f32 %v1194, %v3772
    %v3788 = vadd.f32 %v1200, %v3773
    %v3789 = vadd.f32 %v1206, %v3774
    %v3790 = vadd.f32 %v1212, %v3775
    %v3791 = vadd.f32 %v1218, %v3765
    %v3792 = vadd.f32 %v1224, %v3776
    %v3793 = vxor.u32 %v3785, 2147483648
    %v3794 = vxor.u32 %v3786, 2147483648
    %v3795 = vxor.u32 %v3787, 2147483648
    %v3796 = vxor.u32 %v3788, 2147483648
    %v3797 = vxor.u32 %v3789, 2147483648
    %v3798 = vxor.u32 %v3790, 2147483648
    %v3799 = vxor.u32 %v3791, 2147483648
    %v3800 = vxor.u32 %v3792, 2147483648
    %v3801 = vmul.f32 %v3793, 1.442695
    %v3802 = vpow.pop %v3801
    %v3803 = vmul.f32 %v3794, 1.442695
    %v3804 = vpow.pop %v3803
    %v3805 = vmul.f32 %v3795, 1.442695
    %v3806 = vpow.pop %v3805
    %v3807 = vmul.f32 %v3796, 1.442695
    %v3808 = vpow.pop %v3807
    %v3809 = vmul.f32 %v3797, 1.442695
    %v3810 = vpow.pop %v3809
    %v3811 = vmul.f32 %v3798, 1.442695
    %v3812 = vpow.pop %v3811
    %v3813 = vmul.f32 %v3799, 1.442695
    %v3814 = vpow.pop %v3813
    %v3815 = vmul.f32 %v3800, 1.442695
    %v3816 = vpow.pop %v3815
    %v3817 = vadd.f32 %v3802, 1.0
    %v3818 = vadd.f32 %v3804, 1.0
    %v3819 = vadd.f32 %v3806, 1.0
    %v3820 = vadd.f32 %v3808, 1.0
    %v3821 = vadd.f32 %v3810, 1.0
    %v3822 = vadd.f32 %v3812, 1.0
    %v3823 = vadd.f32 %v3814, 1.0
    %v3824 = vadd.f32 %v3816, 1.0
    %v3825 = vrcp.pop %v3817
    %v3826 = vmul.f32 1.0, %v3825
    %v3827 = vrcp.pop %v3818
    %v3828 = vmul.f32 1.0, %v3827
    %v3829 = vrcp.pop %v3819
    %v3830 = vmul.f32 1.0, %v3829
    %v3831 = vrcp.pop %v3820
    %v3832 = vmul.f32 1.0, %v3831
    %v3833 = vrcp.pop %v3821
    %v3834 = vmul.f32 1.0, %v3833
    %v3835 = vrcp.pop %v3822
    %v3836 = vmul.f32 1.0, %v3835
    %v3837 = vrcp.pop %v3823
    %v3838 = vmul.f32 1.0, %v3837
    %v3839 = vrcp.pop %v3824
    %v3840 = vmul.f32 1.0, %v3839
    %v3842 = vrot.slane %v3767, 2
    %v3843 = vrot.slane %v3767, 3
    %v3844 = vrot.slane %v3767, 4
    %v3845 = vrot.slane %v3767, 5
    %v3846 = vrot.slane %v3767, 6
    %v3847 = vrot.slane %v3767, 7
    %v3848 = vrot.slane %v3767, 1
    %3849 = vrot.lane.b32.xlu0 %v3770, 32
    %v3850 = vpop.permute.xlu0 %3849
    %3851 = vrot.lane.b32.xlu0 %v3842, 32
    %v3852 = vpop.permute.xlu0 %3851
    %3853 = vrot.lane.b32.xlu0 %v3771, 32
    %v3854 = vpop.permute.xlu0 %3853
    %3855 = vrot.lane.b32.xlu0 %v3843, 32
    %v3856 = vpop.permute.xlu0 %3855
    %3857 = vrot.lane.b32.xlu0 %v3772, 32
    %v3858 = vpop.permute.xlu0 %3857
    %3859 = vrot.lane.b32.xlu0 %v3844, 32
    %v3860 = vpop.permute.xlu0 %3859
    %3861 = vrot.lane.b32.xlu0 %v3773, 32
    %v3862 = vpop.permute.xlu0 %3861
    %3863 = vrot.lane.b32.xlu0 %v3845, 32
    %v3864 = vpop.permute.xlu0 %3863
    %3865 = vrot.lane.b32.xlu0 %v3774, 32
    %v3866 = vpop.permute.xlu0 %3865
    %3867 = vrot.lane.b32.xlu0 %v3846, 32
    %v3868 = vpop.permute.xlu0 %3867
    %3869 = vrot.lane.b32.xlu0 %v3775, 32
    %v3870 = vpop.permute.xlu0 %3869
    %3871 = vrot.lane.b32.xlu0 %v3847, 32
    %v3872 = vpop.permute.xlu0 %3871
    %3873 = vrot.lane.b32.xlu0 %v3765, 32
    %v3874 = vpop.permute.xlu0 %3873
    %3875 = vrot.lane.b32.xlu0 %v3767, 32
    %v3876 = vpop.permute.xlu0 %3875
    %3877 = vrot.lane.b32.xlu0 %v3776, 32
    %v3878 = vpop.permute.xlu0 %3877
    %3879 = vrot.lane.b32.xlu0 %v3848, 32
    %v3880 = vpop.permute.xlu0 %3879
    %v3881 = vsel %vm1057, %v3850, %v3852
    %v3882 = vsel %vm1057, %v3854, %v3856
    %v3883 = vsel %vm1057, %v3858, %v3860
    %v3884 = vsel %vm1057, %v3862, %v3864
    %v3885 = vsel %vm1057, %v3866, %v3868
    %v3886 = vsel %vm1057, %v3870, %v3872
    %v3887 = vsel %vm1057, %v3874, %v3876
    %v3888 = vsel %vm1057, %v3878, %v3880
    %v3897 = vmul.f32 %v3826, %v3881
    %v3898 = vmul.f32 %v3828, %v3882
    %v3899 = vmul.f32 %v3830, %v3883
    %v3900 = vmul.f32 %v3832, %v3884
    %v3901 = vmul.f32 %v3834, %v3885
    %v3902 = vmul.f32 %v3836, %v3886
    %v3903 = vmul.f32 %v3838, %v3887
    %v3904 = vmul.f32 %v3840, %v3888
    %3913 = vrot.lane.b32.xlu0 %v3897, 96
    %v3914 = vpop.permute.xlu0 %3913
    %3915 = vrot.lane.b32.xlu0 %v3898, 96
    %v3916 = vpop.permute.xlu0 %3915
    %3917 = vrot.lane.b32.xlu0 %v3899, 96
    %v3918 = vpop.permute.xlu0 %3917
    %3919 = vrot.lane.b32.xlu0 %v3900, 96
    %v3920 = vpop.permute.xlu0 %3919
    %3921 = vrot.lane.b32.xlu0 %v3901, 96
    %v3922 = vpop.permute.xlu0 %3921
    %3923 = vrot.lane.b32.xlu0 %v3902, 96
    %v3924 = vpop.permute.xlu0 %3923
    %3925 = vrot.lane.b32.xlu0 %v3903, 96
    %v3926 = vpop.permute.xlu0 %3925
    %3927 = vrot.lane.b32.xlu0 %v3904, 96
    %v3928 = vpop.permute.xlu0 %3927
    %v3937 = vadd.f32 %v1182, %v3914
    %v3938 = vadd.f32 %v1184, %v3914
    %v3939 = vadd.f32 %v1188, %v3916
    %v3940 = vadd.f32 %v1190, %v3916
    %v3941 = vadd.f32 %v1194, %v3918
    %v3942 = vadd.f32 %v1196, %v3918
    %v3943 = vadd.f32 %v1200, %v3920
    %v3944 = vadd.f32 %v1202, %v3920
    %v3945 = vadd.f32 %v1206, %v3922
    %v3946 = vadd.f32 %v1208, %v3922
    %v3947 = vadd.f32 %v1212, %v3924
    %v3948 = vadd.f32 %v1214, %v3924
    %v3949 = vadd.f32 %v1218, %v3926
    %v3950 = vadd.f32 %v1220, %v3926
    %v3951 = vadd.f32 %v1224, %v3928
    %v3952 = vadd.f32 %v1226, %v3928
    %v3953 = vtanh.pop %v3937
    %v3954 = vtanh.pop %v3938
    %v3955 = vtanh.pop %v3939
    %v3956 = vtanh.pop %v3940
    %v3957 = vtanh.pop %v3941
    %v3958 = vtanh.pop %v3942
    %v3959 = vtanh.pop %v3943
    %v3960 = vtanh.pop %v3944
    %v3961 = vtanh.pop %v3945
    %v3962 = vtanh.pop %v3946
    %v3963 = vtanh.pop %v3947
    %v3964 = vtanh.pop %v3948
    %v3965 = vtanh.pop %v3949
    %v3966 = vtanh.pop %v3950
    %v3967 = vtanh.pop %v3951
    %v3968 = vtanh.pop %v3952
    %v3969 = vsub.f32 1.0, %v3826
    %v3970 = vsub.f32 1.0, %v3828
    %v3971 = vsub.f32 1.0, %v3830
    %v3972 = vsub.f32 1.0, %v3832
    %v3973 = vsub.f32 1.0, %v3834
    %v3974 = vsub.f32 1.0, %v3836
    %v3975 = vsub.f32 1.0, %v3838
    %v3976 = vsub.f32 1.0, %v3840
    %3993 = vrot.lane.b32.xlu0 %v3953, 80
    %v3994 = vpop.permute.xlu0 %3993
    %3995 = vrot.lane.b32.xlu0 %v3954, 80
    %v3996 = vpop.permute.xlu0 %3995
    %3997 = vrot.lane.b32.xlu0 %v3955, 80
    %v3998 = vpop.permute.xlu0 %3997
    %3999 = vrot.lane.b32.xlu0 %v3956, 80
    %v4000 = vpop.permute.xlu0 %3999
    %4001 = vrot.lane.b32.xlu0 %v3957, 80
    %v4002 = vpop.permute.xlu0 %4001
    %4003 = vrot.lane.b32.xlu0 %v3958, 80
    %v4004 = vpop.permute.xlu0 %4003
    %4005 = vrot.lane.b32.xlu0 %v3959, 80
    %v4006 = vpop.permute.xlu0 %4005
    %4007 = vrot.lane.b32.xlu0 %v3960, 80
    %v4008 = vpop.permute.xlu0 %4007
    %4009 = vrot.lane.b32.xlu0 %v3961, 80
    %v4010 = vpop.permute.xlu0 %4009
    %4011 = vrot.lane.b32.xlu0 %v3962, 80
    %v4012 = vpop.permute.xlu0 %4011
    %4013 = vrot.lane.b32.xlu0 %v3963, 80
    %v4014 = vpop.permute.xlu0 %4013
    %4015 = vrot.lane.b32.xlu0 %v3964, 80
    %v4016 = vpop.permute.xlu0 %4015
    %4017 = vrot.lane.b32.xlu0 %v3965, 80
    %v4018 = vpop.permute.xlu0 %4017
    %4019 = vrot.lane.b32.xlu0 %v3966, 80
    %v4020 = vpop.permute.xlu0 %4019
    %4021 = vrot.lane.b32.xlu0 %v3967, 80
    %v4022 = vpop.permute.xlu0 %4021
    %4023 = vrot.lane.b32.xlu0 %v3968, 80
    %v4024 = vpop.permute.xlu0 %4023
    %v4025 = vsel %vm1584, %v3994, %v3996
    %v4026 = vsel %vm1584, %v3998, %v4000
    %v4027 = vsel %vm1584, %v4002, %v4004
    %v4028 = vsel %vm1584, %v4006, %v4008
    %v4029 = vsel %vm1584, %v4010, %v4012
    %v4030 = vsel %vm1584, %v4014, %v4016
    %v4031 = vsel %vm1584, %v4018, %v4020
    %v4032 = vsel %vm1584, %v4022, %v4024
    %v4041 = vmul.f32 %v3969, %v4025
    %v4042 = vmul.f32 %v3970, %v4026
    %v4043 = vmul.f32 %v3971, %v4027
    %v4044 = vmul.f32 %v3972, %v4028
    %v4045 = vmul.f32 %v3973, %v4029
    %v4046 = vmul.f32 %v3974, %v4030
    %v4047 = vmul.f32 %v3975, %v4031
    %v4048 = vmul.f32 %v3976, %v4032
    %v4049 = vrot.slane %v3664, 7
    %v4050 = vrot.slane %v3665, 7
    %v4051 = vrot.slane %v3666, 7
    %v4052 = vrot.slane %v3667, 7
    %v4053 = vrot.slane %v3668, 7
    %v4054 = vrot.slane %v3669, 7
    %v4055 = vrot.slane %v3671, 7
    %v4064 = vmul.f32 %v3826, %v4049
    %v4065 = vmul.f32 %v3828, %v4050
    %v4066 = vmul.f32 %v3830, %v4051
    %v4067 = vmul.f32 %v3832, %v4052
    %v4068 = vmul.f32 %v3834, %v4053
    %v4069 = vmul.f32 %v3836, %v4054
    %v4070 = vmul.f32 %v3838, %v3690
    %v4071 = vmul.f32 %v3840, %v4055
    %v4072 = vadd.f32 %v4041, %v4064
    %v4073 = vadd.f32 %v4042, %v4065
    %v4074 = vadd.f32 %v4043, %v4066
    %v4075 = vadd.f32 %v4044, %v4067
    %v4076 = vadd.f32 %v4045, %v4068
    %v4077 = vadd.f32 %v4046, %v4069
    %v4078 = vadd.f32 %v4047, %v4070
    %v4079 = vadd.f32 %v4048, %v4071
    %v4088 = vrot.slane %v4072, 6
    %v4089 = vrot.slane %v4073, 5
    %v4090 = vsel %vm1634, %v4089, %v4088
    %v4091 = vrot.slane %v4074, 4
    %v4092 = vsel %vm1637, %v4091, %v4090
    %v4093 = vrot.slane %v4075, 3
    %v4094 = vsel %vm1640, %v4093, %v4092
    %v4095 = vrot.slane %v4076, 2
    %v4096 = vsel %vm1643, %v4095, %v4094
    %v4097 = vrot.slane %v4077, 1
    %v4098 = vsel %vm1646, %v4097, %v4096
    %v4099 = vsel %vm1649, %v4078, %v4098
    %v4100 = vrot.slane %v4079, 7
    %v4101 = vsel %vm1652, %v4100, %v4099
    %4102 = vrot.lane.b32.xlu0 %v4101, 80
    %v4103 = vpop.permute.xlu0 %4102
    %v4104 = vsel %vm1090, %v4103, 0
    %4106 = vmatprep.subr.mxu0 %v1230
    %4107 = vmatpush1.msra.mxu0 %v1229
    %4108 = vmatprep.subr.mxu0 %v1232
    %4109 = vmatpush1.msra.mxu0 %v1231
    %4110 = vmatprep.subr.mxu0 %v1234
    %4111 = vmatpush1.msra.mxu0 %v1233
    %4112 = vmatprep.subr.mxu0 %v1236
    %4113 = vmatpush1.msra.mxu0 %v1235
    %4114 = vmatprep.subr.mxu0 %v1238
    %4115 = vmatpush1.msra.mxu0 %v1237
    %4116 = vmatprep.subr.mxu0 %v1240
    %4117 = vmatpush1.msra.mxu0 %v1239
    %4118 = vmatprep.subr.mxu0 0.0
    %4119 = vmatpush1.msra.mxu0 0.0
    %4120 = vmatprep.subr.mxu0 0.0
    %4121 = vmatpush1.msra.mxu0 0.0
    %4122 = vmatprep.subr.mxu0 0.0
    %4123 = vmatpush1.msra.mxu0 0.0
    %4124 = vmatprep.subr.mxu0 0.0
    %4125 = vmatpush1.msra.mxu0 0.0
    %4126 = vmatprep.subr.mxu0 0.0
    %4127 = vmatpush1.msra.mxu0 0.0
    %4128 = vmatprep.subr.mxu0 0.0
    %4129 = vmatpush1.msra.mxu0 0.0
    %4130 = vmatprep.subr.mxu0 0.0
    %4131 = vmatpush1.msra.mxu0 0.0
    %4132 = vmatprep.subr.mxu0 0.0
    %4133 = vmatpush1.msra.mxu0 0.0
    %4134 = vmatprep.subr.mxu0 0.0
    %4135 = vmatpush1.msra.mxu0 0.0
    %4136 = vmatprep.subr.mxu0 0.0
    %4137 = vmatpush1.msra.mxu0 0.0
    %4138 = vmatprep.subr.mxu0 0.0
    %4139 = vmatpush1.msra.mxu0 0.0
    %4140 = vmatprep.subr.mxu0 0.0
    %4141 = vmatpush1.msra.mxu0 0.0
    %4142 = vmatprep.subr.mxu0 0.0
    %4143 = vmatpush1.msra.mxu0 0.0
    %4144 = vmatprep.subr.mxu0 0.0
    %4145 = vmatpush1.msra.mxu0 0.0
    %4146 = vmatprep.subr.mxu0 0.0
    %4147 = vmatpush1.msra.mxu0 0.0
    %4148 = vmatprep.subr.mxu0 0.0
    %4149 = vmatpush1.msra.mxu0 0.0
    %4150 = vmatprep.subr.mxu0 0.0
    %4151 = vmatpush1.msra.mxu0 0.0
    %4152 = vmatprep.subr.mxu0 0.0
    %4153 = vmatpush1.msra.mxu0 0.0
    %4154 = vmatprep.subr.mxu0 0.0
    %4155 = vmatpush1.msra.mxu0 0.0
    %4156 = vmatprep.subr.mxu0 0.0
    %4157 = vmatpush1.msra.mxu0 0.0
    %4158 = vmatprep.subr.mxu0 0.0
    %4159 = vmatpush1.msra.mxu0 0.0
    %4160 = vmatprep.subr.mxu0 0.0
    %4161 = vmatpush1.msra.mxu0 0.0
    %4162 = vmatprep.subr.mxu0 0.0
    %4163 = vmatpush1.msra.mxu0 0.0
    %4164 = vmatprep.subr.mxu0 0.0
    %4165 = vmatpush1.msra.mxu0 0.0
    %4166 = vmatprep.subr.mxu0 0.0
    %4167 = vmatpush1.msra.mxu0 0.0
    %4168 = vmatprep.subr.mxu0 0.0
    %4169 = vmatpush1.msra.mxu0 0.0
    %4170 = vmatprep.mubr.f32.mxu0 0.0
    %4171 = vmatmul.mubr.f32.gmra.mrb[0].mxu0 %v4104
    %v4172 = vpop.f32.mrb[0].mxu0
    %v4173 = vadd.f32 %v1247, %v4172
    %v4174 = vpop.f32.mrb[0].mxu0
    %v4175 = vadd.f32 %v1251, %v4174
    %4176 = vdwg.mxu0
    %v4178 = vrot.slane %v4173, 1
    %v4179 = vrot.slane %v4173, 2
    %v4180 = vrot.slane %v4173, 3
    %v4181 = vrot.slane %v4173, 4
    %v4182 = vrot.slane %v4173, 5
    %v4183 = vrot.slane %v4173, 6
    %v4184 = vrot.slane %v4173, 7
    %v4193 = vadd.f32 %v1182, %v4178
    %v4194 = vadd.f32 %v1188, %v4179
    %v4195 = vadd.f32 %v1194, %v4180
    %v4196 = vadd.f32 %v1200, %v4181
    %v4197 = vadd.f32 %v1206, %v4182
    %v4198 = vadd.f32 %v1212, %v4183
    %v4199 = vadd.f32 %v1218, %v4184
    %v4200 = vadd.f32 %v1224, %v4173
    %v4201 = vxor.u32 %v4193, 2147483648
    %v4202 = vxor.u32 %v4194, 2147483648
    %v4203 = vxor.u32 %v4195, 2147483648
    %v4204 = vxor.u32 %v4196, 2147483648
    %v4205 = vxor.u32 %v4197, 2147483648
    %v4206 = vxor.u32 %v4198, 2147483648
    %v4207 = vxor.u32 %v4199, 2147483648
    %v4208 = vxor.u32 %v4200, 2147483648
    %v4209 = vmul.f32 %v4201, 1.442695
    %v4210 = vpow.pop %v4209
    %v4211 = vmul.f32 %v4202, 1.442695
    %v4212 = vpow.pop %v4211
    %v4213 = vmul.f32 %v4203, 1.442695
    %v4214 = vpow.pop %v4213
    %v4215 = vmul.f32 %v4204, 1.442695
    %v4216 = vpow.pop %v4215
    %v4217 = vmul.f32 %v4205, 1.442695
    %v4218 = vpow.pop %v4217
    %v4219 = vmul.f32 %v4206, 1.442695
    %v4220 = vpow.pop %v4219
    %v4221 = vmul.f32 %v4207, 1.442695
    %v4222 = vpow.pop %v4221
    %v4223 = vmul.f32 %v4208, 1.442695
    %v4224 = vpow.pop %v4223
    %v4225 = vadd.f32 %v4210, 1.0
    %v4226 = vadd.f32 %v4212, 1.0
    %v4227 = vadd.f32 %v4214, 1.0
    %v4228 = vadd.f32 %v4216, 1.0
    %v4229 = vadd.f32 %v4218, 1.0
    %v4230 = vadd.f32 %v4220, 1.0
    %v4231 = vadd.f32 %v4222, 1.0
    %v4232 = vadd.f32 %v4224, 1.0
    %v4233 = vrcp.pop %v4225
    %v4234 = vmul.f32 1.0, %v4233
    %v4235 = vrcp.pop %v4226
    %v4236 = vmul.f32 1.0, %v4235
    %v4237 = vrcp.pop %v4227
    %v4238 = vmul.f32 1.0, %v4237
    %v4239 = vrcp.pop %v4228
    %v4240 = vmul.f32 1.0, %v4239
    %v4241 = vrcp.pop %v4229
    %v4242 = vmul.f32 1.0, %v4241
    %v4243 = vrcp.pop %v4230
    %v4244 = vmul.f32 1.0, %v4243
    %v4245 = vrcp.pop %v4231
    %v4246 = vmul.f32 1.0, %v4245
    %v4247 = vrcp.pop %v4232
    %v4248 = vmul.f32 1.0, %v4247
    %v4250 = vrot.slane %v4175, 1
    %v4251 = vrot.slane %v4175, 2
    %v4252 = vrot.slane %v4175, 3
    %v4253 = vrot.slane %v4175, 4
    %v4254 = vrot.slane %v4175, 5
    %v4255 = vrot.slane %v4175, 6
    %v4256 = vrot.slane %v4175, 7
    %4257 = vrot.lane.b32.xlu0 %v4178, 32
    %v4258 = vpop.permute.xlu0 %4257
    %4259 = vrot.lane.b32.xlu0 %v4250, 32
    %v4260 = vpop.permute.xlu0 %4259
    %4261 = vrot.lane.b32.xlu0 %v4179, 32
    %v4262 = vpop.permute.xlu0 %4261
    %4263 = vrot.lane.b32.xlu0 %v4251, 32
    %v4264 = vpop.permute.xlu0 %4263
    %4265 = vrot.lane.b32.xlu0 %v4180, 32
    %v4266 = vpop.permute.xlu0 %4265
    %4267 = vrot.lane.b32.xlu0 %v4252, 32
    %v4268 = vpop.permute.xlu0 %4267
    %4269 = vrot.lane.b32.xlu0 %v4181, 32
    %v4270 = vpop.permute.xlu0 %4269
    %4271 = vrot.lane.b32.xlu0 %v4253, 32
    %v4272 = vpop.permute.xlu0 %4271
    %4273 = vrot.lane.b32.xlu0 %v4182, 32
    %v4274 = vpop.permute.xlu0 %4273
    %4275 = vrot.lane.b32.xlu0 %v4254, 32
    %v4276 = vpop.permute.xlu0 %4275
    %4277 = vrot.lane.b32.xlu0 %v4183, 32
    %v4278 = vpop.permute.xlu0 %4277
    %4279 = vrot.lane.b32.xlu0 %v4255, 32
    %v4280 = vpop.permute.xlu0 %4279
    %4281 = vrot.lane.b32.xlu0 %v4184, 32
    %v4282 = vpop.permute.xlu0 %4281
    %4283 = vrot.lane.b32.xlu0 %v4256, 32
    %v4284 = vpop.permute.xlu0 %4283
    %4285 = vrot.lane.b32.xlu0 %v4173, 32
    %v4286 = vpop.permute.xlu0 %4285
    %4287 = vrot.lane.b32.xlu0 %v4175, 32
    %v4288 = vpop.permute.xlu0 %4287
    %v4289 = vsel %vm1057, %v4258, %v4260
    %v4290 = vsel %vm1057, %v4262, %v4264
    %v4291 = vsel %vm1057, %v4266, %v4268
    %v4292 = vsel %vm1057, %v4270, %v4272
    %v4293 = vsel %vm1057, %v4274, %v4276
    %v4294 = vsel %vm1057, %v4278, %v4280
    %v4295 = vsel %vm1057, %v4282, %v4284
    %v4296 = vsel %vm1057, %v4286, %v4288
    %v4305 = vmul.f32 %v4234, %v4289
    %v4306 = vmul.f32 %v4236, %v4290
    %v4307 = vmul.f32 %v4238, %v4291
    %v4308 = vmul.f32 %v4240, %v4292
    %v4309 = vmul.f32 %v4242, %v4293
    %v4310 = vmul.f32 %v4244, %v4294
    %v4311 = vmul.f32 %v4246, %v4295
    %v4312 = vmul.f32 %v4248, %v4296
    %4321 = vrot.lane.b32.xlu0 %v4305, 96
    %v4322 = vpop.permute.xlu0 %4321
    %4323 = vrot.lane.b32.xlu0 %v4306, 96
    %v4324 = vpop.permute.xlu0 %4323
    %4325 = vrot.lane.b32.xlu0 %v4307, 96
    %v4326 = vpop.permute.xlu0 %4325
    %4327 = vrot.lane.b32.xlu0 %v4308, 96
    %v4328 = vpop.permute.xlu0 %4327
    %4329 = vrot.lane.b32.xlu0 %v4309, 96
    %v4330 = vpop.permute.xlu0 %4329
    %4331 = vrot.lane.b32.xlu0 %v4310, 96
    %v4332 = vpop.permute.xlu0 %4331
    %4333 = vrot.lane.b32.xlu0 %v4311, 96
    %v4334 = vpop.permute.xlu0 %4333
    %4335 = vrot.lane.b32.xlu0 %v4312, 96
    %v4336 = vpop.permute.xlu0 %4335
    %v4345 = vadd.f32 %v1182, %v4322
    %v4346 = vadd.f32 %v1184, %v4322
    %v4347 = vadd.f32 %v1188, %v4324
    %v4348 = vadd.f32 %v1190, %v4324
    %v4349 = vadd.f32 %v1194, %v4326
    %v4350 = vadd.f32 %v1196, %v4326
    %v4351 = vadd.f32 %v1200, %v4328
    %v4352 = vadd.f32 %v1202, %v4328
    %v4353 = vadd.f32 %v1206, %v4330
    %v4354 = vadd.f32 %v1208, %v4330
    %v4355 = vadd.f32 %v1212, %v4332
    %v4356 = vadd.f32 %v1214, %v4332
    %v4357 = vadd.f32 %v1218, %v4334
    %v4358 = vadd.f32 %v1220, %v4334
    %v4359 = vadd.f32 %v1224, %v4336
    %v4360 = vadd.f32 %v1226, %v4336
    %v4361 = vtanh.pop %v4345
    %v4362 = vtanh.pop %v4346
    %v4363 = vtanh.pop %v4347
    %v4364 = vtanh.pop %v4348
    %v4365 = vtanh.pop %v4349
    %v4366 = vtanh.pop %v4350
    %v4367 = vtanh.pop %v4351
    %v4368 = vtanh.pop %v4352
    %v4369 = vtanh.pop %v4353
    %v4370 = vtanh.pop %v4354
    %v4371 = vtanh.pop %v4355
    %v4372 = vtanh.pop %v4356
    %v4373 = vtanh.pop %v4357
    %v4374 = vtanh.pop %v4358
    %v4375 = vtanh.pop %v4359
    %v4376 = vtanh.pop %v4360
    %v4377 = vsub.f32 1.0, %v4234
    %v4378 = vsub.f32 1.0, %v4236
    %v4379 = vsub.f32 1.0, %v4238
    %v4380 = vsub.f32 1.0, %v4240
    %v4381 = vsub.f32 1.0, %v4242
    %v4382 = vsub.f32 1.0, %v4244
    %v4383 = vsub.f32 1.0, %v4246
    %v4384 = vsub.f32 1.0, %v4248
    %4401 = vrot.lane.b32.xlu0 %v4361, 80
    %v4402 = vpop.permute.xlu0 %4401
    %4403 = vrot.lane.b32.xlu0 %v4362, 80
    %v4404 = vpop.permute.xlu0 %4403
    %4405 = vrot.lane.b32.xlu0 %v4363, 80
    %v4406 = vpop.permute.xlu0 %4405
    %4407 = vrot.lane.b32.xlu0 %v4364, 80
    %v4408 = vpop.permute.xlu0 %4407
    %4409 = vrot.lane.b32.xlu0 %v4365, 80
    %v4410 = vpop.permute.xlu0 %4409
    %4411 = vrot.lane.b32.xlu0 %v4366, 80
    %v4412 = vpop.permute.xlu0 %4411
    %4413 = vrot.lane.b32.xlu0 %v4367, 80
    %v4414 = vpop.permute.xlu0 %4413
    %4415 = vrot.lane.b32.xlu0 %v4368, 80
    %v4416 = vpop.permute.xlu0 %4415
    %4417 = vrot.lane.b32.xlu0 %v4369, 80
    %v4418 = vpop.permute.xlu0 %4417
    %4419 = vrot.lane.b32.xlu0 %v4370, 80
    %v4420 = vpop.permute.xlu0 %4419
    %4421 = vrot.lane.b32.xlu0 %v4371, 80
    %v4422 = vpop.permute.xlu0 %4421
    %4423 = vrot.lane.b32.xlu0 %v4372, 80
    %v4424 = vpop.permute.xlu0 %4423
    %4425 = vrot.lane.b32.xlu0 %v4373, 80
    %v4426 = vpop.permute.xlu0 %4425
    %4427 = vrot.lane.b32.xlu0 %v4374, 80
    %v4428 = vpop.permute.xlu0 %4427
    %4429 = vrot.lane.b32.xlu0 %v4375, 80
    %v4430 = vpop.permute.xlu0 %4429
    %4431 = vrot.lane.b32.xlu0 %v4376, 80
    %v4432 = vpop.permute.xlu0 %4431
    %v4433 = vsel %vm1584, %v4402, %v4404
    %v4434 = vsel %vm1584, %v4406, %v4408
    %v4435 = vsel %vm1584, %v4410, %v4412
    %v4436 = vsel %vm1584, %v4414, %v4416
    %v4437 = vsel %vm1584, %v4418, %v4420
    %v4438 = vsel %vm1584, %v4422, %v4424
    %v4439 = vsel %vm1584, %v4426, %v4428
    %v4440 = vsel %vm1584, %v4430, %v4432
    %v4449 = vmul.f32 %v4377, %v4433
    %v4450 = vmul.f32 %v4378, %v4434
    %v4451 = vmul.f32 %v4379, %v4435
    %v4452 = vmul.f32 %v4380, %v4436
    %v4453 = vmul.f32 %v4381, %v4437
    %v4454 = vmul.f32 %v4382, %v4438
    %v4455 = vmul.f32 %v4383, %v4439
    %v4456 = vmul.f32 %v4384, %v4440
    %v4457 = vrot.slane %v4072, 7
    %v4458 = vrot.slane %v4073, 7
    %v4459 = vrot.slane %v4074, 7
    %v4460 = vrot.slane %v4075, 7
    %v4461 = vrot.slane %v4076, 7
    %v4462 = vrot.slane %v4077, 7
    %v4463 = vrot.slane %v4078, 7
    %v4472 = vmul.f32 %v4234, %v4457
    %v4473 = vmul.f32 %v4236, %v4458
    %v4474 = vmul.f32 %v4238, %v4459
    %v4475 = vmul.f32 %v4240, %v4460
    %v4476 = vmul.f32 %v4242, %v4461
    %v4477 = vmul.f32 %v4244, %v4462
    %v4478 = vmul.f32 %v4246, %v4463
    %v4479 = vmul.f32 %v4248, %v4100
    %v4480 = vadd.f32 %v4449, %v4472
    %v4481 = vadd.f32 %v4450, %v4473
    %v4482 = vadd.f32 %v4451, %v4474
    %v4483 = vadd.f32 %v4452, %v4475
    %v4484 = vadd.f32 %v4453, %v4476
    %v4485 = vadd.f32 %v4454, %v4477
    %v4486 = vadd.f32 %v4455, %v4478
    %v4487 = vadd.f32 %v4456, %v4479
    %v4488 = vmax.f32 %v4480, 0.0
    %v4489 = vmax.f32 %v4481, 0.0
    %v4490 = vmax.f32 %v4482, 0.0
    %v4491 = vmax.f32 %v4483, 0.0
    %v4492 = vmax.f32 %v4484, 0.0
    %v4493 = vmax.f32 %v4485, 0.0
    %v4494 = vmax.f32 %v4486, 0.0
    %v4495 = vmax.f32 %v4487, 0.0
    %v4504 = vrot.slane %v4489, 7
    %v4505 = vrot.slane %v4490, 6
    %v4506 = vsel %vm1634, %v4505, %v4504
    %v4507 = vrot.slane %v4491, 5
    %v4508 = vsel %vm1637, %v4507, %v4506
    %v4509 = vrot.slane %v4492, 4
    %v4510 = vsel %vm1640, %v4509, %v4508
    %v4511 = vrot.slane %v4493, 3
    %v4512 = vsel %vm1643, %v4511, %v4510
    %v4513 = vrot.slane %v4494, 2
    %v4514 = vsel %vm1646, %v4513, %v4512
    %v4515 = vrot.slane %v4495, 1
    %v4516 = vsel %vm1649, %v4515, %v4514
    %4517 = vrot.lane.b32.xlu0 %v4488, 80
    %v4518 = vpop.permute.xlu0 %4517
    %4519 = vrot.lane.b32.xlu0 %v4516, 80
    %v4520 = vpop.permute.xlu0 %4519
    %vm4523 = vcmask 392199
    %4524 = vst.msk [vmem:[#allocation4 - $0x7] sm:$0x80] %vm4523, %v4518
    %vm4525 = vcmask 391168
    %4526 = vst.msk [vmem:[#allocation4 + $0x1] sm:$0x7f] %vm4525, %v4520
    %v4527 = vld [vmem:[%s9] sm:$0x7]
    %v4528 = vlaneseq
    %v4529 = vshrl.u32 %v4528, 7
    %v4530 = vsub.s32 7, %v4529
    %v4531 = vrot.slane %v4488, %v4530
    %v4532 = vlaneseq
    %v4533 = vshrl.u32 %v4532, 7
    %v4534 = vsub.s32 7, %v4533
    %v4535 = vrot.slane %v4489, %v4534
    %v4536 = vlaneseq
    %v4537 = vshrl.u32 %v4536, 7
    %v4538 = vsub.s32 7, %v4537
    %v4539 = vrot.slane %v4490, %v4538
    %v4540 = vlaneseq
    %v4541 = vshrl.u32 %v4540, 7
    %v4542 = vsub.s32 7, %v4541
    %v4543 = vrot.slane %v4491, %v4542
    %v4544 = vlaneseq
    %v4545 = vshrl.u32 %v4544, 7
    %v4546 = vsub.s32 7, %v4545
    %v4547 = vrot.slane %v4492, %v4546
    %v4548 = vlaneseq
    %v4549 = vshrl.u32 %v4548, 7
    %v4550 = vsub.s32 7, %v4549
    %v4551 = vrot.slane %v4493, %v4550
    %v4552 = vlaneseq
    %v4553 = vshrl.u32 %v4552, 7
    %v4554 = vsub.s32 7, %v4553
    %v4555 = vrot.slane %v4494, %v4554
    %v4556 = vlaneseq
    %v4557 = vshrl.u32 %v4556, 7
    %v4558 = vsub.s32 7, %v4557
    %v4559 = vrot.slane %v4495, %v4558
    %v4560 = vrot.slane %v4488, 7
    %v4561 = vrot.slane %v4489, 6
    %v4562 = vsel %vm1634, %v4561, %v4560
    %v4563 = vrot.slane %v4490, 5
    %v4564 = vsel %vm1637, %v4563, %v4562
    %v4565 = vrot.slane %v4491, 4
    %v4566 = vsel %vm1640, %v4565, %v4564
    %v4567 = vrot.slane %v4492, 3
    %v4568 = vsel %vm1643, %v4567, %v4566
    %v4569 = vrot.slane %v4493, 2
    %v4570 = vsel %vm1646, %v4569, %v4568
    %v4571 = vrot.slane %v4494, 1
    %v4572 = vsel %vm1649, %v4571, %v4570
    %v4573 = vsel %vm1652, %v4495, %v4572
    %v4575 = vsub.f32 %v4531, %v4573
    %v4576 = vsub.f32 %v4535, %v4573
    %v4577 = vsub.f32 %v4539, %v4573
    %v4578 = vsub.f32 %v4543, %v4573
    %v4579 = vsub.f32 %v4547, %v4573
    %v4580 = vsub.f32 %v4551, %v4573
    %v4581 = vsub.f32 %v4555, %v4573
    %v4582 = vsub.f32 %v4559, %v4573
    %v4583 = vand.u32 2147483647, %v4575
    %v4584 = vand.u32 2147483647, %v4576
    %v4585 = vand.u32 2147483647, %v4577
    %v4586 = vand.u32 2147483647, %v4578
    %v4587 = vand.u32 2147483647, %v4579
    %v4588 = vand.u32 2147483647, %v4580
    %v4589 = vand.u32 2147483647, %v4581
    %v4590 = vand.u32 2147483647, %v4582
    %v4591 = vld [vmem:[%s8] sm:$0xff]
    %v4592 = vld [vmem:[%s8 + $0x8] sm:$0xff]
    %v4593 = vld [vmem:[%s8 + $0x10] sm:$0xff]
    %v4594 = vld [vmem:[%s8 + $0x18] sm:$0xff]
    %v4595 = vld [vmem:[%s8 + $0x20] sm:$0xff]
    %v4596 = vld [vmem:[%s8 + $0x28] sm:$0xff]
    %v4597 = vlaneseq
    %v4598 = vshrl.u32 %v4597, 7
    %v4599 = vsub.s32 0, %v4598
    %v4600 = vrot.slane %v4527, %v4599
    %4609 = vrot.lane.b32.xlu0 %v4583, 80
    %v4610 = vpop.permute.xlu0 %4609
    %4611 = vrot.lane.b32.xlu0 %v4584, 80
    %v4612 = vpop.permute.xlu0 %4611
    %4613 = vrot.lane.b32.xlu0 %v4585, 80
    %v4614 = vpop.permute.xlu0 %4613
    %4615 = vrot.lane.b32.xlu0 %v4586, 80
    %v4616 = vpop.permute.xlu0 %4615
    %4617 = vrot.lane.b32.xlu0 %v4587, 80
    %v4618 = vpop.permute.xlu0 %4617
    %4619 = vrot.lane.b32.xlu0 %v4588, 80
    %v4620 = vpop.permute.xlu0 %4619
    %4621 = vrot.lane.b32.xlu0 %v4589, 80
    %v4622 = vpop.permute.xlu0 %4621
    %4623 = vrot.lane.b32.xlu0 %v4590, 80
    %v4624 = vpop.permute.xlu0 %4623
    %v4625 = vsel %vm1090, %v4610, 0
    %v4627 = vsel %vm1090, %v4612, 0
    %v4629 = vsel %vm1090, %v4614, 0
    %v4631 = vsel %vm1090, %v4616, 0
    %v4633 = vsel %vm1090, %v4618, 0
    %v4635 = vsel %vm1090, %v4620, 0
    %v4637 = vsel %vm1090, %v4622, 0
    %v4639 = vsel %vm1090, %v4624, 0
    %4641 = vmatprep.subr.mxu0 0.0
    %4642 = vmatpush1.msra.mxu0 %v4591
    %4643 = vmatprep.subr.mxu0 0.0
    %4644 = vmatpush1.msra.mxu0 %v4592
    %4645 = vmatprep.subr.mxu0 0.0
    %4646 = vmatpush1.msra.mxu0 %v4593
    %4647 = vmatprep.subr.mxu0 0.0
    %4648 = vmatpush1.msra.mxu0 %v4594
    %4649 = vmatprep.subr.mxu0 0.0
    %4650 = vmatpush1.msra.mxu0 %v4595
    %4651 = vmatprep.subr.mxu0 0.0
    %4652 = vmatpush1.msra.mxu0 %v4596
    %4653 = vmatprep.subr.mxu0 0.0
    %4654 = vmatpush1.msra.mxu0 0.0
    %4655 = vmatprep.subr.mxu0 0.0
    %4656 = vmatpush1.msra.mxu0 0.0
    %4657 = vmatprep.subr.mxu0 0.0
    %4658 = vmatpush1.msra.mxu0 0.0
    %4659 = vmatprep.subr.mxu0 0.0
    %4660 = vmatpush1.msra.mxu0 0.0
    %4661 = vmatprep.subr.mxu0 0.0
    %4662 = vmatpush1.msra.mxu0 0.0
    %4663 = vmatprep.subr.mxu0 0.0
    %4664 = vmatpush1.msra.mxu0 0.0
    %4665 = vmatprep.subr.mxu0 0.0
    %4666 = vmatpush1.msra.mxu0 0.0
    %4667 = vmatprep.subr.mxu0 0.0
    %4668 = vmatpush1.msra.mxu0 0.0
    %4669 = vmatprep.subr.mxu0 0.0
    %4670 = vmatpush1.msra.mxu0 0.0
    %4671 = vmatprep.subr.mxu0 0.0
    %4672 = vmatpush1.msra.mxu0 0.0
    %4673 = vmatprep.subr.mxu0 0.0
    %4674 = vmatpush1.msra.mxu0 0.0
    %4675 = vmatprep.subr.mxu0 0.0
    %4676 = vmatpush1.msra.mxu0 0.0
    %4677 = vmatprep.subr.mxu0 0.0
    %4678 = vmatpush1.msra.mxu0 0.0
    %4679 = vmatprep.subr.mxu0 0.0
    %4680 = vmatpush1.msra.mxu0 0.0
    %4681 = vmatprep.subr.mxu0 0.0
    %4682 = vmatpush1.msra.mxu0 0.0
    %4683 = vmatprep.subr.mxu0 0.0
    %4684 = vmatpush1.msra.mxu0 0.0
    %4685 = vmatprep.subr.mxu0 0.0
    %4686 = vmatpush1.msra.mxu0 0.0
    %4687 = vmatprep.subr.mxu0 0.0
    %4688 = vmatpush1.msra.mxu0 0.0
    %4689 = vmatprep.subr.mxu0 0.0
    %4690 = vmatpush1.msra.mxu0 0.0
    %4691 = vmatprep.subr.mxu0 0.0
    %4692 = vmatpush1.msra.mxu0 0.0
    %4693 = vmatprep.subr.mxu0 0.0
    %4694 = vmatpush1.msra.mxu0 0.0
    %4695 = vmatprep.subr.mxu0 0.0
    %4696 = vmatpush1.msra.mxu0 0.0
    %4697 = vmatprep.subr.mxu0 0.0
    %4698 = vmatpush1.msra.mxu0 0.0
    %4699 = vmatprep.subr.mxu0 0.0
    %4700 = vmatpush1.msra.mxu0 0.0
    %4701 = vmatprep.subr.mxu0 0.0
    %4702 = vmatpush1.msra.mxu0 0.0
    %4703 = vmatprep.subr.mxu0 0.0
    %4704 = vmatpush1.msra.mxu0 0.0
    %4705 = vmatprep.mubr.f32.mxu0 0.0
    %4706 = vmatmul.mubr.f32.gmra.mrb[0].mxu0 %v4625
    %v4707 = vpop.f32.mrb[0].mxu0
    %v4708 = vadd.f32 %v4600, %v4707
    %v4709 = vpop.f32.mrb[0].mxu0
    %4710 = vmatprep.mubr.f32.mxu0 0.0
    %4711 = vmatmul.mubr.f32.gmra.mrb[0].mxu0 %v4627
    %v4712 = vpop.f32.mrb[0].mxu0
    %v4713 = vadd.f32 %v4600, %v4712
    %v4714 = vpop.f32.mrb[0].mxu0
    %4715 = vmatprep.mubr.f32.mxu0 0.0
    %4716 = vmatmul.mubr.f32.gmra.mrb[0].mxu0 %v4629
    %v4717 = vpop.f32.mrb[0].mxu0
    %v4718 = vadd.f32 %v4600, %v4717
    %v4719 = vpop.f32.mrb[0].mxu0
    %4720 = vmatprep.mubr.f32.mxu0 0.0
    %4721 = vmatmul.mubr.f32.gmra.mrb[0].mxu0 %v4631
    %v4722 = vpop.f32.mrb[0].mxu0
    %v4723 = vadd.f32 %v4600, %v4722
    %v4724 = vpop.f32.mrb[0].mxu0
    %4725 = vmatprep.mubr.f32.mxu0 0.0
    %4726 = vmatmul.mubr.f32.gmra.mrb[0].mxu0 %v4633
    %v4727 = vpop.f32.mrb[0].mxu0
    %v4728 = vadd.f32 %v4600, %v4727
    %v4729 = vpop.f32.mrb[0].mxu0
    %4730 = vmatprep.mubr.f32.mxu0 0.0
    %4731 = vmatmul.mubr.f32.gmra.mrb[0].mxu0 %v4635
    %v4732 = vpop.f32.mrb[0].mxu0
    %v4733 = vadd.f32 %v4600, %v4732
    %v4734 = vpop.f32.mrb[0].mxu0
    %4735 = vmatprep.mubr.f32.mxu0 0.0
    %4736 = vmatmul.mubr.f32.gmra.mrb[0].mxu0 %v4637
    %v4737 = vpop.f32.mrb[0].mxu0
    %v4738 = vadd.f32 %v4600, %v4737
    %v4739 = vpop.f32.mrb[0].mxu0
    %4740 = vmatprep.mubr.f32.mxu0 0.0
    %4741 = vmatmul.mubr.f32.gmra.mrb[0].mxu0 %v4639
    %v4742 = vpop.f32.mrb[0].mxu0
    %v4743 = vadd.f32 %v4600, %v4742
    %v4744 = vpop.f32.mrb[0].mxu0
    %4745 = vdwg.mxu0
    %vm4746 = vcmp.ge.f32.partialorder %v4708, 0.0
    %vm4747 = vcmp.ge.f32.partialorder %v4713, 0.0
    %vm4748 = vcmp.ge.f32.partialorder %v4718, 0.0
    %vm4749 = vcmp.ge.f32.partialorder %v4723, 0.0
    %vm4750 = vcmp.ge.f32.partialorder %v4728, 0.0
    %vm4751 = vcmp.ge.f32.partialorder %v4733, 0.0
    %vm4752 = vcmp.ge.f32.partialorder %v4738, 0.0
    %vm4753 = vcmp.ge.f32.partialorder %v4743, 0.0
    %v4754 = vmul.f32 %v4708, 0.2
    %v4755 = vmul.f32 %v4713, 0.2
    %v4756 = vmul.f32 %v4718, 0.2
    %v4757 = vmul.f32 %v4723, 0.2
    %v4758 = vmul.f32 %v4728, 0.2
    %v4759 = vmul.f32 %v4733, 0.2
    %v4760 = vmul.f32 %v4738, 0.2
    %v4761 = vmul.f32 %v4743, 0.2
    %v4762 = vsel %vm4746, %v4708, %v4754
    %v4763 = vsel %vm4747, %v4713, %v4755
    %v4764 = vsel %vm4748, %v4718, %v4756
    %v4765 = vsel %vm4749, %v4723, %v4757
    %v4766 = vsel %vm4750, %v4728, %v4758
    %v4767 = vsel %vm4751, %v4733, %v4759
    %v4768 = vsel %vm4752, %v4738, %v4760
    %v4769 = vsel %vm4753, %v4743, %v4761
    %v4770 = vlaneseq
    %v4771 = vshrl.u32 %v4770, 7
    %v4772 = vsub.s32 1, %v4771
    %v4773 = vrot.slane %v4527, %v4772
    %v4774 = vmul.f32 %v4762, %v4773
    %v4775 = vmul.f32 %v4763, %v4773
    %v4776 = vmul.f32 %v4764, %v4773
    %v4777 = vmul.f32 %v4765, %v4773
    %v4778 = vmul.f32 %v4766, %v4773
    %v4779 = vmul.f32 %v4767, %v4773
    %v4780 = vmul.f32 %v4768, %v4773
    %v4781 = vmul.f32 %v4769, %v4773
    %vm4782 = vcmask 195584
    %v4783 = vsel %vm4782, %v4774, 0.0
    %4784 = vadd.xlane.f32.xlu0 %v4783
    %v4785 = vpop.xlane.xlu0 %4784
    %v4786 = vsel %vm4782, %v4775, 0.0
    %4787 = vadd.xlane.f32.xlu0 %v4786
    %v4788 = vpop.xlane.xlu0 %4787
    %v4789 = vsel %vm4782, %v4776, 0.0
    %4790 = vadd.xlane.f32.xlu0 %v4789
    %v4791 = vpop.xlane.xlu0 %4790
    %v4792 = vsel %vm4782, %v4777, 0.0
    %4793 = vadd.xlane.f32.xlu0 %v4792
    %v4794 = vpop.xlane.xlu0 %4793
    %v4795 = vsel %vm4782, %v4778, 0.0
    %4796 = vadd.xlane.f32.xlu0 %v4795
    %v4797 = vpop.xlane.xlu0 %4796
    %v4798 = vsel %vm4782, %v4779, 0.0
    %4799 = vadd.xlane.f32.xlu0 %v4798
    %v4800 = vpop.xlane.xlu0 %4799
    %v4801 = vsel %vm4782, %v4780, 0.0
    %4802 = vadd.xlane.f32.xlu0 %v4801
    %v4803 = vpop.xlane.xlu0 %4802
    %v4804 = vsel %vm4782, %v4781, 0.0
    %4805 = vadd.xlane.f32.xlu0 %v4804
    %v4806 = vpop.xlane.xlu0 %4805
    %v4808 = vrot.slane %v4527, 2
    %s4809 = vtos %v4808
    %v4810 = vstv %s4809
    %v4812 = vadd.f32 %v4785, %v4810
    %v4813 = vadd.f32 %v4788, %v4810
    %v4814 = vadd.f32 %v4791, %v4810
    %v4815 = vadd.f32 %v4794, %v4810
    %v4816 = vadd.f32 %v4797, %v4810
    %v4817 = vadd.f32 %v4800, %v4810
    %v4818 = vadd.f32 %v4803, %v4810
    %v4819 = vadd.f32 %v4806, %v4810
    %v4820 = vxor.u32 %v4812, 2147483648
    %v4821 = vxor.u32 %v4813, 2147483648
    %v4822 = vxor.u32 %v4814, 2147483648
    %v4823 = vxor.u32 %v4815, 2147483648
    %v4824 = vxor.u32 %v4816, 2147483648
    %v4825 = vxor.u32 %v4817, 2147483648
    %v4826 = vxor.u32 %v4818, 2147483648
    %v4827 = vxor.u32 %v4819, 2147483648
    %v4828 = vmul.f32 %v4820, 1.442695
    %v4829 = vpow.pop %v4828
    %v4830 = vmul.f32 %v4821, 1.442695
    %v4831 = vpow.pop %v4830
    %v4832 = vmul.f32 %v4822, 1.442695
    %v4833 = vpow.pop %v4832
    %v4834 = vmul.f32 %v4823, 1.442695
    %v4835 = vpow.pop %v4834
    %v4836 = vmul.f32 %v4824, 1.442695
    %v4837 = vpow.pop %v4836
    %v4838 = vmul.f32 %v4825, 1.442695
    %v4839 = vpow.pop %v4838
    %v4840 = vmul.f32 %v4826, 1.442695
    %v4841 = vpow.pop %v4840
    %v4842 = vmul.f32 %v4827, 1.442695
    %v4843 = vpow.pop %v4842
    %v4844 = vadd.f32 %v4829, 1.0
    %v4845 = vadd.f32 %v4831, 1.0
    %v4846 = vadd.f32 %v4833, 1.0
    %v4847 = vadd.f32 %v4835, 1.0
    %v4848 = vadd.f32 %v4837, 1.0
    %v4849 = vadd.f32 %v4839, 1.0
    %v4850 = vadd.f32 %v4841, 1.0
    %v4851 = vadd.f32 %v4843, 1.0
    %v4852 = vrcp.pop %v4844
    %v4853 = vmul.f32 1.0, %v4852
    %v4854 = vrcp.pop %v4845
    %v4855 = vmul.f32 1.0, %v4854
    %v4856 = vrcp.pop %v4846
    %v4857 = vmul.f32 1.0, %v4856
    %v4858 = vrcp.pop %v4847
    %v4859 = vmul.f32 1.0, %v4858
    %v4860 = vrcp.pop %v4848
    %v4861 = vmul.f32 1.0, %v4860
    %v4862 = vrcp.pop %v4849
    %v4863 = vmul.f32 1.0, %v4862
    %v4864 = vrcp.pop %v4850
    %v4865 = vmul.f32 1.0, %v4864
    %v4866 = vrcp.pop %v4851
    %v4867 = vmul.f32 1.0, %v4866
    %v4876 = vlaneseq
    %v4877 = vand.u32 %v4876, 127
    %v4878 = vlaneseq
    %v4879 = vshrl.u32 %v4878, 7
    %v4880 = vsub.s32 %v4877, %v4879
    %v4881 = vrot.slane %v4853, %v4880
    %v4882 = vlaneseq
    %v4883 = vshrl.u32 %v4882, 7
    %v4884 = vsub.s32 %v4877, %v4883
    %v4885 = vrot.slane %v4855, %v4884
    %v4886 = vlaneseq
    %v4887 = vshrl.u32 %v4886, 7
    %v4888 = vsub.s32 %v4877, %v4887
    %v4889 = vrot.slane %v4857, %v4888
    %v4890 = vlaneseq
    %v4891 = vshrl.u32 %v4890, 7
    %v4892 = vsub.s32 %v4877, %v4891
    %v4893 = vrot.slane %v4859, %v4892
    %v4894 = vlaneseq
    %v4895 = vshrl.u32 %v4894, 7
    %v4896 = vsub.s32 %v4877, %v4895
    %v4897 = vrot.slane %v4861, %v4896
    %v4898 = vlaneseq
    %v4899 = vshrl.u32 %v4898, 7
    %v4900 = vsub.s32 %v4877, %v4899
    %v4901 = vrot.slane %v4863, %v4900
    %v4902 = vlaneseq
    %v4903 = vshrl.u32 %v4902, 7
    %v4904 = vsub.s32 %v4877, %v4903
    %v4905 = vrot.slane %v4865, %v4904
    %v4906 = vlaneseq
    %v4907 = vshrl.u32 %v4906, 7
    %v4908 = vsub.s32 %v4877, %v4907
    %v4909 = vrot.slane %v4867, %v4908
    %v4910 = vsel %vm1634, %v4885, %v4881
    %v4911 = vsel %vm1637, %v4889, %v4910
    %v4912 = vsel %vm1640, %v4893, %v4911
    %v4913 = vsel %vm1643, %v4897, %v4912
    %v4914 = vsel %vm1646, %v4901, %v4913
    %v4915 = vsel %vm1649, %v4905, %v4914
    %v4916 = vsel %vm1652, %v4909, %v4915
    %vm4918 = vcmask 64512
    %4919 = vst.msk [vmem:[#allocation6] sm:$0xff] %vm4918, %v4916
    %v4920 = vld [vmem:[%s10] sm:$0x7]
    %4921 = vrot.lane.b32.xlu0 %v4573, 80
    %v4922 = vpop.permute.xlu0 %4921
    %v4925 = vsel %vm4918, %v4920, 0
    %4927 = vmatprep.subr.mxu0 0.0
    %4928 = vmatpush1.msra.mxu0 %v4922
    %4929 = vmatprep.subr.mxu0 0.0
    %4930 = vmatpush1.msra.mxu0 0.0
    %4931 = vmatprep.subr.mxu0 0.0
    %4932 = vmatpush1.msra.mxu0 0.0
    %4933 = vmatprep.subr.mxu0 0.0
    %4934 = vmatpush1.msra.mxu0 0.0
    %4935 = vmatprep.subr.mxu0 0.0
    %4936 = vmatpush1.msra.mxu0 0.0
    %4937 = vmatprep.subr.mxu0 0.0
    %4938 = vmatpush1.msra.mxu0 0.0
    %4939 = vmatprep.subr.mxu0 0.0
    %4940 = vmatpush1.msra.mxu0 0.0
    %4941 = vmatprep.subr.mxu0 0.0
    %4942 = vmatpush1.msra.mxu0 0.0
    %4943 = vmatprep.subr.mxu0 0.0
    %4944 = vmatpush1.msra.mxu0 0.0
    %4945 = vmatprep.subr.mxu0 0.0
    %4946 = vmatpush1.msra.mxu0 0.0
    %4947 = vmatprep.subr.mxu0 0.0
    %4948 = vmatpush1.msra.mxu0 0.0
    %4949 = vmatprep.subr.mxu0 0.0
    %4950 = vmatpush1.msra.mxu0 0.0
    %4951 = vmatprep.subr.mxu0 0.0
    %4952 = vmatpush1.msra.mxu0 0.0
    %4953 = vmatprep.subr.mxu0 0.0
    %4954 = vmatpush1.msra.mxu0 0.0
    %4955 = vmatprep.subr.mxu0 0.0
    %4956 = vmatpush1.msra.mxu0 0.0
    %4957 = vmatprep.subr.mxu0 0.0
    %4958 = vmatpush1.msra.mxu0 0.0
    %4959 = vmatprep.subr.mxu0 0.0
    %4960 = vmatpush1.msra.mxu0 0.0
    %4961 = vmatprep.subr.mxu0 0.0
    %4962 = vmatpush1.msra.mxu0 0.0
    %4963 = vmatprep.subr.mxu0 0.0
    %4964 = vmatpush1.msra.mxu0 0.0
    %4965 = vmatprep.subr.mxu0 0.0
    %4966 = vmatpush1.msra.mxu0 0.0
    %4967 = vmatprep.subr.mxu0 0.0
    %4968 = vmatpush1.msra.mxu0 0.0
    %4969 = vmatprep.subr.mxu0 0.0
    %4970 = vmatpush1.msra.mxu0 0.0
    %4971 = vmatprep.subr.mxu0 0.0
    %4972 = vmatpush1.msra.mxu0 0.0
    %4973 = vmatprep.subr.mxu0 0.0
    %4974 = vmatpush1.msra.mxu0 0.0
    %4975 = vmatprep.subr.mxu0 0.0
    %4976 = vmatpush1.msra.mxu0 0.0
    %4977 = vmatprep.subr.mxu0 0.0
    %4978 = vmatpush1.msra.mxu0 0.0
    %4979 = vmatprep.subr.mxu0 0.0
    %4980 = vmatpush1.msra.mxu0 0.0
    %4981 = vmatprep.subr.mxu0 0.0
    %4982 = vmatpush1.msra.mxu0 0.0
    %4983 = vmatprep.subr.mxu0 0.0
    %4984 = vmatpush1.msra.mxu0 0.0
    %4985 = vmatprep.subr.mxu0 0.0
    %4986 = vmatpush1.msra.mxu0 0.0
    %4987 = vmatprep.subr.mxu0 0.0
    %4988 = vmatpush1.msra.mxu0 0.0
    %4989 = vmatprep.subr.mxu0 0.0
    %4990 = vmatpush1.msra.mxu0 0.0
    %4991 = vmatprep.mubr.f32.mxu0 0.0
    %4992 = vmatmul.mubr.f32.gmra.mrb[0].mxu0 %v4925
    %v4993 = vpop.f32.mrb[0].mxu0
    %v4994 = vadd.f32 0.0, %v4993
    %v4995 = vpop.f32.mrb[0].mxu0
    %4996 = vdwg.mxu0
    %vm4997 = vcmask 59392
    %v4998 = vsel %vm4997, %v4920, 0.0
    %4999 = vadd.xlane.f32.xlu0 %v4998
    %v5000 = vpop.xlane.xlu0 %4999
    %vm5001 = vcmp.gt.f32.partialorder %v5000, 0.0
    %v5002 = vsel %vm5001, %v5000, 1.0
    %v5003 = vrcp.pop %v5002
    %v5004 = vmul.f32 %v4994, %v5003
    %v5005 = vsel %vm5001, 1, 0
    %vm5006 = vcmp.eq.s32.totalorder %v5005, 1
    %v5007 = vsel %vm5006, %v5004, 0.0
    %v5008 = vld [vmem:[%s11] sm:$0x7]
    %v5010 = vsel %vm4918, %v5008, 0
    %5012 = vmatprep.subr.mxu0 0.0
    %5013 = vmatpush1.msra.mxu0 %v4922
    %5014 = vmatprep.subr.mxu0 0.0
    %5015 = vmatpush1.msra.mxu0 0.0
    %5016 = vmatprep.subr.mxu0 0.0
    %5017 = vmatpush1.msra.mxu0 0.0
    %5018 = vmatprep.subr.mxu0 0.0
    %5019 = vmatpush1.msra.mxu0 0.0
    %5020 = vmatprep.subr.mxu0 0.0
    %5021 = vmatpush1.msra.mxu0 0.0
    %5022 = vmatprep.subr.mxu0 0.0
    %5023 = vmatpush1.msra.mxu0 0.0
    %5024 = vmatprep.subr.mxu0 0.0
    %5025 = vmatpush1.msra.mxu0 0.0
    %5026 = vmatprep.subr.mxu0 0.0
    %5027 = vmatpush1.msra.mxu0 0.0
    %5028 = vmatprep.subr.mxu0 0.0
    %5029 = vmatpush1.msra.mxu0 0.0
    %5030 = vmatprep.subr.mxu0 0.0
    %5031 = vmatpush1.msra.mxu0 0.0
    %5032 = vmatprep.subr.mxu0 0.0
    %5033 = vmatpush1.msra.mxu0 0.0
    %5034 = vmatprep.subr.mxu0 0.0
    %5035 = vmatpush1.msra.mxu0 0.0
    %5036 = vmatprep.subr.mxu0 0.0
    %5037 = vmatpush1.msra.mxu0 0.0
    %5038 = vmatprep.subr.mxu0 0.0
    %5039 = vmatpush1.msra.mxu0 0.0
    %5040 = vmatprep.subr.mxu0 0.0
    %5041 = vmatpush1.msra.mxu0 0.0
    %5042 = vmatprep.subr.mxu0 0.0
    %5043 = vmatpush1.msra.mxu0 0.0
    %5044 = vmatprep.subr.mxu0 0.0
    %5045 = vmatpush1.msra.mxu0 0.0
    %5046 = vmatprep.subr.mxu0 0.0
    %5047 = vmatpush1.msra.mxu0 0.0
    %5048 = vmatprep.subr.mxu0 0.0
    %5049 = vmatpush1.msra.mxu0 0.0
    %5050 = vmatprep.subr.mxu0 0.0
    %5051 = vmatpush1.msra.mxu0 0.0
    %5052 = vmatprep.subr.mxu0 0.0
    %5053 = vmatpush1.msra.mxu0 0.0
    %5054 = vmatprep.subr.mxu0 0.0
    %5055 = vmatpush1.msra.mxu0 0.0
    %5056 = vmatprep.subr.mxu0 0.0
    %5057 = vmatpush1.msra.mxu0 0.0
    %5058 = vmatprep.subr.mxu0 0.0
    %5059 = vmatpush1.msra.mxu0 0.0
    %5060 = vmatprep.subr.mxu0 0.0
    %5061 = vmatpush1.msra.mxu0 0.0
    %5062 = vmatprep.subr.mxu0 0.0
    %5063 = vmatpush1.msra.mxu0 0.0
    %5064 = vmatprep.subr.mxu0 0.0
    %5065 = vmatpush1.msra.mxu0 0.0
    %5066 = vmatprep.subr.mxu0 0.0
    %5067 = vmatpush1.msra.mxu0 0.0
    %5068 = vmatprep.subr.mxu0 0.0
    %5069 = vmatpush1.msra.mxu0 0.0
    %5070 = vmatprep.subr.mxu0 0.0
    %5071 = vmatpush1.msra.mxu0 0.0
    %5072 = vmatprep.subr.mxu0 0.0
    %5073 = vmatpush1.msra.mxu0 0.0
    %5074 = vmatprep.subr.mxu0 0.0
    %5075 = vmatpush1.msra.mxu0 0.0
    %5076 = vmatprep.mubr.f32.mxu0 0.0
    %5077 = vmatmul.mubr.f32.gmra.mrb[0].mxu0 %v5010
    %v5078 = vpop.f32.mrb[0].mxu0
    %v5079 = vadd.f32 0.0, %v5078
    %v5080 = vpop.f32.mrb[0].mxu0
    %5081 = vdwg.mxu0
    %v5084 = vunpack.c.l.s4 1966171168
    %v5085 = vunpack.c.0.s8 %v5084
    %v5086 = vlaneseq
    %v5087 = vshrl.u32 %v5086, 7
    %v5088 = vsub.s32 %v5085, %v5087
    %v5089 = vrot.slane %v5079, %v5088
    %v5090 = vcombine.high %v5089, %v5089
    %v5092 = vunpack.c.l.s4 1966171168
    %v5093 = vunpack.c.0.s8 %v5092
    %v5094 = vlaneseq
    %v5095 = vshrl.u32 %v5094, 7
    %v5096 = vsub.s32 %v5093, %v5095
    %v5097 = vrot.slane %v5089, %v5096
    %v5099 = vunpack.c.l.s4 1966171168
    %v5100 = vunpack.c.0.s8 %v5099
    %v5101 = vlaneseq
    %v5102 = vshrl.u32 %v5101, 7
    %v5103 = vsub.s32 %v5100, %v5102
    %v5104 = vrot.slane %v5090, %v5103
    %v5105 = vcombine.high %v5097, %v5097
    %v5106 = vlaneseq
    %v5107 = vshrl.u32 %v5106, 7
    %v5108 = vsub.s32 0, %v5107
    %v5109 = vrot.slane %v5097, %v5108
    %v5110 = vlaneseq
    %v5111 = vshrl.u32 %v5110, 7
    %v5112 = vsub.s32 0, %v5111
    %v5113 = vrot.slane %v5104, %v5112
    %v5114 = vlaneseq
    %v5115 = vshrl.u32 %v5114, 7
    %v5116 = vsub.s32 0, %v5115
    %v5117 = vrot.slane %v5105, %v5116
    %v5121 = vsub.f32 %v5109, %v5007
    %v5122 = vsub.f32 %v5113, %v5007
    %v5123 = vsub.f32 %v5117, %v5007
    %v5124 = vmul.f32 %v5121, %v5121
    %v5125 = vmul.f32 %v5122, %v5122
    %v5126 = vmul.f32 %v5123, %v5123
    %vm5127 = vcmask 387072
    %v5128 = vsel %vm5127, %v5124, 0.0
    %5129 = vadd.xlane.f32.xlu0 %v5128
    %v5130 = vpop.xlane.xlu0 %5129
    %v5131 = vsel %vm5127, %v5125, 0.0
    %5132 = vadd.xlane.f32.xlu0 %v5131
    %v5133 = vpop.xlane.xlu0 %5132
    %v5134 = vsel %vm5127, %v5126, 0.0
    %5135 = vadd.xlane.f32.xlu0 %v5134
    %v5136 = vpop.xlane.xlu0 %5135
    %v5137 = vrsqrt.pop %v5130
    %v5138 = vmul.f32 %v5130, %v5137
    %vm5139 = vcmp.eq.f32.partialorder %v5130, inf
    %v5140 = vsel %vm5139, %v5130, %v5138
    %vm5141 = vcmp.eq.f32.partialorder %v5130, 0.0
    %v5142 = vand.u32 %v5130, 2147483648
    %v5143 = vsel %vm5141, %v5142, %v5140
    %v5144 = vrsqrt.pop %v5133
    %v5145 = vmul.f32 %v5133, %v5144
    %vm5146 = vcmp.eq.f32.partialorder %v5133, inf
    %v5147 = vsel %vm5146, %v5133, %v5145
    %vm5148 = vcmp.eq.f32.partialorder %v5133, 0.0
    %v5149 = vand.u32 %v5133, 2147483648
    %v5150 = vsel %vm5148, %v5149, %v5147
    %v5151 = vrsqrt.pop %v5136
    %v5152 = vmul.f32 %v5136, %v5151
    %vm5153 = vcmp.eq.f32.partialorder %v5136, inf
    %v5154 = vsel %vm5153, %v5136, %v5152
    %vm5155 = vcmp.eq.f32.partialorder %v5136, 0.0
    %v5156 = vand.u32 %v5136, 2147483648
    %v5157 = vsel %vm5155, %v5156, %v5154
    %v5158 = vadd.f32 %v5143, 1e-10
    %v5159 = vadd.f32 %v5150, 1e-10
    %v5160 = vadd.f32 %v5157, 1e-10
    %v5161 = vrcp.pop %v5158
    %v5162 = vmul.f32 1.0, %v5161
    %v5163 = vrcp.pop %v5159
    %v5164 = vmul.f32 1.0, %v5163
    %v5165 = vrcp.pop %v5160
    %v5166 = vmul.f32 1.0, %v5165
    %v5170 = vlaneseq
    %v5171 = vshrl.u32 %v5170, 7
    %v5172 = vsub.s32 %v4877, %v5171
    %v5173 = vrot.slane %v5162, %v5172
    %v5174 = vlaneseq
    %v5175 = vshrl.u32 %v5174, 7
    %v5176 = vsub.s32 %v4877, %v5175
    %v5177 = vrot.slane %v5164, %v5176
    %v5178 = vlaneseq
    %v5179 = vshrl.u32 %v5178, 7
    %v5180 = vsub.s32 %v4877, %v5179
    %v5181 = vrot.slane %v5166, %v5180
    %v5182 = vsel %vm1634, %v5177, %v5173
    %v5183 = vsel %vm1637, %v5181, %v5182
    %vm5185 = vcmask 18432
    %5186 = vst.msk [vmem:[#allocation2] sm:$0x7] %vm5185, %v5183
    // Predicated region
    $region50: #{three_stream_forward.1} parent=1 // pred_check
      _
    $region51: #{three_stream_forward.1} parent=1 // pred_check_branch
      %5188 = sbr.rel (0) target = $region53
    $region52: #{three_stream_forward.1} parent=1 // pred_region
      %s5190 = ssub.s32 64, 64
      %5191 = vsyncadd [#allocation3], %s5190
      %s5193 = sshll.u32 [#allocation2], 4
      %s5194 = int_to_ptr.vmem [resolvable:$true] %s5193
      %5196 = dma.vmem_to_hbm [thread:$0]  %s5194, 64, %s12, [#allocation3]
    $region53: #{three_stream_forward.1} parent=1 // pred_fallthru
      _
    // Predicated region
    $region54: #{three_stream_forward.1} parent=1 // pred_check
      _
    $region55: #{three_stream_forward.1} parent=1 // pred_check_branch
      %5198 = sbr.rel (0) target = $region57
    $region56: #{three_stream_forward.1} parent=1 // pred_region
      %s5200 = ssub.s32 128, 128
      %5201 = vsyncadd [#allocation5], %s5200
      %s5203 = sshll.u32 [#allocation4], 4
      %s5204 = int_to_ptr.vmem [resolvable:$true] %s5203
      %5206 = dma.vmem_to_hbm [thread:$0]  %s5204, 128, %s13, [#allocation5]
    $region57: #{three_stream_forward.1} parent=1 // pred_fallthru
      _
    // Predicated region
    $region58: #{three_stream_forward.1} parent=1 // pred_check
      _
    $region59: #{three_stream_forward.1} parent=1 // pred_check_branch
      %5208 = sbr.rel (0) target = $region61
    $region60: #{three_stream_forward.1} parent=1 // pred_region
      %s5210 = ssub.s32 128, 128
      %5211 = vsyncadd [#allocation5], %s5210
      %s5213 = sshll.u32 [#allocation6], 4
      %s5214 = int_to_ptr.vmem [resolvable:$true] %s5213
      %5216 = dma.vmem_to_hbm [thread:$0]  %s5214, 128, %s14, [#allocation5]
    $region61: #{three_stream_forward.1} parent=1 // pred_fallthru
      _
    // Predicated region
    $region62: #{three_stream_forward.1} parent=1 // pred_check
      _
    $region63: #{three_stream_forward.1} parent=1 // pred_check_branch
      %5218 = sbr.rel (0) target = $region65
    $region64: #{three_stream_forward.1} parent=1 // pred_region
      %5219 = dma.done [#allocation3], 64
    $region65: #{three_stream_forward.1} parent=1 // pred_fallthru
      _
    // Predicated region
    $region66: #{three_stream_forward.1} parent=1 // pred_check
      _
    $region67: #{three_stream_forward.1} parent=1 // pred_check_branch
      %5221 = sbr.rel (0) target = $region69
    $region68: #{three_stream_forward.1} parent=1 // pred_region
      %5222 = dma.done [#allocation5], 128
    $region69: #{three_stream_forward.1} parent=1 // pred_fallthru
      _
    // Predicated region
    $region70: #{three_stream_forward.1} parent=1 // pred_check
      _
    $region71: #{three_stream_forward.1} parent=1 // pred_check_branch
      %5224 = sbr.rel (0) target = $region73
    $region72: #{three_stream_forward.1} parent=1 // pred_region
      %5225 = dma.done [#allocation5], 128
    $region73: #{three_stream_forward.1} parent=1 // pred_fallthru
      _
    %5226 = vsyncpa [#allocation3], 1
    %5227 = vsyncpa [#allocation5], 1

</llo_original>
